<compile_context>
chip_gen: v7x
topology: tpu7x:2x2x1
jax: 0.10.0
libtpu: 0.0.40
codegen_flags: <defaults>
</compile_context>

<pallas_src>
import numpy as np
import jax
import jax.numpy as jnp
from jax.experimental import pallas as pl
from jax.experimental.pallas import tpu as pltpu


def _round_up(n, m):
    return -(-n // m) * m


_BATCH_TILE = 128   # max batch rows per grid step (multiple of 8)
_GROUP = 128        # lane width of one pooling-offset group in the Toeplitz output


# ----------------------------------------------------------------------------
# One-time parameter preparation (hoisted out of the forward pass)
# ----------------------------------------------------------------------------
def _toeplitz_pool_matrix(w_hwio, w_in):
    """Build M such that for the stacked row
         xs = concat_r x[2*ip + r, :]   (r = 0..kh, lanes ordered (w, c))
       y = xs @ M contains, in lane group o = di*2 + dj (each _GROUP wide),
         y[o*_GROUP + jp*cout + co] = conv(x, w)[2*ip + di, 2*jp + dj, co],
       i.e. the four 2x2 max-pool candidates of pooled position (ip, jp)."""
    kh, kw, cin, cout = w_hwio.shape
    wp = (w_in - kw + 1) // 2
    rc = w_in * cin
    m = np.zeros(((kh + 1) * rc, 4 * _GROUP), np.float32)
    w = np.asarray(w_hwio, np.float32)
    for di in range(2):
        for dj in range(2):
            o = di * 2 + dj
            for jp in range(wp):
                col0 = o * _GROUP + jp * cout
                for ki in range(kh):
                    r = di + ki
                    for kj in range(kw):
                        wcol = 2 * jp + dj + kj
                        row0 = r * rc + wcol * cin
                        m[row0:row0 + cin, col0:col0 + cout] = w[ki, kj]
    return jnp.asarray(m)


def _pool_bias_row(b, wp):
    """Per-channel bias broadcast over the (jp, co) pooled lane layout."""
    b = np.asarray(b, np.float32).reshape(-1)
    row = np.zeros((1, _GROUP), np.float32)
    row[0, :wp * b.size] = np.tile(b, wp)
    return jnp.asarray(row)


def prepare_params(params):
    """Done once: Toeplitz conv matrices, tiled conv biases, padded MLP weights
    with torch's CHW flatten order folded into fc1's rows."""
    (w1c, b1c, w2c, b2c, w1, b1, w2, b2, w3, b3) = params

    m1 = _toeplitz_pool_matrix(np.asarray(w1c).reshape(5, 5, 3, 6), 32)    # (576, 512)
    bc1 = _pool_bias_row(b1c, 14)                                          # (1, 128)
    m2 = _toeplitz_pool_matrix(np.asarray(w2c).reshape(5, 5, 6, 16), 14)   # (504, 512)
    bc2 = _pool_bias_row(b2c, 5)                                           # (1, 128)

    # fc1 rows are in torch CHW order (c*25 + h*5 + w); our conv2 activations
    # arrive as 5 chunks (one per pooled row h) with lanes (w*16 + c).
    w1_chw = jnp.asarray(w1).reshape(16, 5, 5, 100)          # (c, h, w, n)
    w1_hwc = jnp.transpose(w1_chw, (1, 2, 0, 3)).reshape(5, 80, 100)
    w1p = jnp.pad(w1_hwc, ((0, 0), (0, 48), (0, 28)))        # (5, 128, 128)
    b1p = jnp.pad(jnp.asarray(b1), ((0, 0), (0, 28)))        # (1, 128)
    w2p = jnp.pad(jnp.asarray(w2), ((0, 28), (0, 78)))       # (128, 128)
    b2p = jnp.pad(jnp.asarray(b2), ((0, 0), (0, 78)))        # (1, 128)
    w3p = jnp.pad(jnp.asarray(w3), ((0, 78), (0, 6)))        # (128, 16)
    b3p = jnp.pad(jnp.asarray(b3), ((0, 0), (0, 6)))         # (1, 16)
    return (m1, bc1, m2, bc2, w1p, b1p, w2p, b2p, w3p, b3p)


# ----------------------------------------------------------------------------
# Pallas kernels
# ----------------------------------------------------------------------------
def _conv1_pool_kernel(x_ref, m_ref, b_ref, o_ref):
    """conv1 (5x5 valid) + bias + ReLU + 2x2/2 max-pool, one pooled row per step.

    x_ref: (32, bt, 96)  raw image rows, lanes = (w, c)
    m_ref: (576, 512)    Toeplitz conv/pool matrix
    b_ref: (1, 128)      bias tiled over (jp, co)
    o_ref: (1, bt, 84)   pooled output row ip (bf16)
    """
    ip = pl.program_id(1)
    rows = [x_ref[2 * ip + r] for r in range(6)]          # (bt, 96) each
    xs = jnp.concatenate(rows, axis=-1)                   # (bt, 576)
    y = jnp.dot(xs, m_ref[...], preferred_element_type=jnp.float32)   # (bt, 512)
    p = jnp.maximum(jnp.maximum(y[:, 0:128], y[:, 128:256]),
                    jnp.maximum(y[:, 256:384], y[:, 384:512]))
    act = jnp.maximum(p + b_ref[...], 0.0)
    o_ref[0] = act[:, :84].astype(o_ref.dtype)


def _conv2_mlp_kernel(x_ref, m_ref, bc_ref, w1_ref, b1_ref, w2_ref, b2_ref,
                      w3_ref, b3_ref, o_ref):
    """Fused conv2 + bias + ReLU + pool + Linear(400,100)+ReLU
       + Linear(100,50)+ReLU + Linear(50,10).

    x_ref: (14, bt, 84) bf16 conv1 output rows, lanes = (w, c)
    m_ref: (504, 512)   Toeplitz conv/pool matrix for conv2
    o_ref: (bt, 16)     logits (first 10 lanes real)
    """
    h = b1_ref[...]                                       # (1, 128), broadcasts
    for ip in range(5):                                   # 5 pooled rows, static
        chunks = [x_ref[2 * ip + r].astype(jnp.float32) for r in range(6)]
        xs = jnp.concatenate(chunks, axis=-1)             # (bt, 504)
        y = jnp.dot(xs, m_ref[...], preferred_element_type=jnp.float32)  # (bt, 512)
        p = jnp.maximum(jnp.maximum(y[:, 0:128], y[:, 128:256]),
                        jnp.maximum(y[:, 256:384], y[:, 384:512]))
        a = jnp.maximum(p + bc_ref[...], 0.0)             # (bt, 128), lanes>=80 are 0
        h = h + jnp.dot(a, w1_ref[ip], preferred_element_type=jnp.float32)
    h = jnp.maximum(h, 0.0)                               # (bt, 128)
    h = jnp.maximum(jnp.dot(h, w2_ref[...], preferred_element_type=jnp.float32)
                    + b2_ref[...], 0.0)                   # (bt, 128)
    o_ref[...] = (jnp.dot(h, w3_ref[...], preferred_element_type=jnp.float32)
                  + b3_ref[...])                          # (bt, 16)


# ----------------------------------------------------------------------------
# Full forward
# ----------------------------------------------------------------------------
@jax.jit
def cnn_forward(x_nchw, prepped):
    (m1, bc1, m2, bc2, w1p, b1p, w2p, b2p, w3p, b3p) = prepped
    B, C, H, W = x_nchw.shape                             # (B, 3, 32, 32)
    rc1 = W * C                                           # 96
    hp1, wp1 = (H - 4) // 2, (W - 4) // 2                 # 14, 14
    wc1 = wp1 * 6                                         # 84

    # Batch tiling: keep the grid >= 2 batch tiles when B is large enough so
    # both v7x TensorCores get work, cap at 128 rows for v5e scoped VMEM.
    if B < 16:
        bt = B
    else:
        bt = min(_BATCH_TILE, _round_up(-(-B // 2), 8))
    Bp = _round_up(B, bt)
    nb = Bp // bt

    # (B, C, H, W) -> (H, B, W*C): rows = image rows, lanes = (w, c).
    x = jnp.transpose(x_nchw, (2, 0, 3, 1)).reshape(H, B, rc1)
    if Bp != B:
        x = jnp.pad(x, ((0, 0), (0, Bp - B), (0, 0)))

    # Stage 1: conv1 + ReLU + pool -> (14, Bp, 84) bf16 (only HBM intermediate).
    a1 = pl.pallas_call(
        _conv1_pool_kernel,
        out_shape=jax.ShapeDtypeStruct((hp1, Bp, wc1), jnp.bfloat16),
        grid=(nb, hp1),
        in_specs=[
            pl.BlockSpec((H, bt, rc1), lambda b, ip: (0, b, 0)),
            pl.BlockSpec(m1.shape, lambda b, ip: (0, 0)),
            pl.BlockSpec(bc1.shape, lambda b, ip: (0, 0)),
        ],
        out_specs=pl.BlockSpec((1, bt, wc1), lambda b, ip: (ip, b, 0)),
        compiler_params=pltpu.CompilerParams(
            dimension_semantics=("parallel", "parallel")),
    )(x, m1, bc1)

    # Stage 2: fused conv2 + pool + MLP -> (Bp, 16) logits.
    out = pl.pallas_call(
        _conv2_mlp_kernel,
        out_shape=jax.ShapeDtypeStruct((Bp, 16), jnp.float32),
        grid=(nb,),
        in_specs=[
            pl.BlockSpec((hp1, bt, wc1), lambda b: (0, b, 0)),
            pl.BlockSpec(m2.shape, lambda b: (0, 0)),
            pl.BlockSpec(bc2.shape, lambda b: (0, 0)),
            pl.BlockSpec(w1p.shape, lambda b: (0, 0, 0)),
            pl.BlockSpec(b1p.shape, lambda b: (0, 0)),
            pl.BlockSpec(w2p.shape, lambda b: (0, 0)),
            pl.BlockSpec(b2p.shape, lambda b: (0, 0)),
            pl.BlockSpec(w3p.shape, lambda b: (0, 0)),
            pl.BlockSpec(b3p.shape, lambda b: (0, 0)),
        ],
        out_specs=pl.BlockSpec((bt, 16), lambda b: (b, 0)),
        compiler_params=pltpu.CompilerParams(
            dimension_semantics=("parallel",)),
    )(a1, m2, bc2, w1p, b1p, w2p, b2p, w3p, b3p)

    return out[:B, :10]


# ----------------------------------------------------------------------------
# Parameters (deterministic, PyTorch-default-style uniform init)
# ----------------------------------------------------------------------------
def init_params(key):
    def u(k, shape, fan_in):
        bound = 1.0 / (fan_in ** 0.5)
        return jax.random.uniform(k, shape, jnp.float32, -bound, bound)

    ks = jax.random.split(key, 10)
    # conv1: torch weight (6,3,5,5) == HWIO (5,5,3,6) -> flat (75, 6)
    w1c = u(ks[0], (5, 5, 3, 6), 3 * 5 * 5).reshape(75, 6)
    b1c = u(ks[1], (1, 6), 3 * 5 * 5)
    # conv2: torch weight (16,6,5,5) == HWIO (5,5,6,16) -> flat (150, 16)
    w2c = u(ks[2], (5, 5, 6, 16), 6 * 5 * 5).reshape(150, 16)
    b2c = u(ks[3], (1, 16), 6 * 5 * 5)
    # linear layers stored as (in, out) = torch_weight.T, rows in torch CHW order
    w1 = u(ks[4], (400, 100), 400)
    b1 = u(ks[5], (1, 100), 400)
    w2 = u(ks[6], (100, 50), 100)
    b2 = u(ks[7], (1, 50), 100)
    w3 = u(ks[8], (50, 10), 50)
    b3 = u(ks[9], (1, 10), 50)
    return (w1c, b1c, w2c, b2c, w1, b1, w2, b2, w3, b3)


# ----------------------------------------------------------------------------
# Pure-JAX reference (torch-exact semantics, for the sanity check)
# ----------------------------------------------------------------------------
def reference_forward(x_nchw, params):
    (w1c, b1c, w2c, b2c, w1, b1, w2, b2, w3, b3) = params

    def conv(x, w_flat, b, cin, cout):
        w_oihw = jnp.transpose(w_flat.reshape(5, 5, cin, cout), (3, 2, 0, 1))
        y = jax.lax.conv_general_dilated(
            x, w_oihw, window_strides=(1, 1), padding="VALID",
            dimension_numbers=("NCHW", "OIHW", "NCHW"),
            precision=jax.lax.Precision.HIGHEST)
        y = y + b.reshape(1, cout, 1, 1)
        y = jnp.maximum(y, 0.0)
        return jax.lax.reduce_window(y, -jnp.inf, jax.lax.max,
                                     (1, 1, 2, 2), (1, 1, 2, 2), "VALID")

    x = conv(x_nchw, w1c, b1c, 3, 6)
    x = conv(x, w2c, b2c, 6, 16)
    x = x.reshape(x.shape[0], -1)                        # NCHW flatten (torch order)
    x = jnp.maximum(x @ w1 + b1, 0.0)
    x = jnp.maximum(x @ w2 + b2, 0.0)
    return x @ w3 + b3


if __name__ == "__main__":
    key = jax.random.PRNGKey(0)
    k_x, k_p = jax.random.split(key)
    # CIFAR-10-shaped input (flatten to 16*5*5 requires 32x32 spatial), batch=2.
    x = jax.random.normal(k_x, (2, 3, 32, 32), dtype=jnp.float32)
    params = init_params(k_p)
    prepped = prepare_params(params)                     # hoisted, done once

    out = cnn_forward(x, prepped)
    out = jax.block_until_ready(out)

    assert out.shape == (2, 10), out.shape
    assert bool(jnp.all(jnp.isfinite(out)))

    ref = reference_forward(x, params)
    assert bool(jnp.allclose(out, ref, atol=1e-2, rtol=1e-2)), (
        f"max abs diff {float(jnp.max(jnp.abs(out - ref)))}")

    print("KERNEL_OK")
</pallas_src>

<mosaic_0001>
module attributes {stable_mosaic.version = 11 : i64} {
  func.func @_conv1_pool_kernel(%arg0: i32, %arg1: i32, %arg2: memref<32x2x96xf32, #tpu.memory_space<vmem>>, %arg3: memref<576x512xf32, #tpu.memory_space<vmem>>, %arg4: memref<1x128xf32, #tpu.memory_space<vmem>>, %arg5: memref<1x2x84xbf16, #tpu.memory_space<vmem>>) attributes {dimension_semantics = [#tpu.dimension_semantics<parallel>, #tpu.dimension_semantics<parallel>], iteration_bounds = array<i64: 1, 14>, scalar_prefetch = 0 : i64, scratch_operands = 0 : i64, tpu.core_type = #tpu.core_type<tc>, window_params = [{transform_indices = @transform_0, window_bounds = array<i64: 32, 2, 96>}, {pipeline_mode = #tpu.pipeline_mode<synchronous>, transform_indices = @transform_1, window_bounds = array<i64: 576, 512>}, {pipeline_mode = #tpu.pipeline_mode<synchronous>, transform_indices = @transform_2, window_bounds = array<i64: 1, 128>}, {transform_indices = @transform_3, window_bounds = array<i64: 1, 2, 84>}]} {
    %c2_i32 = arith.constant 2 : i32
    %0 = arith.muli %c2_i32, %arg1 : i32
    %c0_i32 = arith.constant 0 : i32
    %1 = arith.addi %0, %c0_i32 : i32
    %2 = arith.index_cast %1 : i32 to index
    %c0 = arith.constant 0 : index
    %c0_0 = arith.constant 0 : index
    %3 = vector.load %arg2[%2, %c0, %c0_0] : memref<32x2x96xf32, #tpu.memory_space<vmem>>, vector<1x2x96xf32>
    %4 = vector.shape_cast %3 : vector<1x2x96xf32> to vector<2x96xf32>
    %c2_i32_1 = arith.constant 2 : i32
    %5 = arith.muli %c2_i32_1, %arg1 : i32
    %c1_i32 = arith.constant 1 : i32
    %6 = arith.addi %5, %c1_i32 : i32
    %7 = arith.index_cast %6 : i32 to index
    %c0_2 = arith.constant 0 : index
    %c0_3 = arith.constant 0 : index
    %8 = vector.load %arg2[%7, %c0_2, %c0_3] : memref<32x2x96xf32, #tpu.memory_space<vmem>>, vector<1x2x96xf32>
    %9 = vector.shape_cast %8 : vector<1x2x96xf32> to vector<2x96xf32>
    %c2_i32_4 = arith.constant 2 : i32
    %10 = arith.muli %c2_i32_4, %arg1 : i32
    %c2_i32_5 = arith.constant 2 : i32
    %11 = arith.addi %10, %c2_i32_5 : i32
    %12 = arith.index_cast %11 : i32 to index
    %c0_6 = arith.constant 0 : index
    %c0_7 = arith.constant 0 : index
    %13 = vector.load %arg2[%12, %c0_6, %c0_7] : memref<32x2x96xf32, #tpu.memory_space<vmem>>, vector<1x2x96xf32>
    %14 = vector.shape_cast %13 : vector<1x2x96xf32> to vector<2x96xf32>
    %c2_i32_8 = arith.constant 2 : i32
    %15 = arith.muli %c2_i32_8, %arg1 : i32
    %c3_i32 = arith.constant 3 : i32
    %16 = arith.addi %15, %c3_i32 : i32
    %17 = arith.index_cast %16 : i32 to index
    %c0_9 = arith.constant 0 : index
    %c0_10 = arith.constant 0 : index
    %18 = vector.load %arg2[%17, %c0_9, %c0_10] : memref<32x2x96xf32, #tpu.memory_space<vmem>>, vector<1x2x96xf32>
    %19 = vector.shape_cast %18 : vector<1x2x96xf32> to vector<2x96xf32>
    %c2_i32_11 = arith.constant 2 : i32
    %20 = arith.muli %c2_i32_11, %arg1 : i32
    %c4_i32 = arith.constant 4 : i32
    %21 = arith.addi %20, %c4_i32 : i32
    %22 = arith.index_cast %21 : i32 to index
    %c0_12 = arith.constant 0 : index
    %c0_13 = arith.constant 0 : index
    %23 = vector.load %arg2[%22, %c0_12, %c0_13] : memref<32x2x96xf32, #tpu.memory_space<vmem>>, vector<1x2x96xf32>
    %24 = vector.shape_cast %23 : vector<1x2x96xf32> to vector<2x96xf32>
    %c2_i32_14 = arith.constant 2 : i32
    %25 = arith.muli %c2_i32_14, %arg1 : i32
    %c5_i32 = arith.constant 5 : i32
    %26 = arith.addi %25, %c5_i32 : i32
    %27 = arith.index_cast %26 : i32 to index
    %c0_15 = arith.constant 0 : index
    %c0_16 = arith.constant 0 : index
    %28 = vector.load %arg2[%27, %c0_15, %c0_16] : memref<32x2x96xf32, #tpu.memory_space<vmem>>, vector<1x2x96xf32>
    %29 = vector.shape_cast %28 : vector<1x2x96xf32> to vector<2x96xf32>
    %30 = tpu.concatenate %4, %9, %14, %19, %24, %29 in 1 : vector<2x96xf32>, vector<2x96xf32>, vector<2x96xf32>, vector<2x96xf32>, vector<2x96xf32>, vector<2x96xf32> -> vector<2x576xf32>
    %c0_17 = arith.constant 0 : index
    %c0_18 = arith.constant 0 : index
    %31 = vector.load %arg3[%c0_17, %c0_18] : memref<576x512xf32, #tpu.memory_space<vmem>>, vector<576x512xf32>
    %cst = arith.constant dense<0.000000e+00> : vector<2x512xf32>
    %32 = tpu.matmul %30, %31, %cst {dimension_numbers = #tpu.dot_dimension_numbers<[1], [0], [0], [1], [0, 0, 1, 1], [], []>} : vector<2x576xf32>, vector<576x512xf32>, vector<2x512xf32> -> vector<2x512xf32>
    %33 = vector.extract_strided_slice %32 {offsets = [0, 0], sizes = [2, 128], strides = [1, 1]} : vector<2x512xf32> to vector<2x128xf32>
    %34 = vector.extract_strided_slice %32 {offsets = [0, 128], sizes = [2, 128], strides = [1, 1]} : vector<2x512xf32> to vector<2x128xf32>
    %35 = arith.maximumf %33, %34 : vector<2x128xf32>
    %36 = vector.extract_strided_slice %32 {offsets = [0, 256], sizes = [2, 128], strides = [1, 1]} : vector<2x512xf32> to vector<2x128xf32>
    %37 = vector.extract_strided_slice %32 {offsets = [0, 384], sizes = [2, 128], strides = [1, 1]} : vector<2x512xf32> to vector<2x128xf32>
    %38 = arith.maximumf %36, %37 : vector<2x128xf32>
    %39 = arith.maximumf %35, %38 : vector<2x128xf32>
    %c0_19 = arith.constant 0 : index
    %c0_20 = arith.constant 0 : index
    %40 = vector.load %arg4[%c0_19, %c0_20] : memref<1x128xf32, #tpu.memory_space<vmem>>, vector<1x128xf32>
    %41 = vector.broadcast %40 : vector<1x128xf32> to vector<2x128xf32>
    %42 = arith.addf %39, %41 : vector<2x128xf32>
    %cst_21 = arith.constant 0.000000e+00 : f32
    %43 = vector.broadcast %cst_21 : f32 to vector<2x128xf32>
    %44 = arith.maximumf %42, %43 : vector<2x128xf32>
    %45 = vector.extract_strided_slice %44 {offsets = [0, 0], sizes = [2, 84], strides = [1, 1]} : vector<2x128xf32> to vector<2x84xf32>
    %46 = arith.truncf %45 : vector<2x84xf32> to vector<2x84xbf16>
    %c0_22 = arith.constant 0 : index
    %c0_23 = arith.constant 0 : index
    %c0_24 = arith.constant 0 : index
    %47 = vector.load %arg5[%c0_22, %c0_23, %c0_24] : memref<1x2x84xbf16, #tpu.memory_space<vmem>>, vector<1x2x84xbf16>
    %48 = vector.shape_cast %47 : vector<1x2x84xbf16> to vector<2x84xbf16>
    %49 = vector.shape_cast %46 : vector<2x84xbf16> to vector<1x2x84xbf16>
    tpu.vector_store %arg5[%c0_22, %c0_23, %c0_24], %49 {strides = array<i32>} : memref<1x2x84xbf16, #tpu.memory_space<vmem>>, vector<1x2x84xbf16>,
    return
  }
  func.func @transform_0(%arg0: i32, %arg1: i32) -> (i32, i32, i32) {
    %c0_i32 = arith.constant 0 : i32
    %c0_i32_0 = arith.constant 0 : i32
    %c0_i32_1 = arith.constant 0 : i32
    return %c0_i32, %arg0, %c0_i32_0 : i32, i32, i32
  }
  func.func @transform_1(%arg0: i32, %arg1: i32) -> (i32, i32) {
    %c0_i32 = arith.constant 0 : i32
    %c0_i32_0 = arith.constant 0 : i32
    %c0_i32_1 = arith.constant 0 : i32
    return %c0_i32, %c0_i32_0 : i32, i32
  }
  func.func @transform_2(%arg0: i32, %arg1: i32) -> (i32, i32) {
    %c0_i32 = arith.constant 0 : i32
    %c0_i32_0 = arith.constant 0 : i32
    %c0_i32_1 = arith.constant 0 : i32
    return %c0_i32, %c0_i32_0 : i32, i32
  }
  func.func @transform_3(%arg0: i32, %arg1: i32) -> (i32, i32, i32) {
    %c0_i32 = arith.constant 0 : i32
    %c0_i32_0 = arith.constant 0 : i32
    return %arg1, %arg0, %c0_i32 : i32, i32, i32
  }
}

module attributes {stable_mosaic.version = 11 : i64} {
  func.func @_conv2_mlp_kernel(%arg0: i32, %arg1: memref<14x2x84xbf16, #tpu.memory_space<vmem>>, %arg2: memref<504x512xf32, #tpu.memory_space<vmem>>, %arg3: memref<1x128xf32, #tpu.memory_space<vmem>>, %arg4: memref<5x128x128xf32, #tpu.memory_space<vmem>>, %arg5: memref<1x128xf32, #tpu.memory_space<vmem>>, %arg6: memref<128x128xf32, #tpu.memory_space<vmem>>, %arg7: memref<1x128xf32, #tpu.memory_space<vmem>>, %arg8: memref<128x16xf32, #tpu.memory_space<vmem>>, %arg9: memref<1x16xf32, #tpu.memory_space<vmem>>, %arg10: memref<2x16xf32, #tpu.memory_space<vmem>>) attributes {dimension_semantics = [#tpu.dimension_semantics<parallel>], iteration_bounds = array<i64: 1>, scalar_prefetch = 0 : i64, scratch_operands = 0 : i64, tpu.core_type = #tpu.core_type<tc>, window_params = [{transform_indices = @transform_0, window_bounds = array<i64: 14, 2, 84>}, {pipeline_mode = #tpu.pipeline_mode<synchronous>, transform_indices = @transform_1, window_bounds = array<i64: 504, 512>}, {pipeline_mode = #tpu.pipeline_mode<synchronous>, transform_indices = @transform_2, window_bounds = array<i64: 1, 128>}, {pipeline_mode = #tpu.pipeline_mode<synchronous>, transform_indices = @transform_3, window_bounds = array<i64: 5, 128, 128>}, {pipeline_mode = #tpu.pipeline_mode<synchronous>, transform_indices = @transform_4, window_bounds = array<i64: 1, 128>}, {pipeline_mode = #tpu.pipeline_mode<synchronous>, transform_indices = @transform_5, window_bounds = array<i64: 128, 128>}, {pipeline_mode = #tpu.pipeline_mode<synchronous>, transform_indices = @transform_6, window_bounds = array<i64: 1, 128>}, {pipeline_mode = #tpu.pipeline_mode<synchronous>, transform_indices = @transform_7, window_bounds = array<i64: 128, 16>}, {pipeline_mode = #tpu.pipeline_mode<synchronous>, transform_indices = @transform_8, window_bounds = array<i64: 1, 16>}, {transform_indices = @transform_9, window_bounds = array<i64: 2, 16>}]} {
    %c0 = arith.constant 0 : index
    %c0_0 = arith.constant 0 : index
    %0 = vector.load %arg5[%c0, %c0_0] : memref<1x128xf32, #tpu.memory_space<vmem>>, vector<1x128xf32>
    %c0_1 = arith.constant 0 : index
    %c0_2 = arith.constant 0 : index
    %c0_3 = arith.constant 0 : index
    %1 = vector.load %arg1[%c0_1, %c0_2, %c0_3] : memref<14x2x84xbf16, #tpu.memory_space<vmem>>, vector<1x2x84xbf16>
    %2 = vector.shape_cast %1 : vector<1x2x84xbf16> to vector<2x84xbf16>
    %3 = arith.extf %2 : vector<2x84xbf16> to vector<2x84xf32>
    %c1 = arith.constant 1 : index
    %c0_4 = arith.constant 0 : index
    %c0_5 = arith.constant 0 : index
    %4 = vector.load %arg1[%c1, %c0_4, %c0_5] : memref<14x2x84xbf16, #tpu.memory_space<vmem>>, vector<1x2x84xbf16>
    %5 = vector.shape_cast %4 : vector<1x2x84xbf16> to vector<2x84xbf16>
    %6 = arith.extf %5 : vector<2x84xbf16> to vector<2x84xf32>
    %c2 = arith.constant 2 : index
    %c0_6 = arith.constant 0 : index
    %c0_7 = arith.constant 0 : index
    %7 = vector.load %arg1[%c2, %c0_6, %c0_7] : memref<14x2x84xbf16, #tpu.memory_space<vmem>>, vector<1x2x84xbf16>
    %8 = vector.shape_cast %7 : vector<1x2x84xbf16> to vector<2x84xbf16>
    %9 = arith.extf %8 : vector<2x84xbf16> to vector<2x84xf32>
    %c3 = arith.constant 3 : index
    %c0_8 = arith.constant 0 : index
    %c0_9 = arith.constant 0 : index
    %10 = vector.load %arg1[%c3, %c0_8, %c0_9] : memref<14x2x84xbf16, #tpu.memory_space<vmem>>, vector<1x2x84xbf16>
    %11 = vector.shape_cast %10 : vector<1x2x84xbf16> to vector<2x84xbf16>
    %12 = arith.extf %11 : vector<2x84xbf16> to vector<2x84xf32>
    %c4 = arith.constant 4 : index
    %c0_10 = arith.constant 0 : index
    %c0_11 = arith.constant 0 : index
    %13 = vector.load %arg1[%c4, %c0_10, %c0_11] : memref<14x2x84xbf16, #tpu.memory_space<vmem>>, vector<1x2x84xbf16>
    %14 = vector.shape_cast %13 : vector<1x2x84xbf16> to vector<2x84xbf16>
    %15 = arith.extf %14 : vector<2x84xbf16> to vector<2x84xf32>
    %c5 = arith.constant 5 : index
    %c0_12 = arith.constant 0 : index
    %c0_13 = arith.constant 0 : index
    %16 = vector.load %arg1[%c5, %c0_12, %c0_13] : memref<14x2x84xbf16, #tpu.memory_space<vmem>>, vector<1x2x84xbf16>
    %17 = vector.shape_cast %16 : vector<1x2x84xbf16> to vector<2x84xbf16>
    %18 = arith.extf %17 : vector<2x84xbf16> to vector<2x84xf32>
    %19 = tpu.concatenate %3, %6, %9, %12, %15, %18 in 1 : vector<2x84xf32>, vector<2x84xf32>, vector<2x84xf32>, vector<2x84xf32>, vector<2x84xf32>, vector<2x84xf32> -> vector<2x504xf32>
    %c0_14 = arith.constant 0 : index
    %c0_15 = arith.constant 0 : index
    %20 = vector.load %arg2[%c0_14, %c0_15] : memref<504x512xf32, #tpu.memory_space<vmem>>, vector<504x512xf32>
    %cst = arith.constant dense<0.000000e+00> : vector<2x512xf32>
    %21 = tpu.matmul %19, %20, %cst {dimension_numbers = #tpu.dot_dimension_numbers<[1], [0], [0], [1], [0, 0, 1, 1], [], []>} : vector<2x504xf32>, vector<504x512xf32>, vector<2x512xf32> -> vector<2x512xf32>
    %22 = vector.extract_strided_slice %21 {offsets = [0, 0], sizes = [2, 128], strides = [1, 1]} : vector<2x512xf32> to vector<2x128xf32>
    %23 = vector.extract_strided_slice %21 {offsets = [0, 128], sizes = [2, 128], strides = [1, 1]} : vector<2x512xf32> to vector<2x128xf32>
    %24 = arith.maximumf %22, %23 : vector<2x128xf32>
    %25 = vector.extract_strided_slice %21 {offsets = [0, 256], sizes = [2, 128], strides = [1, 1]} : vector<2x512xf32> to vector<2x128xf32>
    %26 = vector.extract_strided_slice %21 {offsets = [0, 384], sizes = [2, 128], strides = [1, 1]} : vector<2x512xf32> to vector<2x128xf32>
    %27 = arith.maximumf %25, %26 : vector<2x128xf32>
    %28 = arith.maximumf %24, %27 : vector<2x128xf32>
    %c0_16 = arith.constant 0 : index
    %c0_17 = arith.constant 0 : index
    %29 = vector.load %arg3[%c0_16, %c0_17] : memref<1x128xf32, #tpu.memory_space<vmem>>, vector<1x128xf32>
    %30 = vector.broadcast %29 : vector<1x128xf32> to vector<2x128xf32>
    %31 = arith.addf %28, %30 : vector<2x128xf32>
    %cst_18 = arith.constant 0.000000e+00 : f32
    %32 = vector.broadcast %cst_18 : f32 to vector<2x128xf32>
    %33 = arith.maximumf %31, %32 : vector<2x128xf32>
    %c0_19 = arith.constant 0 : index
    %c0_20 = arith.constant 0 : index
    %c0_21 = arith.constant 0 : index
    %34 = vector.load %arg4[%c0_19, %c0_20, %c0_21] : memref<5x128x128xf32, #tpu.memory_space<vmem>>, vector<1x128x128xf32>
    %35 = vector.shape_cast %34 : vector<1x128x128xf32> to vector<128x128xf32>
    %cst_22 = arith.constant dense<0.000000e+00> : vector<2x128xf32>
    %36 = tpu.matmul %33, %35, %cst_22 {dimension_numbers = #tpu.dot_dimension_numbers<[1], [0], [0], [1], [0, 0, 1, 1], [], []>} : vector<2x128xf32>, vector<128x128xf32>, vector<2x128xf32> -> vector<2x128xf32>
    %37 = vector.broadcast %0 : vector<1x128xf32> to vector<2x128xf32>
    %38 = arith.addf %37, %36 : vector<2x128xf32>
    %c2_23 = arith.constant 2 : index
    %c0_24 = arith.constant 0 : index
    %c0_25 = arith.constant 0 : index
    %39 = vector.load %arg1[%c2_23, %c0_24, %c0_25] : memref<14x2x84xbf16, #tpu.memory_space<vmem>>, vector<1x2x84xbf16>
    %40 = vector.shape_cast %39 : vector<1x2x84xbf16> to vector<2x84xbf16>
    %41 = arith.extf %40 : vector<2x84xbf16> to vector<2x84xf32>
    %c3_26 = arith.constant 3 : index
    %c0_27 = arith.constant 0 : index
    %c0_28 = arith.constant 0 : index
    %42 = vector.load %arg1[%c3_26, %c0_27, %c0_28] : memref<14x2x84xbf16, #tpu.memory_space<vmem>>, vector<1x2x84xbf16>
    %43 = vector.shape_cast %42 : vector<1x2x84xbf16> to vector<2x84xbf16>
    %44 = arith.extf %43 : vector<2x84xbf16> to vector<2x84xf32>
    %c4_29 = arith.constant 4 : index
    %c0_30 = arith.constant 0 : index
    %c0_31 = arith.constant 0 : index
    %45 = vector.load %arg1[%c4_29, %c0_30, %c0_31] : memref<14x2x84xbf16, #tpu.memory_space<vmem>>, vector<1x2x84xbf16>
    %46 = vector.shape_cast %45 : vector<1x2x84xbf16> to vector<2x84xbf16>
    %47 = arith.extf %46 : vector<2x84xbf16> to vector<2x84xf32>
    %c5_32 = arith.constant 5 : index
    %c0_33 = arith.constant 0 : index
    %c0_34 = arith.constant 0 : index
    %48 = vector.load %arg1[%c5_32, %c0_33, %c0_34] : memref<14x2x84xbf16, #tpu.memory_space<vmem>>, vector<1x2x84xbf16>
    %49 = vector.shape_cast %48 : vector<1x2x84xbf16> to vector<2x84xbf16>
    %50 = arith.extf %49 : vector<2x84xbf16> to vector<2x84xf32>
    %c6 = arith.constant 6 : index
    %c0_35 = arith.constant 0 : index
    %c0_36 = arith.constant 0 : index
    %51 = vector.load %arg1[%c6, %c0_35, %c0_36] : memref<14x2x84xbf16, #tpu.memory_space<vmem>>, vector<1x2x84xbf16>
    %52 = vector.shape_cast %51 : vector<1x2x84xbf16> to vector<2x84xbf16>
    %53 = arith.extf %52 : vector<2x84xbf16> to vector<2x84xf32>
    %c7 = arith.constant 7 : index
    %c0_37 = arith.constant 0 : index
    %c0_38 = arith.constant 0 : index
    %54 = vector.load %arg1[%c7, %c0_37, %c0_38] : memref<14x2x84xbf16, #tpu.memory_space<vmem>>, vector<1x2x84xbf16>
    %55 = vector.shape_cast %54 : vector<1x2x84xbf16> to vector<2x84xbf16>
    %56 = arith.extf %55 : vector<2x84xbf16> to vector<2x84xf32>
    %57 = tpu.concatenate %41, %44, %47, %50, %53, %56 in 1 : vector<2x84xf32>, vector<2x84xf32>, vector<2x84xf32>, vector<2x84xf32>, vector<2x84xf32>, vector<2x84xf32> -> vector<2x504xf32>
    %c0_39 = arith.constant 0 : index
    %c0_40 = arith.constant 0 : index
    %58 = vector.load %arg2[%c0_39, %c0_40] : memref<504x512xf32, #tpu.memory_space<vmem>>, vector<504x512xf32>
    %cst_41 = arith.constant dense<0.000000e+00> : vector<2x512xf32>
    %59 = tpu.matmul %57, %58, %cst_41 {dimension_numbers = #tpu.dot_dimension_numbers<[1], [0], [0], [1], [0, 0, 1, 1], [], []>} : vector<2x504xf32>, vector<504x512xf32>, vector<2x512xf32> -> vector<2x512xf32>
    %60 = vector.extract_strided_slice %59 {offsets = [0, 0], sizes = [2, 128], strides = [1, 1]} : vector<2x512xf32> to vector<2x128xf32>
    %61 = vector.extract_strided_slice %59 {offsets = [0, 128], sizes = [2, 128], strides = [1, 1]} : vector<2x512xf32> to vector<2x128xf32>
    %62 = arith.maximumf %60, %61 : vector<2x128xf32>
    %63 = vector.extract_strided_slice %59 {offsets = [0, 256], sizes = [2, 128], strides = [1, 1]} : vector<2x512xf32> to vector<2x128xf32>
    %64 = vector.extract_strided_slice %59 {offsets = [0, 384], sizes = [2, 128], strides = [1, 1]} : vector<2x512xf32> to vector<2x128xf32>
    %65 = arith.maximumf %63, %64 : vector<2x128xf32>
    %66 = arith.maximumf %62, %65 : vector<2x128xf32>
    %c0_42 = arith.constant 0 : index
    %c0_43 = arith.constant 0 : index
    %67 = vector.load %arg3[%c0_42, %c0_43] : memref<1x128xf32, #tpu.memory_space<vmem>>, vector<1x128xf32>
    %68 = vector.broadcast %67 : vector<1x128xf32> to vector<2x128xf32>
    %69 = arith.addf %66, %68 : vector<2x128xf32>
    %cst_44 = arith.constant 0.000000e+00 : f32
    %70 = vector.broadcast %cst_44 : f32 to vector<2x128xf32>
    %71 = arith.maximumf %69, %70 : vector<2x128xf32>
    %c1_45 = arith.constant 1 : index
    %c0_46 = arith.constant 0 : index
    %c0_47 = arith.constant 0 : index
    %72 = vector.load %arg4[%c1_45, %c0_46, %c0_47] : memref<5x128x128xf32, #tpu.memory_space<vmem>>, vector<1x128x128xf32>
    %73 = vector.shape_cast %72 : vector<1x128x128xf32> to vector<128x128xf32>
    %cst_48 = arith.constant dense<0.000000e+00> : vector<2x128xf32>
    %74 = tpu.matmul %71, %73, %cst_48 {dimension_numbers = #tpu.dot_dimension_numbers<[1], [0], [0], [1], [0, 0, 1, 1], [], []>} : vector<2x128xf32>, vector<128x128xf32>, vector<2x128xf32> -> vector<2x128xf32>
    %75 = arith.addf %38, %74 : vector<2x128xf32>
    %c4_49 = arith.constant 4 : index
    %c0_50 = arith.constant 0 : index
    %c0_51 = arith.constant 0 : index
    %76 = vector.load %arg1[%c4_49, %c0_50, %c0_51] : memref<14x2x84xbf16, #tpu.memory_space<vmem>>, vector<1x2x84xbf16>
    %77 = vector.shape_cast %76 : vector<1x2x84xbf16> to vector<2x84xbf16>
    %78 = arith.extf %77 : vector<2x84xbf16> to vector<2x84xf32>
    %c5_52 = arith.constant 5 : index
    %c0_53 = arith.constant 0 : index
    %c0_54 = arith.constant 0 : index
    %79 = vector.load %arg1[%c5_52, %c0_53, %c0_54] : memref<14x2x84xbf16, #tpu.memory_space<vmem>>, vector<1x2x84xbf16>
    %80 = vector.shape_cast %79 : vector<1x2x84xbf16> to vector<2x84xbf16>
    %81 = arith.extf %80 : vector<2x84xbf16> to vector<2x84xf32>
    %c6_55 = arith.constant 6 : index
    %c0_56 = arith.constant 0 : index
    %c0_57 = arith.constant 0 : index
    %82 = vector.load %arg1[%c6_55, %c0_56, %c0_57] : memref<14x2x84xbf16, #tpu.memory_space<vmem>>, vector<1x2x84xbf16>
    %83 = vector.shape_cast %82 : vector<1x2x84xbf16> to vector<2x84xbf16>
    %84 = arith.extf %83 : vector<2x84xbf16> to vector<2x84xf32>
    %c7_58 = arith.constant 7 : index
    %c0_59 = arith.constant 0 : index
    %c0_60 = arith.constant 0 : index
    %85 = vector.load %arg1[%c7_58, %c0_59, %c0_60] : memref<14x2x84xbf16, #tpu.memory_space<vmem>>, vector<1x2x84xbf16>
    %86 = vector.shape_cast %85 : vector<1x2x84xbf16> to vector<2x84xbf16>
    %87 = arith.extf %86 : vector<2x84xbf16> to vector<2x84xf32>
    %c8 = arith.constant 8 : index
    %c0_61 = arith.constant 0 : index
    %c0_62 = arith.constant 0 : index
    %88 = vector.load %arg1[%c8, %c0_61, %c0_62] : memref<14x2x84xbf16, #tpu.memory_space<vmem>>, vector<1x2x84xbf16>
    %89 = vector.shape_cast %88 : vector<1x2x84xbf16> to vector<2x84xbf16>
    %90 = arith.extf %89 : vector<2x84xbf16> to vector<2x84xf32>
    %c9 = arith.constant 9 : index
    %c0_63 = arith.constant 0 : index
    %c0_64 = arith.constant 0 : index
    %91 = vector.load %arg1[%c9, %c0_63, %c0_64] : memref<14x2x84xbf16, #tpu.memory_space<vmem>>, vector<1x2x84xbf16>
    %92 = vector.shape_cast %91 : vector<1x2x84xbf16> to vector<2x84xbf16>
    %93 = arith.extf %92 : vector<2x84xbf16> to vector<2x84xf32>
    %94 = tpu.concatenate %78, %81, %84, %87, %90, %93 in 1 : vector<2x84xf32>, vector<2x84xf32>, vector<2x84xf32>, vector<2x84xf32>, vector<2x84xf32>, vector<2x84xf32> -> vector<2x504xf32>
    %c0_65 = arith.constant 0 : index
    %c0_66 = arith.constant 0 : index
    %95 = vector.load %arg2[%c0_65, %c0_66] : memref<504x512xf32, #tpu.memory_space<vmem>>, vector<504x512xf32>
    %cst_67 = arith.constant dense<0.000000e+00> : vector<2x512xf32>
    %96 = tpu.matmul %94, %95, %cst_67 {dimension_numbers = #tpu.dot_dimension_numbers<[1], [0], [0], [1], [0, 0, 1, 1], [], []>} : vector<2x504xf32>, vector<504x512xf32>, vector<2x512xf32> -> vector<2x512xf32>
    %97 = vector.extract_strided_slice %96 {offsets = [0, 0], sizes = [2, 128], strides = [1, 1]} : vector<2x512xf32> to vector<2x128xf32>
    %98 = vector.extract_strided_slice %96 {offsets = [0, 128], sizes = [2, 128], strides = [1, 1]} : vector<2x512xf32> to vector<2x128xf32>
    %99 = arith.maximumf %97, %98 : vector<2x128xf32>
    %100 = vector.extract_strided_slice %96 {offsets = [0, 256], sizes = [2, 128], strides = [1, 1]} : vector<2x512xf32> to vector<2x128xf32>
    %101 = vector.extract_strided_slice %96 {offsets = [0, 384], sizes = [2, 128], strides = [1, 1]} : vector<2x512xf32> to vector<2x128xf32>
    %102 = arith.maximumf %100, %101 : vector<2x128xf32>
    %103 = arith.maximumf %99, %102 : vector<2x128xf32>
    %c0_68 = arith.constant 0 : index
    %c0_69 = arith.constant 0 : index
    %104 = vector.load %arg3[%c0_68, %c0_69] : memref<1x128xf32, #tpu.memory_space<vmem>>, vector<1x128xf32>
    %105 = vector.broadcast %104 : vector<1x128xf32> to vector<2x128xf32>
    %106 = arith.addf %103, %105 : vector<2x128xf32>
    %cst_70 = arith.constant 0.000000e+00 : f32
    %107 = vector.broadcast %cst_70 : f32 to vector<2x128xf32>
    %108 = arith.maximumf %106, %107 : vector<2x128xf32>
    %c2_71 = arith.constant 2 : index
    %c0_72 = arith.constant 0 : index
    %c0_73 = arith.constant 0 : index
    %109 = vector.load %arg4[%c2_71, %c0_72, %c0_73] : memref<5x128x128xf32, #tpu.memory_space<vmem>>, vector<1x128x128xf32>
    %110 = vector.shape_cast %109 : vector<1x128x128xf32> to vector<128x128xf32>
    %cst_74 = arith.constant dense<0.000000e+00> : vector<2x128xf32>
    %111 = tpu.matmul %108, %110, %cst_74 {dimension_numbers = #tpu.dot_dimension_numbers<[1], [0], [0], [1], [0, 0, 1, 1], [], []>} : vector<2x128xf32>, vector<128x128xf32>, vector<2x128xf32> -> vector<2x128xf32>
    %112 = arith.addf %75, %111 : vector<2x128xf32>
    %c6_75 = arith.constant 6 : index
    %c0_76 = arith.constant 0 : index
    %c0_77 = arith.constant 0 : index
    %113 = vector.load %arg1[%c6_75, %c0_76, %c0_77] : memref<14x2x84xbf16, #tpu.memory_space<vmem>>, vector<1x2x84xbf16>
    %114 = vector.shape_cast %113 : vector<1x2x84xbf16> to vector<2x84xbf16>
    %115 = arith.extf %114 : vector<2x84xbf16> to vector<2x84xf32>
    %c7_78 = arith.constant 7 : index
    %c0_79 = arith.constant 0 : index
    %c0_80 = arith.constant 0 : index
    %116 = vector.load %arg1[%c7_78, %c0_79, %c0_80] : memref<14x2x84xbf16, #tpu.memory_space<vmem>>, vector<1x2x84xbf16>
    %117 = vector.shape_cast %116 : vector<1x2x84xbf16> to vector<2x84xbf16>
    %118 = arith.extf %117 : vector<2x84xbf16> to vector<2x84xf32>
    %c8_81 = arith.constant 8 : index
    %c0_82 = arith.constant 0 : index
    %c0_83 = arith.constant 0 : index
    %119 = vector.load %arg1[%c8_81, %c0_82, %c0_83] : memref<14x2x84xbf16, #tpu.memory_space<vmem>>, vector<1x2x84xbf16>
    %120 = vector.shape_cast %119 : vector<1x2x84xbf16> to vector<2x84xbf16>
    %121 = arith.extf %120 : vector<2x84xbf16> to vector<2x84xf32>
    %c9_84 = arith.constant 9 : index
    %c0_85 = arith.constant 0 : index
    %c0_86 = arith.constant 0 : index
    %122 = vector.load %arg1[%c9_84, %c0_85, %c0_86] : memref<14x2x84xbf16, #tpu.memory_space<vmem>>, vector<1x2x84xbf16>
    %123 = vector.shape_cast %122 : vector<1x2x84xbf16> to vector<2x84xbf16>
    %124 = arith.extf %123 : vector<2x84xbf16> to vector<2x84xf32>
    %c10 = arith.constant 10 : index
    %c0_87 = arith.constant 0 : index
    %c0_88 = arith.constant 0 : index
    %125 = vector.load %arg1[%c10, %c0_87, %c0_88] : memref<14x2x84xbf16, #tpu.memory_space<vmem>>, vector<1x2x84xbf16>
    %126 = vector.shape_cast %125 : vector<1x2x84xbf16> to vector<2x84xbf16>
    %127 = arith.extf %126 : vector<2x84xbf16> to vector<2x84xf32>
    %c11 = arith.constant 11 : index
    %c0_89 = arith.constant 0 : index
    %c0_90 = arith.constant 0 : index
    %128 = vector.load %arg1[%c11, %c0_89, %c0_90] : memref<14x2x84xbf16, #tpu.memory_space<vmem>>, vector<1x2x84xbf16>
    %129 = vector.shape_cast %128 : vector<1x2x84xbf16> to vector<2x84xbf16>
    %130 = arith.extf %129 : vector<2x84xbf16> to vector<2x84xf32>
    %131 = tpu.concatenate %115, %118, %121, %124, %127, %130 in 1 : vector<2x84xf32>, vector<2x84xf32>, vector<2x84xf32>, vector<2x84xf32>, vector<2x84xf32>, vector<2x84xf32> -> vector<2x504xf32>
    %c0_91 = arith.constant 0 : index
    %c0_92 = arith.constant 0 : index
    %132 = vector.load %arg2[%c0_91, %c0_92] : memref<504x512xf32, #tpu.memory_space<vmem>>, vector<504x512xf32>
    %cst_93 = arith.constant dense<0.000000e+00> : vector<2x512xf32>
    %133 = tpu.matmul %131, %132, %cst_93 {dimension_numbers = #tpu.dot_dimension_numbers<[1], [0], [0], [1], [0, 0, 1, 1], [], []>} : vector<2x504xf32>, vector<504x512xf32>, vector<2x512xf32> -> vector<2x512xf32>
    %134 = vector.extract_strided_slice %133 {offsets = [0, 0], sizes = [2, 128], strides = [1, 1]} : vector<2x512xf32> to vector<2x128xf32>
    %135 = vector.extract_strided_slice %133 {offsets = [0, 128], sizes = [2, 128], strides = [1, 1]} : vector<2x512xf32> to vector<2x128xf32>
    %136 = arith.maximumf %134, %135 : vector<2x128xf32>
    %137 = vector.extract_strided_slice %133 {offsets = [0, 256], sizes = [2, 128], strides = [1, 1]} : vector<2x512xf32> to vector<2x128xf32>
    %138 = vector.extract_strided_slice %133 {offsets = [0, 384], sizes = [2, 128], strides = [1, 1]} : vector<2x512xf32> to vector<2x128xf32>
    %139 = arith.maximumf %137, %138 : vector<2x128xf32>
    %140 = arith.maximumf %136, %139 : vector<2x128xf32>
    %c0_94 = arith.constant 0 : index
    %c0_95 = arith.constant 0 : index
    %141 = vector.load %arg3[%c0_94, %c0_95] : memref<1x128xf32, #tpu.memory_space<vmem>>, vector<1x128xf32>
    %142 = vector.broadcast %141 : vector<1x128xf32> to vector<2x128xf32>
    %143 = arith.addf %140, %142 : vector<2x128xf32>
    %cst_96 = arith.constant 0.000000e+00 : f32
    %144 = vector.broadcast %cst_96 : f32 to vector<2x128xf32>
    %145 = arith.maximumf %143, %144 : vector<2x128xf32>
    %c3_97 = arith.constant 3 : index
    %c0_98 = arith.constant 0 : index
    %c0_99 = arith.constant 0 : index
    %146 = vector.load %arg4[%c3_97, %c0_98, %c0_99] : memref<5x128x128xf32, #tpu.memory_space<vmem>>, vector<1x128x128xf32>
    %147 = vector.shape_cast %146 : vector<1x128x128xf32> to vector<128x128xf32>
    %cst_100 = arith.constant dense<0.000000e+00> : vector<2x128xf32>
    %148 = tpu.matmul %145, %147, %cst_100 {dimension_numbers = #tpu.dot_dimension_numbers<[1], [0], [0], [1], [0, 0, 1, 1], [], []>} : vector<2x128xf32>, vector<128x128xf32>, vector<2x128xf32> -> vector<2x128xf32>
    %149 = arith.addf %112, %148 : vector<2x128xf32>
    %c8_101 = arith.constant 8 : index
    %c0_102 = arith.constant 0 : index
    %c0_103 = arith.constant 0 : index
    %150 = vector.load %arg1[%c8_101, %c0_102, %c0_103] : memref<14x2x84xbf16, #tpu.memory_space<vmem>>, vector<1x2x84xbf16>
    %151 = vector.shape_cast %150 : vector<1x2x84xbf16> to vector<2x84xbf16>
    %152 = arith.extf %151 : vector<2x84xbf16> to vector<2x84xf32>
    %c9_104 = arith.constant 9 : index
    %c0_105 = arith.constant 0 : index
    %c0_106 = arith.constant 0 : index
    %153 = vector.load %arg1[%c9_104, %c0_105, %c0_106] : memref<14x2x84xbf16, #tpu.memory_space<vmem>>, vector<1x2x84xbf16>
    %154 = vector.shape_cast %153 : vector<1x2x84xbf16> to vector<2x84xbf16>
    %155 = arith.extf %154 : vector<2x84xbf16> to vector<2x84xf32>
    %c10_107 = arith.constant 10 : index
    %c0_108 = arith.constant 0 : index
    %c0_109 = arith.constant 0 : index
    %156 = vector.load %arg1[%c10_107, %c0_108, %c0_109] : memref<14x2x84xbf16, #tpu.memory_space<vmem>>, vector<1x2x84xbf16>
    %157 = vector.shape_cast %156 : vector<1x2x84xbf16> to vector<2x84xbf16>
    %158 = arith.extf %157 : vector<2x84xbf16> to vector<2x84xf32>
    %c11_110 = arith.constant 11 : index
    %c0_111 = arith.constant 0 : index
    %c0_112 = arith.constant 0 : index
    %159 = vector.load %arg1[%c11_110, %c0_111, %c0_112] : memref<14x2x84xbf16, #tpu.memory_space<vmem>>, vector<1x2x84xbf16>
    %160 = vector.shape_cast %159 : vector<1x2x84xbf16> to vector<2x84xbf16>
    %161 = arith.extf %160 : vector<2x84xbf16> to vector<2x84xf32>
    %c12 = arith.constant 12 : index
    %c0_113 = arith.constant 0 : index
    %c0_114 = arith.constant 0 : index
    %162 = vector.load %arg1[%c12, %c0_113, %c0_114] : memref<14x2x84xbf16, #tpu.memory_space<vmem>>, vector<1x2x84xbf16>
    %163 = vector.shape_cast %162 : vector<1x2x84xbf16> to vector<2x84xbf16>
    %164 = arith.extf %163 : vector<2x84xbf16> to vector<2x84xf32>
    %c13 = arith.constant 13 : index
    %c0_115 = arith.constant 0 : index
    %c0_116 = arith.constant 0 : index
    %165 = vector.load %arg1[%c13, %c0_115, %c0_116] : memref<14x2x84xbf16, #tpu.memory_space<vmem>>, vector<1x2x84xbf16>
    %166 = vector.shape_cast %165 : vector<1x2x84xbf16> to vector<2x84xbf16>
    %167 = arith.extf %166 : vector<2x84xbf16> to vector<2x84xf32>
    %168 = tpu.concatenate %152, %155, %158, %161, %164, %167 in 1 : vector<2x84xf32>, vector<2x84xf32>, vector<2x84xf32>, vector<2x84xf32>, vector<2x84xf32>, vector<2x84xf32> -> vector<2x504xf32>
    %c0_117 = arith.constant 0 : index
    %c0_118 = arith.constant 0 : index
    %169 = vector.load %arg2[%c0_117, %c0_118] : memref<504x512xf32, #tpu.memory_space<vmem>>, vector<504x512xf32>
    %cst_119 = arith.constant dense<0.000000e+00> : vector<2x512xf32>
    %170 = tpu.matmul %168, %169, %cst_119 {dimension_numbers = #tpu.dot_dimension_numbers<[1], [0], [0], [1], [0, 0, 1, 1], [], []>} : vector<2x504xf32>, vector<504x512xf32>, vector<2x512xf32> -> vector<2x512xf32>
    %171 = vector.extract_strided_slice %170 {offsets = [0, 0], sizes = [2, 128], strides = [1, 1]} : vector<2x512xf32> to vector<2x128xf32>
    %172 = vector.extract_strided_slice %170 {offsets = [0, 128], sizes = [2, 128], strides = [1, 1]} : vector<2x512xf32> to vector<2x128xf32>
    %173 = arith.maximumf %171, %172 : vector<2x128xf32>
    %174 = vector.extract_strided_slice %170 {offsets = [0, 256], sizes = [2, 128], strides = [1, 1]} : vector<2x512xf32> to vector<2x128xf32>
    %175 = vector.extract_strided_slice %170 {offsets = [0, 384], sizes = [2, 128], strides = [1, 1]} : vector<2x512xf32> to vector<2x128xf32>
    %176 = arith.maximumf %174, %175 : vector<2x128xf32>
    %177 = arith.maximumf %173, %176 : vector<2x128xf32>
    %c0_120 = arith.constant 0 : index
    %c0_121 = arith.constant 0 : index
    %178 = vector.load %arg3[%c0_120, %c0_121] : memref<1x128xf32, #tpu.memory_space<vmem>>, vector<1x128xf32>
    %179 = vector.broadcast %178 : vector<1x128xf32> to vector<2x128xf32>
    %180 = arith.addf %177, %179 : vector<2x128xf32>
    %cst_122 = arith.constant 0.000000e+00 : f32
    %181 = vector.broadcast %cst_122 : f32 to vector<2x128xf32>
    %182 = arith.maximumf %180, %181 : vector<2x128xf32>
    %c4_123 = arith.constant 4 : index
    %c0_124 = arith.constant 0 : index
    %c0_125 = arith.constant 0 : index
    %183 = vector.load %arg4[%c4_123, %c0_124, %c0_125] : memref<5x128x128xf32, #tpu.memory_space<vmem>>, vector<1x128x128xf32>
    %184 = vector.shape_cast %183 : vector<1x128x128xf32> to vector<128x128xf32>
    %cst_126 = arith.constant dense<0.000000e+00> : vector<2x128xf32>
    %185 = tpu.matmul %182, %184, %cst_126 {dimension_numbers = #tpu.dot_dimension_numbers<[1], [0], [0], [1], [0, 0, 1, 1], [], []>} : vector<2x128xf32>, vector<128x128xf32>, vector<2x128xf32> -> vector<2x128xf32>
    %186 = arith.addf %149, %185 : vector<2x128xf32>
    %cst_127 = arith.constant 0.000000e+00 : f32
    %187 = vector.broadcast %cst_127 : f32 to vector<2x128xf32>
    %188 = arith.maximumf %186, %187 : vector<2x128xf32>
    %c0_128 = arith.constant 0 : index
    %c0_129 = arith.constant 0 : index
    %189 = vector.load %arg6[%c0_128, %c0_129] : memref<128x128xf32, #tpu.memory_space<vmem>>, vector<128x128xf32>
    %cst_130 = arith.constant dense<0.000000e+00> : vector<2x128xf32>
    %190 = tpu.matmul %188, %189, %cst_130 {dimension_numbers = #tpu.dot_dimension_numbers<[1], [0], [0], [1], [0, 0, 1, 1], [], []>} : vector<2x128xf32>, vector<128x128xf32>, vector<2x128xf32> -> vector<2x128xf32>
    %c0_131 = arith.constant 0 : index
    %c0_132 = arith.constant 0 : index
    %191 = vector.load %arg7[%c0_131, %c0_132] : memref<1x128xf32, #tpu.memory_space<vmem>>, vector<1x128xf32>
    %192 = vector.broadcast %191 : vector<1x128xf32> to vector<2x128xf32>
    %193 = arith.addf %190, %192 : vector<2x128xf32>
    %cst_133 = arith.constant 0.000000e+00 : f32
    %194 = vector.broadcast %cst_133 : f32 to vector<2x128xf32>
    %195 = arith.maximumf %193, %194 : vector<2x128xf32>
    %c0_134 = arith.constant 0 : index
    %c0_135 = arith.constant 0 : index
    %196 = vector.load %arg8[%c0_134, %c0_135] : memref<128x16xf32, #tpu.memory_space<vmem>>, vector<128x16xf32>
    %cst_136 = arith.constant dense<0.000000e+00> : vector<2x16xf32>
    %197 = tpu.matmul %195, %196, %cst_136 {dimension_numbers = #tpu.dot_dimension_numbers<[1], [0], [0], [1], [0, 0, 1, 1], [], []>} : vector<2x128xf32>, vector<128x16xf32>, vector<2x16xf32> -> vector<2x16xf32>
    %c0_137 = arith.constant 0 : index
    %c0_138 = arith.constant 0 : index
    %198 = vector.load %arg9[%c0_137, %c0_138] : memref<1x16xf32, #tpu.memory_space<vmem>>, vector<1x16xf32>
    %199 = vector.broadcast %198 : vector<1x16xf32> to vector<2x16xf32>
    %200 = arith.addf %197, %199 : vector<2x16xf32>
    %c0_139 = arith.constant 0 : index
    %c0_140 = arith.constant 0 : index
    %201 = vector.load %arg10[%c0_139, %c0_140] : memref<2x16xf32, #tpu.memory_space<vmem>>, vector<2x16xf32>
    tpu.vector_store %arg10[%c0_139, %c0_140], %200 {strides = array<i32>} : memref<2x16xf32, #tpu.memory_space<vmem>>, vector<2x16xf32>,
    return
  }
  func.func @transform_0(%arg0: i32) -> (i32, i32, i32) {
    %c0_i32 = arith.constant 0 : i32
    %c0_i32_0 = arith.constant 0 : i32
    %c0_i32_1 = arith.constant 0 : i32
    return %c0_i32, %arg0, %c0_i32_0 : i32, i32, i32
  }
  func.func @transform_1(%arg0: i32) -> (i32, i32) {
    %c0_i32 = arith.constant 0 : i32
    %c0_i32_0 = arith.constant 0 : i32
    %c0_i32_1 = arith.constant 0 : i32
    return %c0_i32, %c0_i32_0 : i32, i32
  }
  func.func @transform_2(%arg0: i32) -> (i32, i32) {
    %c0_i32 = arith.constant 0 : i32
    %c0_i32_0 = arith.constant 0 : i32
    %c0_i32_1 = arith.constant 0 : i32
    return %c0_i32, %c0_i32_0 : i32, i32
  }
  func.func @transform_3(%arg0: i32) -> (i32, i32, i32) {
    %c0_i32 = arith.constant 0 : i32
    %c0_i32_0 = arith.constant 0 : i32
    %c0_i32_1 = arith.constant 0 : i32
    %c0_i32_2 = arith.constant 0 : i32
    return %c0_i32, %c0_i32_0, %c0_i32_1 : i32, i32, i32
  }
  func.func @transform_4(%arg0: i32) -> (i32, i32) {
    %c0_i32 = arith.constant 0 : i32
    %c0_i32_0 = arith.constant 0 : i32
    %c0_i32_1 = arith.constant 0 : i32
    return %c0_i32, %c0_i32_0 : i32, i32
  }
  func.func @transform_5(%arg0: i32) -> (i32, i32) {
    %c0_i32 = arith.constant 0 : i32
    %c0_i32_0 = arith.constant 0 : i32
    %c0_i32_1 = arith.constant 0 : i32
    return %c0_i32, %c0_i32_0 : i32, i32
  }
  func.func @transform_6(%arg0: i32) -> (i32, i32) {
    %c0_i32 = arith.constant 0 : i32
    %c0_i32_0 = arith.constant 0 : i32
    %c0_i32_1 = arith.constant 0 : i32
    return %c0_i32, %c0_i32_0 : i32, i32
  }
  func.func @transform_7(%arg0: i32) -> (i32, i32) {
    %c0_i32 = arith.constant 0 : i32
    %c0_i32_0 = arith.constant 0 : i32
    %c0_i32_1 = arith.constant 0 : i32
    return %c0_i32, %c0_i32_0 : i32, i32
  }
  func.func @transform_8(%arg0: i32) -> (i32, i32) {
    %c0_i32 = arith.constant 0 : i32
    %c0_i32_0 = arith.constant 0 : i32
    %c0_i32_1 = arith.constant 0 : i32
    return %c0_i32, %c0_i32_0 : i32, i32
  }
  func.func @transform_9(%arg0: i32) -> (i32, i32) {
    %c0_i32 = arith.constant 0 : i32
    %c0_i32_0 = arith.constant 0 : i32
    return %arg0, %c0_i32 : i32, i32
  }
}

</mosaic_0001>

<llo_original>
// kernel: cnn_forward.2
$region0: #{cnn_forward.2}
  #allocation0 [shape = 'u32[]', space=smem, size = 0x4, offset = 0x4, fixed_abs, tag = 'smem constant byte address 0x4 - core index']
  #allocation1 [shape = 'u32[144,128]{1,0:T(1,128)}', space=vmem, size = 0x12000, scoped, tag = 'internal scratch']
  %s0 = inlined_call_operand.vmem [shape: f32[32,2,96], index: 0, kind: input, shape index: {}]
  %s1 = inlined_call_operand.hbm [shape: f32[576,512], index: 1, kind: input, shape index: {}]
  %s2 = inlined_call_operand.hbm [shape: f32[1,128], index: 2, kind: input, shape index: {}]
  %s3 = inlined_call_operand.vmem [shape: bf16[14,2,84], index: 3, kind: output, shape index: {}]
  %s4 = sld [smem:[#allocation0]]
  $region53: #{cnn_forward.2} parent=0
    _
  %s6 = ssub.s32 1, %s4
  %s7 = scalar_select 0, %s6, %s4
  $region1: #{cnn_forward.2} parent=0
    #allocation2 [shape = 'u8[1179648]{0}', space=vmem, size = 0x120000, scoped, tag = 'input window, operand 1, single buffered']
    #allocation3 [shape = 's32[2]{0}', space=sflag, size = 0x8, scoped, tag = 'scoped memory for cnn_forward.2']
    #allocation4 [shape = 'u8[512]{0}', space=vmem, size = 0x400, scoped, tag = 'input window, operand 2, single buffered']
    #allocation5 [shape = 's32[1]{0}', space=sflag, size = 0x4, scoped, tag = 'scoped memory for cnn_forward.2']
    %8 = vsyncpa [#allocation3], 0
    %9 = vsyncpa [#allocation5], 0
    loop: start=0, step=1, limit=16
    $region2: #{cnn_forward.2} parent=1 // loop_pre_header
      _
    $region3: #{cnn_forward.2} parent=1 // loop_header
      %s11 = sphi 0, %s15
      %p12 = scmp.ge.s32.totalorder %s11, 16
      %s18 = sphi 0, %s30
      %s19 = sphi 0, %s26
      %s20 = sphi 0, %s18
      %s21 = sphi 0, %s19
      %s22 = sphi 0, %s20
      %s23 = sphi 0, %s21
      %s33 = sphi 0, %s35
      %s36 = sphi 0, %s33
      %s37 = sphi 0, %s36
      %s53 = sphi 0, %s37
      %s57 = sphi 0, %s57
      %s59 = sphi 0, %s57
      %s60 = sphi 0, %s59
      %s74 = sphi 0, %s60
      %s78 = sphi 0, %s78
      %s80 = sphi 0, %s78
      %s81 = sphi 0, %s80
      %s95 = sphi 0, %s81
      %s103 = sphi 0, %s105
      %s106 = sphi 0, %s103
      %s107 = sphi 0, %s106
      %s123 = sphi 0, %s107
    $region4: #{cnn_forward.2} parent=1 // loop_header_branch
      %14 = sbr.rel (%p12) target = $region8
    $region5: #{cnn_forward.2} parent=1 // loop_body
      %s16 = ssub.s32 %s11, 1
      %s17 = ssub.s32 %s11, 2
      %s24 = sadd.s32 1, %s19
      %p25 = scmp.ge.s32.totalorder %s24, 14
      %s26 = scalar_select %p25, 0, %s24
      %s27 = sadd.s32 1, %s18
      %s28 = scalar_select %p25, %s27, %s18
      %p29 = scmp.ge.s32.totalorder %s28, 1
      %s30 = scalar_select %p29, 0, %s28
      %s31 = ssub.s32 %s18, %s30
      %p32 = scmp.eq.s32.totalorder %s31, 0
      %s34 = sadd.s32 %s33, 1
      %s35 = scalar_select %p32, %s33, %s34
      %p38 = pneg %p32
      %p39 = scmp.eq.s32.totalorder %s11, 13
      %p40 = por %p38, %p39
      %p41 = scmp.ne.s32.totalorder %s33, %s36
      %p42 = scmp.eq.s32.totalorder %s11, 0
      %p43 = por %p41, %p42
      %p44 = scmp.ne.s32.totalorder %s33, %s36
      %p45 = scmp.eq.s32.totalorder %s16, 13
      %p46 = por %p44, %p45
      %p47 = scmp.ne.s32.totalorder %s36, %s37
      %p48 = scmp.eq.s32.totalorder %s16, 0
      %p49 = por %p47, %p48
      %p50 = scmp.ne.s32.totalorder %s36, %s37
      %p51 = scmp.eq.s32.totalorder %s17, 13
      %p52 = por %p50, %p51
      %p54 = scmp.ne.s32.totalorder %s37, %s53
      %p55 = scmp.eq.s32.totalorder %s17, 0
      %p56 = por %p54, %p55
      %s58 = sadd.s32 %s57, 1
      %p61 = scmp.eq.s32.totalorder %s11, 13
      %p62 = scmp.ne.s32.totalorder %s57, %s59
      %p63 = scmp.eq.s32.totalorder %s11, 0
      %p64 = por %p62, %p63
      %p65 = scmp.ne.s32.totalorder %s57, %s59
      %p66 = scmp.eq.s32.totalorder %s16, 13
      %p67 = por %p65, %p66
      %p68 = scmp.ne.s32.totalorder %s59, %s60
      %p69 = scmp.eq.s32.totalorder %s16, 0
      %p70 = por %p68, %p69
      %p71 = scmp.ne.s32.totalorder %s59, %s60
      %p72 = scmp.eq.s32.totalorder %s17, 13
      %p73 = por %p71, %p72
      %p75 = scmp.ne.s32.totalorder %s60, %s74
      %p76 = scmp.eq.s32.totalorder %s17, 0
      %p77 = por %p75, %p76
      %s79 = sadd.s32 %s78, 1
      %p82 = scmp.eq.s32.totalorder %s11, 13
      %p83 = scmp.ne.s32.totalorder %s78, %s80
      %p84 = scmp.eq.s32.totalorder %s11, 0
      %p85 = por %p83, %p84
      %p86 = scmp.ne.s32.totalorder %s78, %s80
      %p87 = scmp.eq.s32.totalorder %s16, 13
      %p88 = por %p86, %p87
      %p89 = scmp.ne.s32.totalorder %s80, %s81
      %p90 = scmp.eq.s32.totalorder %s16, 0
      %p91 = por %p89, %p90
      %p92 = scmp.ne.s32.totalorder %s80, %s81
      %p93 = scmp.eq.s32.totalorder %s17, 13
      %p94 = por %p92, %p93
      %p96 = scmp.ne.s32.totalorder %s81, %s95
      %p97 = scmp.eq.s32.totalorder %s17, 0
      %p98 = por %p96, %p97
      %s99 = ssub.s32 %s19, %s26
      %s100 = ssub.s32 %s18, %s30
      %s101 = sor.u32 %s99, %s100
      %p102 = scmp.eq.s32.totalorder %s101, 0
      %s104 = sadd.s32 %s103, 1
      %s105 = scalar_select %p102, %s103, %s104
      %p108 = pneg %p102
      %p109 = scmp.eq.s32.totalorder %s11, 13
      %p110 = por %p108, %p109
      %p111 = scmp.ne.s32.totalorder %s103, %s106
      %p112 = scmp.eq.s32.totalorder %s11, 0
      %p113 = por %p111, %p112
      %p114 = scmp.ne.s32.totalorder %s103, %s106
      %p115 = scmp.eq.s32.totalorder %s16, 13
      %p116 = por %p114, %p115
      %p117 = scmp.ne.s32.totalorder %s106, %s107
      %p118 = scmp.eq.s32.totalorder %s16, 0
      %p119 = por %p117, %p118
      %p120 = scmp.ne.s32.totalorder %s106, %s107
      %p121 = scmp.eq.s32.totalorder %s17, 13
      %p122 = por %p120, %p121
      %p124 = scmp.ne.s32.totalorder %s107, %s123
      %p125 = scmp.eq.s32.totalorder %s17, 0
      %p126 = por %p124, %p125
      %p127 = scmp.le.s32.totalorder 1, %s11
      %p128 = scmp.lt.s32.totalorder %s11, 15
      %p129 = pnand %p127, %p128
      %p130 = pneg %p129
      // Predicated region
      $region9: #{cnn_forward.2} parent=5 // pred_check
        _
      $region10: #{cnn_forward.2} parent=5 // pred_check_branch
        %132 = sbr.rel (%p129) target = $region12
      $region11: #{cnn_forward.2} parent=5 // pred_region
        %s133 = ssub.s32 %s11, 1
        // Predicated region
        $region13: #{cnn_forward.2} parent=11 // pred_check
          %p134 = pneg %p49
        $region14: #{cnn_forward.2} parent=11 // pred_check_branch
          %136 = sbr.rel (%p134) target = $region16
        $region15: #{cnn_forward.2} parent=11 // pred_region
          %p137 = scmp.lt.s32.totalorder %s20, 0
          %s138 = scalar_select %p137, %s20, 0
          %s139 = smul.addr %s138, 2
          %s140 = scalar_lea.vmem %s0, %s139
        $region16: #{cnn_forward.2} parent=11 // pred_fallthru
          _
        // Predicated region
        $region17: #{cnn_forward.2} parent=11 // pred_check
          %p141 = pneg %p70
        $region18: #{cnn_forward.2} parent=11 // pred_check_branch
          %143 = sbr.rel (%p141) target = $region20
        $region19: #{cnn_forward.2} parent=11 // pred_region
          %s145 = ssub.s32 36864, 36864
          %146 = vsyncadd [#allocation3], %s145
          %s147 = sshll.u32 [#allocation2], 4
          %s148 = int_to_ptr.vmem [resolvable:$true] %s147
          %153 = dma.hbm_to_vmem [thread:$0]  %s1, 36864, %s148, [#allocation3], 512, 512, 32
        $region20: #{cnn_forward.2} parent=11 // pred_fallthru
          _
        // Predicated region
        $region21: #{cnn_forward.2} parent=11 // pred_check
          %p154 = pneg %p91
        $region22: #{cnn_forward.2} parent=11 // pred_check_branch
          %156 = sbr.rel (%p154) target = $region24
        $region23: #{cnn_forward.2} parent=11 // pred_region
          %s158 = ssub.s32 16, 16
          %159 = vsyncadd [#allocation5], %s158
          %s161 = sshll.u32 [#allocation4], 4
          %s162 = int_to_ptr.vmem [resolvable:$true] %s161
          %164 = dma.hbm_to_vmem [thread:$0]  %s2, 16, %s162, [#allocation5]
        $region24: #{cnn_forward.2} parent=11 // pred_fallthru
          _
      $region12: #{cnn_forward.2} parent=5 // pred_fallthru
        _
      %p165 = scmp.lt.s32.totalorder %s11, 14
      // Predicated region
      $region25: #{cnn_forward.2} parent=5 // pred_check
        %p166 = pneg %p165
      $region26: #{cnn_forward.2} parent=5 // pred_check_branch
        %168 = sbr.rel (%p166) target = $region28
      $region27: #{cnn_forward.2} parent=5 // pred_region
        _
      $region28: #{cnn_forward.2} parent=5 // pred_fallthru
        _
      %p169 = scmp.le.s32.totalorder 1, %s11
      %p170 = scmp.lt.s32.totalorder %s11, 15
      %p171 = pnand %p169, %p170
      %p172 = pneg %p171
      // Predicated region
      $region29: #{cnn_forward.2} parent=5 // pred_check
        _
      $region30: #{cnn_forward.2} parent=5 // pred_check_branch
        %174 = sbr.rel (%p171) target = $region32
      $region31: #{cnn_forward.2} parent=5 // pred_region
        %s175 = ssub.s32 %s11, 1
        // Predicated region
        $region33: #{cnn_forward.2} parent=31 // pred_check
          %p176 = pneg %p70
        $region34: #{cnn_forward.2} parent=31 // pred_check_branch
          %178 = sbr.rel (%p176) target = $region36
        $region35: #{cnn_forward.2} parent=31 // pred_region
          %179 = dma.done [#allocation3], 36864
        $region36: #{cnn_forward.2} parent=31 // pred_fallthru
          _
        // Predicated region
        $region37: #{cnn_forward.2} parent=31 // pred_check
          %p180 = pneg %p91
        $region38: #{cnn_forward.2} parent=31 // pred_check_branch
          %182 = sbr.rel (%p180) target = $region40
        $region39: #{cnn_forward.2} parent=31 // pred_region
          %183 = dma.done [#allocation5], 16
        $region40: #{cnn_forward.2} parent=31 // pred_fallthru
          _
        %p184 = scmp.lt.s32.totalorder %s20, 0
        %s185 = scalar_select %p184, %s20, 0
        %s186 = smul.addr %s185, 2
        %s187 = scalar_lea.vmem %s0, %s186
        %p188 = pneg %p49
        %p189 = pneg %p46
        %p190 = pneg %p70
        %p191 = pneg %p67
        %p192 = pneg %p91
        %p193 = pneg %p88
        %p194 = pneg %p119
        %p195 = pneg %p116
        %p196 = scmp.lt.s32.totalorder %s21, 13
        %s197 = scalar_select %p196, %s21, 13
        %p198 = scmp.lt.s32.totalorder %s20, 0
        %s199 = scalar_select %p198, %s20, 0
        %s200 = sadd.s32 %s199, %s197
        %s201 = scalar_lea.vmem %s3, %s200
        %p202 = scmp.lt.s32.totalorder %s20, 0
        %s203 = scalar_select %p202, %s20, 0
        %s204 = smul.addr %s203, 2
        %s205 = scalar_lea.vmem %s0, %s204
        %p206 = scmp.lt.s32.totalorder %s21, 13
        %s207 = scalar_select %p206, %s21, 13
        %p208 = scmp.lt.s32.totalorder %s20, 0
        %s209 = scalar_select %p208, %s20, 0
        %s210 = sadd.s32 %s209, %s207
        %s211 = scalar_lea.vmem %s3, %s210
        %s212 = smul.u32 %s21, 2
        %s213 = smul.u32 %s212, 2
        %s214 = scalar_lea.vmem %s205, %s213
        %v215 = vld [vmem:[%s214] sm:$0x3]
        %s216 = sadd.s32 %s212, 1
        %s217 = smul.u32 %s216, 2
        %s218 = scalar_lea.vmem %s205, %s217
        %v219 = vld [vmem:[%s218] sm:$0x3]
        %s220 = sadd.s32 %s212, 2
        %s221 = smul.u32 %s220, 2
        %s222 = scalar_lea.vmem %s205, %s221
        %v223 = vld [vmem:[%s222] sm:$0x3]
        %s224 = sadd.s32 %s212, 3
        %s225 = smul.u32 %s224, 2
        %s226 = scalar_lea.vmem %s205, %s225
        %v227 = vld [vmem:[%s226] sm:$0x3]
        %s228 = sadd.s32 %s212, 4
        %s229 = smul.u32 %s228, 2
        %s230 = scalar_lea.vmem %s205, %s229
        %v231 = vld [vmem:[%s230] sm:$0x3]
        %s232 = sadd.s32 %s212, 5
        %s233 = smul.u32 %s232, 2
        %s234 = scalar_lea.vmem %s205, %s233
        %v235 = vld [vmem:[%s234] sm:$0x3]
        %237 = vrot.lane.b32.xlu0 %v219, 96
        %v238 = vpop.permute.xlu0 %237
        %241 = vrot.lane.b32.xlu0 %v223, 64
        %v242 = vpop.permute.xlu0 %241
        %245 = vrot.lane.b32.xlu0 %v227, 32
        %v246 = vpop.permute.xlu0 %245
        %249 = vrot.lane.b32.xlu0 %v235, 96
        %v250 = vpop.permute.xlu0 %249
        %vm252 = vcmask 785408
        %v253 = vsel %vm252, %v215, %v238
        %vm254 = vcmask 523264
        %v255 = vsel %vm254, %v238, %v242
        %vm256 = vcmask 261120
        %v257 = vsel %vm256, %v242, %v246
        %v258 = vsel %vm252, %v231, %v250
        %v259 = vld [vmem:[#allocation2] sm:$0xff]
        %v260 = vld [vmem:[#allocation2 + $0x8] sm:$0xff]
        %v261 = vld [vmem:[#allocation2 + $0x10] sm:$0xff]
        %v262 = vld [vmem:[#allocation2 + $0x18] sm:$0xff]
        %v263 = vld [vmem:[#allocation2 + $0x20] sm:$0xff]
        %v264 = vld [vmem:[#allocation2 + $0x28] sm:$0xff]
        %v265 = vld [vmem:[#allocation2 + $0x30] sm:$0xff]
        %v266 = vld [vmem:[#allocation2 + $0x38] sm:$0xff]
        %v267 = vld [vmem:[#allocation2 + $0x40] sm:$0xff]
        %v268 = vld [vmem:[#allocation2 + $0x48] sm:$0xff]
        %v269 = vld [vmem:[#allocation2 + $0x50] sm:$0xff]
        %v270 = vld [vmem:[#allocation2 + $0x58] sm:$0xff]
        %v271 = vld [vmem:[#allocation2 + $0x60] sm:$0xff]
        %v272 = vld [vmem:[#allocation2 + $0x68] sm:$0xff]
        %v273 = vld [vmem:[#allocation2 + $0x70] sm:$0xff]
        %v274 = vld [vmem:[#allocation2 + $0x78] sm:$0xff]
        %v275 = vld [vmem:[#allocation2 + $0x80] sm:$0xff]
        %v276 = vld [vmem:[#allocation2 + $0x88] sm:$0xff]
        %v277 = vld [vmem:[#allocation2 + $0x90] sm:$0xff]
        %v278 = vld [vmem:[#allocation2 + $0x98] sm:$0xff]
        %v279 = vld [vmem:[#allocation2 + $0xa0] sm:$0xff]
        %v280 = vld [vmem:[#allocation2 + $0xa8] sm:$0xff]
        %v281 = vld [vmem:[#allocation2 + $0xb0] sm:$0xff]
        %v282 = vld [vmem:[#allocation2 + $0xb8] sm:$0xff]
        %v283 = vld [vmem:[#allocation2 + $0xc0] sm:$0xff]
        %v284 = vld [vmem:[#allocation2 + $0xc8] sm:$0xff]
        %v285 = vld [vmem:[#allocation2 + $0xd0] sm:$0xff]
        %v286 = vld [vmem:[#allocation2 + $0xd8] sm:$0xff]
        %v287 = vld [vmem:[#allocation2 + $0xe0] sm:$0xff]
        %v288 = vld [vmem:[#allocation2 + $0xe8] sm:$0xff]
        %v289 = vld [vmem:[#allocation2 + $0xf0] sm:$0xff]
        %v290 = vld [vmem:[#allocation2 + $0xf8] sm:$0xff]
        %v291 = vld [vmem:[#allocation2 + $0x100] sm:$0xff]
        %v292 = vld [vmem:[#allocation2 + $0x108] sm:$0xff]
        %v293 = vld [vmem:[#allocation2 + $0x110] sm:$0xff]
        %v294 = vld [vmem:[#allocation2 + $0x118] sm:$0xff]
        %v295 = vld [vmem:[#allocation2 + $0x120] sm:$0xff]
        %v296 = vld [vmem:[#allocation2 + $0x128] sm:$0xff]
        %v297 = vld [vmem:[#allocation2 + $0x130] sm:$0xff]
        %v298 = vld [vmem:[#allocation2 + $0x138] sm:$0xff]
        %v299 = vld [vmem:[#allocation2 + $0x140] sm:$0xff]
        %v300 = vld [vmem:[#allocation2 + $0x148] sm:$0xff]
        %v301 = vld [vmem:[#allocation2 + $0x150] sm:$0xff]
        %v302 = vld [vmem:[#allocation2 + $0x158] sm:$0xff]
        %v303 = vld [vmem:[#allocation2 + $0x160] sm:$0xff]
        %v304 = vld [vmem:[#allocation2 + $0x168] sm:$0xff]
        %v305 = vld [vmem:[#allocation2 + $0x170] sm:$0xff]
        %v306 = vld [vmem:[#allocation2 + $0x178] sm:$0xff]
        %v307 = vld [vmem:[#allocation2 + $0x180] sm:$0xff]
        %v308 = vld [vmem:[#allocation2 + $0x188] sm:$0xff]
        %v309 = vld [vmem:[#allocation2 + $0x190] sm:$0xff]
        %v310 = vld [vmem:[#allocation2 + $0x198] sm:$0xff]
        %v311 = vld [vmem:[#allocation2 + $0x1a0] sm:$0xff]
        %v312 = vld [vmem:[#allocation2 + $0x1a8] sm:$0xff]
        %v313 = vld [vmem:[#allocation2 + $0x1b0] sm:$0xff]
        %v314 = vld [vmem:[#allocation2 + $0x1b8] sm:$0xff]
        %v315 = vld [vmem:[#allocation2 + $0x1c0] sm:$0xff]
        %v316 = vld [vmem:[#allocation2 + $0x1c8] sm:$0xff]
        %v317 = vld [vmem:[#allocation2 + $0x1d0] sm:$0xff]
        %v318 = vld [vmem:[#allocation2 + $0x1d8] sm:$0xff]
        %v319 = vld [vmem:[#allocation2 + $0x1e0] sm:$0xff]
        %v320 = vld [vmem:[#allocation2 + $0x1e8] sm:$0xff]
        %v321 = vld [vmem:[#allocation2 + $0x1f0] sm:$0xff]
        %v322 = vld [vmem:[#allocation2 + $0x1f8] sm:$0xff]
        %v323 = vld [vmem:[#allocation2 + $0x200] sm:$0xff]
        %v324 = vld [vmem:[#allocation2 + $0x208] sm:$0xff]
        %v325 = vld [vmem:[#allocation2 + $0x210] sm:$0xff]
        %v326 = vld [vmem:[#allocation2 + $0x218] sm:$0xff]
        %v327 = vld [vmem:[#allocation2 + $0x220] sm:$0xff]
        %v328 = vld [vmem:[#allocation2 + $0x228] sm:$0xff]
        %v329 = vld [vmem:[#allocation2 + $0x230] sm:$0xff]
        %v330 = vld [vmem:[#allocation2 + $0x238] sm:$0xff]
        %v331 = vld [vmem:[#allocation2 + $0x240] sm:$0xff]
        %v332 = vld [vmem:[#allocation2 + $0x248] sm:$0xff]
        %v333 = vld [vmem:[#allocation2 + $0x250] sm:$0xff]
        %v334 = vld [vmem:[#allocation2 + $0x258] sm:$0xff]
        %v335 = vld [vmem:[#allocation2 + $0x260] sm:$0xff]
        %v336 = vld [vmem:[#allocation2 + $0x268] sm:$0xff]
        %v337 = vld [vmem:[#allocation2 + $0x270] sm:$0xff]
        %v338 = vld [vmem:[#allocation2 + $0x278] sm:$0xff]
        %v339 = vld [vmem:[#allocation2 + $0x280] sm:$0xff]
        %v340 = vld [vmem:[#allocation2 + $0x288] sm:$0xff]
        %v341 = vld [vmem:[#allocation2 + $0x290] sm:$0xff]
        %v342 = vld [vmem:[#allocation2 + $0x298] sm:$0xff]
        %v343 = vld [vmem:[#allocation2 + $0x2a0] sm:$0xff]
        %v344 = vld [vmem:[#allocation2 + $0x2a8] sm:$0xff]
        %v345 = vld [vmem:[#allocation2 + $0x2b0] sm:$0xff]
        %v346 = vld [vmem:[#allocation2 + $0x2b8] sm:$0xff]
        %v347 = vld [vmem:[#allocation2 + $0x2c0] sm:$0xff]
        %v348 = vld [vmem:[#allocation2 + $0x2c8] sm:$0xff]
        %v349 = vld [vmem:[#allocation2 + $0x2d0] sm:$0xff]
        %v350 = vld [vmem:[#allocation2 + $0x2d8] sm:$0xff]
        %v351 = vld [vmem:[#allocation2 + $0x2e0] sm:$0xff]
        %v352 = vld [vmem:[#allocation2 + $0x2e8] sm:$0xff]
        %v353 = vld [vmem:[#allocation2 + $0x2f0] sm:$0xff]
        %v354 = vld [vmem:[#allocation2 + $0x2f8] sm:$0xff]
        %v355 = vld [vmem:[#allocation2 + $0x300] sm:$0xff]
        %v356 = vld [vmem:[#allocation2 + $0x308] sm:$0xff]
        %v357 = vld [vmem:[#allocation2 + $0x310] sm:$0xff]
        %v358 = vld [vmem:[#allocation2 + $0x318] sm:$0xff]
        %v359 = vld [vmem:[#allocation2 + $0x320] sm:$0xff]
        %v360 = vld [vmem:[#allocation2 + $0x328] sm:$0xff]
        %v361 = vld [vmem:[#allocation2 + $0x330] sm:$0xff]
        %v362 = vld [vmem:[#allocation2 + $0x338] sm:$0xff]
        %v363 = vld [vmem:[#allocation2 + $0x340] sm:$0xff]
        %v364 = vld [vmem:[#allocation2 + $0x348] sm:$0xff]
        %v365 = vld [vmem:[#allocation2 + $0x350] sm:$0xff]
        %v366 = vld [vmem:[#allocation2 + $0x358] sm:$0xff]
        %v367 = vld [vmem:[#allocation2 + $0x360] sm:$0xff]
        %v368 = vld [vmem:[#allocation2 + $0x368] sm:$0xff]
        %v369 = vld [vmem:[#allocation2 + $0x370] sm:$0xff]
        %v370 = vld [vmem:[#allocation2 + $0x378] sm:$0xff]
        %v371 = vld [vmem:[#allocation2 + $0x380] sm:$0xff]
        %v372 = vld [vmem:[#allocation2 + $0x388] sm:$0xff]
        %v373 = vld [vmem:[#allocation2 + $0x390] sm:$0xff]
        %v374 = vld [vmem:[#allocation2 + $0x398] sm:$0xff]
        %v375 = vld [vmem:[#allocation2 + $0x3a0] sm:$0xff]
        %v376 = vld [vmem:[#allocation2 + $0x3a8] sm:$0xff]
        %v377 = vld [vmem:[#allocation2 + $0x3b0] sm:$0xff]
        %v378 = vld [vmem:[#allocation2 + $0x3b8] sm:$0xff]
        %v379 = vld [vmem:[#allocation2 + $0x3c0] sm:$0xff]
        %v380 = vld [vmem:[#allocation2 + $0x3c8] sm:$0xff]
        %v381 = vld [vmem:[#allocation2 + $0x3d0] sm:$0xff]
        %v382 = vld [vmem:[#allocation2 + $0x3d8] sm:$0xff]
        %v383 = vld [vmem:[#allocation2 + $0x3e0] sm:$0xff]
        %v384 = vld [vmem:[#allocation2 + $0x3e8] sm:$0xff]
        %v385 = vld [vmem:[#allocation2 + $0x3f0] sm:$0xff]
        %v386 = vld [vmem:[#allocation2 + $0x3f8] sm:$0xff]
        %v387 = vld [vmem:[#allocation2 + $0x400] sm:$0xff]
        %v388 = vld [vmem:[#allocation2 + $0x408] sm:$0xff]
        %v389 = vld [vmem:[#allocation2 + $0x410] sm:$0xff]
        %v390 = vld [vmem:[#allocation2 + $0x418] sm:$0xff]
        %v391 = vld [vmem:[#allocation2 + $0x420] sm:$0xff]
        %v392 = vld [vmem:[#allocation2 + $0x428] sm:$0xff]
        %v393 = vld [vmem:[#allocation2 + $0x430] sm:$0xff]
        %v394 = vld [vmem:[#allocation2 + $0x438] sm:$0xff]
        %v395 = vld [vmem:[#allocation2 + $0x440] sm:$0xff]
        %v396 = vld [vmem:[#allocation2 + $0x448] sm:$0xff]
        %v397 = vld [vmem:[#allocation2 + $0x450] sm:$0xff]
        %v398 = vld [vmem:[#allocation2 + $0x458] sm:$0xff]
        %v399 = vld [vmem:[#allocation2 + $0x460] sm:$0xff]
        %v400 = vld [vmem:[#allocation2 + $0x468] sm:$0xff]
        %v401 = vld [vmem:[#allocation2 + $0x470] sm:$0xff]
        %v402 = vld [vmem:[#allocation2 + $0x478] sm:$0xff]
        %v403 = vld [vmem:[#allocation2 + $0x480] sm:$0xff]
        %v404 = vld [vmem:[#allocation2 + $0x488] sm:$0xff]
        %v405 = vld [vmem:[#allocation2 + $0x490] sm:$0xff]
        %v406 = vld [vmem:[#allocation2 + $0x498] sm:$0xff]
        %v407 = vld [vmem:[#allocation2 + $0x4a0] sm:$0xff]
        %v408 = vld [vmem:[#allocation2 + $0x4a8] sm:$0xff]
        %v409 = vld [vmem:[#allocation2 + $0x4b0] sm:$0xff]
        %v410 = vld [vmem:[#allocation2 + $0x4b8] sm:$0xff]
        %v411 = vld [vmem:[#allocation2 + $0x4c0] sm:$0xff]
        %v412 = vld [vmem:[#allocation2 + $0x4c8] sm:$0xff]
        %v413 = vld [vmem:[#allocation2 + $0x4d0] sm:$0xff]
        %v414 = vld [vmem:[#allocation2 + $0x4d8] sm:$0xff]
        %v415 = vld [vmem:[#allocation2 + $0x4e0] sm:$0xff]
        %v416 = vld [vmem:[#allocation2 + $0x4e8] sm:$0xff]
        %v417 = vld [vmem:[#allocation2 + $0x4f0] sm:$0xff]
        %v418 = vld [vmem:[#allocation2 + $0x4f8] sm:$0xff]
        %v419 = vld [vmem:[#allocation2 + $0x500] sm:$0xff]
        %v420 = vld [vmem:[#allocation2 + $0x508] sm:$0xff]
        %v421 = vld [vmem:[#allocation2 + $0x510] sm:$0xff]
        %v422 = vld [vmem:[#allocation2 + $0x518] sm:$0xff]
        %v423 = vld [vmem:[#allocation2 + $0x520] sm:$0xff]
        %v424 = vld [vmem:[#allocation2 + $0x528] sm:$0xff]
        %v425 = vld [vmem:[#allocation2 + $0x530] sm:$0xff]
        %v426 = vld [vmem:[#allocation2 + $0x538] sm:$0xff]
        %v427 = vld [vmem:[#allocation2 + $0x540] sm:$0xff]
        %v428 = vld [vmem:[#allocation2 + $0x548] sm:$0xff]
        %v429 = vld [vmem:[#allocation2 + $0x550] sm:$0xff]
        %v430 = vld [vmem:[#allocation2 + $0x558] sm:$0xff]
        %v431 = vld [vmem:[#allocation2 + $0x560] sm:$0xff]
        %v432 = vld [vmem:[#allocation2 + $0x568] sm:$0xff]
        %v433 = vld [vmem:[#allocation2 + $0x570] sm:$0xff]
        %v434 = vld [vmem:[#allocation2 + $0x578] sm:$0xff]
        %v435 = vld [vmem:[#allocation2 + $0x580] sm:$0xff]
        %v436 = vld [vmem:[#allocation2 + $0x588] sm:$0xff]
        %v437 = vld [vmem:[#allocation2 + $0x590] sm:$0xff]
        %v438 = vld [vmem:[#allocation2 + $0x598] sm:$0xff]
        %v439 = vld [vmem:[#allocation2 + $0x5a0] sm:$0xff]
        %v440 = vld [vmem:[#allocation2 + $0x5a8] sm:$0xff]
        %v441 = vld [vmem:[#allocation2 + $0x5b0] sm:$0xff]
        %v442 = vld [vmem:[#allocation2 + $0x5b8] sm:$0xff]
        %v443 = vld [vmem:[#allocation2 + $0x5c0] sm:$0xff]
        %v444 = vld [vmem:[#allocation2 + $0x5c8] sm:$0xff]
        %v445 = vld [vmem:[#allocation2 + $0x5d0] sm:$0xff]
        %v446 = vld [vmem:[#allocation2 + $0x5d8] sm:$0xff]
        %v447 = vld [vmem:[#allocation2 + $0x5e0] sm:$0xff]
        %v448 = vld [vmem:[#allocation2 + $0x5e8] sm:$0xff]
        %v449 = vld [vmem:[#allocation2 + $0x5f0] sm:$0xff]
        %v450 = vld [vmem:[#allocation2 + $0x5f8] sm:$0xff]
        %v451 = vld [vmem:[#allocation2 + $0x600] sm:$0xff]
        %v452 = vld [vmem:[#allocation2 + $0x608] sm:$0xff]
        %v453 = vld [vmem:[#allocation2 + $0x610] sm:$0xff]
        %v454 = vld [vmem:[#allocation2 + $0x618] sm:$0xff]
        %v455 = vld [vmem:[#allocation2 + $0x620] sm:$0xff]
        %v456 = vld [vmem:[#allocation2 + $0x628] sm:$0xff]
        %v457 = vld [vmem:[#allocation2 + $0x630] sm:$0xff]
        %v458 = vld [vmem:[#allocation2 + $0x638] sm:$0xff]
        %v459 = vld [vmem:[#allocation2 + $0x640] sm:$0xff]
        %v460 = vld [vmem:[#allocation2 + $0x648] sm:$0xff]
        %v461 = vld [vmem:[#allocation2 + $0x650] sm:$0xff]
        %v462 = vld [vmem:[#allocation2 + $0x658] sm:$0xff]
        %v463 = vld [vmem:[#allocation2 + $0x660] sm:$0xff]
        %v464 = vld [vmem:[#allocation2 + $0x668] sm:$0xff]
        %v465 = vld [vmem:[#allocation2 + $0x670] sm:$0xff]
        %v466 = vld [vmem:[#allocation2 + $0x678] sm:$0xff]
        %v467 = vld [vmem:[#allocation2 + $0x680] sm:$0xff]
        %v468 = vld [vmem:[#allocation2 + $0x688] sm:$0xff]
        %v469 = vld [vmem:[#allocation2 + $0x690] sm:$0xff]
        %v470 = vld [vmem:[#allocation2 + $0x698] sm:$0xff]
        %v471 = vld [vmem:[#allocation2 + $0x6a0] sm:$0xff]
        %v472 = vld [vmem:[#allocation2 + $0x6a8] sm:$0xff]
        %v473 = vld [vmem:[#allocation2 + $0x6b0] sm:$0xff]
        %v474 = vld [vmem:[#allocation2 + $0x6b8] sm:$0xff]
        %v475 = vld [vmem:[#allocation2 + $0x6c0] sm:$0xff]
        %v476 = vld [vmem:[#allocation2 + $0x6c8] sm:$0xff]
        %v477 = vld [vmem:[#allocation2 + $0x6d0] sm:$0xff]
        %v478 = vld [vmem:[#allocation2 + $0x6d8] sm:$0xff]
        %v479 = vld [vmem:[#allocation2 + $0x6e0] sm:$0xff]
        %v480 = vld [vmem:[#allocation2 + $0x6e8] sm:$0xff]
        %v481 = vld [vmem:[#allocation2 + $0x6f0] sm:$0xff]
        %v482 = vld [vmem:[#allocation2 + $0x6f8] sm:$0xff]
        %v483 = vld [vmem:[#allocation2 + $0x700] sm:$0xff]
        %v484 = vld [vmem:[#allocation2 + $0x708] sm:$0xff]
        %v485 = vld [vmem:[#allocation2 + $0x710] sm:$0xff]
        %v486 = vld [vmem:[#allocation2 + $0x718] sm:$0xff]
        %v487 = vld [vmem:[#allocation2 + $0x720] sm:$0xff]
        %v488 = vld [vmem:[#allocation2 + $0x728] sm:$0xff]
        %v489 = vld [vmem:[#allocation2 + $0x730] sm:$0xff]
        %v490 = vld [vmem:[#allocation2 + $0x738] sm:$0xff]
        %v491 = vld [vmem:[#allocation2 + $0x740] sm:$0xff]
        %v492 = vld [vmem:[#allocation2 + $0x748] sm:$0xff]
        %v493 = vld [vmem:[#allocation2 + $0x750] sm:$0xff]
        %v494 = vld [vmem:[#allocation2 + $0x758] sm:$0xff]
        %v495 = vld [vmem:[#allocation2 + $0x760] sm:$0xff]
        %v496 = vld [vmem:[#allocation2 + $0x768] sm:$0xff]
        %v497 = vld [vmem:[#allocation2 + $0x770] sm:$0xff]
        %v498 = vld [vmem:[#allocation2 + $0x778] sm:$0xff]
        %v499 = vld [vmem:[#allocation2 + $0x780] sm:$0xff]
        %v500 = vld [vmem:[#allocation2 + $0x788] sm:$0xff]
        %v501 = vld [vmem:[#allocation2 + $0x790] sm:$0xff]
        %v502 = vld [vmem:[#allocation2 + $0x798] sm:$0xff]
        %v503 = vld [vmem:[#allocation2 + $0x7a0] sm:$0xff]
        %v504 = vld [vmem:[#allocation2 + $0x7a8] sm:$0xff]
        %v505 = vld [vmem:[#allocation2 + $0x7b0] sm:$0xff]
        %v506 = vld [vmem:[#allocation2 + $0x7b8] sm:$0xff]
        %v507 = vld [vmem:[#allocation2 + $0x7c0] sm:$0xff]
        %v508 = vld [vmem:[#allocation2 + $0x7c8] sm:$0xff]
        %v509 = vld [vmem:[#allocation2 + $0x7d0] sm:$0xff]
        %v510 = vld [vmem:[#allocation2 + $0x7d8] sm:$0xff]
        %v511 = vld [vmem:[#allocation2 + $0x7e0] sm:$0xff]
        %v512 = vld [vmem:[#allocation2 + $0x7e8] sm:$0xff]
        %v513 = vld [vmem:[#allocation2 + $0x7f0] sm:$0xff]
        %v514 = vld [vmem:[#allocation2 + $0x7f8] sm:$0xff]
        %v515 = vld [vmem:[#allocation2 + $0x800] sm:$0xff]
        %v516 = vld [vmem:[#allocation2 + $0x808] sm:$0xff]
        %v517 = vld [vmem:[#allocation2 + $0x810] sm:$0xff]
        %v518 = vld [vmem:[#allocation2 + $0x818] sm:$0xff]
        %v519 = vld [vmem:[#allocation2 + $0x820] sm:$0xff]
        %v520 = vld [vmem:[#allocation2 + $0x828] sm:$0xff]
        %v521 = vld [vmem:[#allocation2 + $0x830] sm:$0xff]
        %v522 = vld [vmem:[#allocation2 + $0x838] sm:$0xff]
        %v523 = vld [vmem:[#allocation2 + $0x840] sm:$0xff]
        %v524 = vld [vmem:[#allocation2 + $0x848] sm:$0xff]
        %v525 = vld [vmem:[#allocation2 + $0x850] sm:$0xff]
        %v526 = vld [vmem:[#allocation2 + $0x858] sm:$0xff]
        %v527 = vld [vmem:[#allocation2 + $0x860] sm:$0xff]
        %v528 = vld [vmem:[#allocation2 + $0x868] sm:$0xff]
        %v529 = vld [vmem:[#allocation2 + $0x870] sm:$0xff]
        %v530 = vld [vmem:[#allocation2 + $0x878] sm:$0xff]
        %v531 = vld [vmem:[#allocation2 + $0x880] sm:$0xff]
        %v532 = vld [vmem:[#allocation2 + $0x888] sm:$0xff]
        %v533 = vld [vmem:[#allocation2 + $0x890] sm:$0xff]
        %v534 = vld [vmem:[#allocation2 + $0x898] sm:$0xff]
        %v535 = vld [vmem:[#allocation2 + $0x8a0] sm:$0xff]
        %v536 = vld [vmem:[#allocation2 + $0x8a8] sm:$0xff]
        %v537 = vld [vmem:[#allocation2 + $0x8b0] sm:$0xff]
        %v538 = vld [vmem:[#allocation2 + $0x8b8] sm:$0xff]
        %v539 = vld [vmem:[#allocation2 + $0x8c0] sm:$0xff]
        %v540 = vld [vmem:[#allocation2 + $0x8c8] sm:$0xff]
        %v541 = vld [vmem:[#allocation2 + $0x8d0] sm:$0xff]
        %v542 = vld [vmem:[#allocation2 + $0x8d8] sm:$0xff]
        %v543 = vld [vmem:[#allocation2 + $0x8e0] sm:$0xff]
        %v544 = vld [vmem:[#allocation2 + $0x8e8] sm:$0xff]
        %v545 = vld [vmem:[#allocation2 + $0x8f0] sm:$0xff]
        %v546 = vld [vmem:[#allocation2 + $0x8f8] sm:$0xff]
        %v547 = vsel %vm254, %v250, 0
        %549 = vmatprep.subr.mxu0 %v260
        %550 = vmatpush1.msra.mxu0 %v259
        %551 = vmatprep.subr.mxu0 %v264
        %552 = vmatpush1.msra.mxu0 %v263
        %553 = vmatprep.subr.mxu0 %v268
        %554 = vmatpush1.msra.mxu0 %v267
        %555 = vmatprep.subr.mxu0 %v272
        %556 = vmatpush1.msra.mxu0 %v271
        %557 = vmatprep.subr.mxu0 %v276
        %558 = vmatpush1.msra.mxu0 %v275
        %559 = vmatprep.subr.mxu0 %v280
        %560 = vmatpush1.msra.mxu0 %v279
        %561 = vmatprep.subr.mxu0 %v284
        %562 = vmatpush1.msra.mxu0 %v283
        %563 = vmatprep.subr.mxu0 %v288
        %564 = vmatpush1.msra.mxu0 %v287
        %565 = vmatprep.subr.mxu0 %v292
        %566 = vmatpush1.msra.mxu0 %v291
        %567 = vmatprep.subr.mxu0 %v296
        %568 = vmatpush1.msra.mxu0 %v295
        %569 = vmatprep.subr.mxu0 %v300
        %570 = vmatpush1.msra.mxu0 %v299
        %571 = vmatprep.subr.mxu0 %v304
        %572 = vmatpush1.msra.mxu0 %v303
        %573 = vmatprep.subr.mxu0 %v308
        %574 = vmatpush1.msra.mxu0 %v307
        %575 = vmatprep.subr.mxu0 %v312
        %576 = vmatpush1.msra.mxu0 %v311
        %577 = vmatprep.subr.mxu0 %v316
        %578 = vmatpush1.msra.mxu0 %v315
        %579 = vmatprep.subr.mxu0 %v320
        %580 = vmatpush1.msra.mxu0 %v319
        %581 = vmatprep.subr.mxu0 %v324
        %582 = vmatpush1.msra.mxu0 %v323
        %583 = vmatprep.subr.mxu0 %v328
        %584 = vmatpush1.msra.mxu0 %v327
        %585 = vmatprep.subr.mxu0 %v332
        %586 = vmatpush1.msra.mxu0 %v331
        %587 = vmatprep.subr.mxu0 %v336
        %588 = vmatpush1.msra.mxu0 %v335
        %589 = vmatprep.subr.mxu0 %v340
        %590 = vmatpush1.msra.mxu0 %v339
        %591 = vmatprep.subr.mxu0 %v344
        %592 = vmatpush1.msra.mxu0 %v343
        %593 = vmatprep.subr.mxu0 %v348
        %594 = vmatpush1.msra.mxu0 %v347
        %595 = vmatprep.subr.mxu0 %v352
        %596 = vmatpush1.msra.mxu0 %v351
        %597 = vmatprep.subr.mxu0 %v356
        %598 = vmatpush1.msra.mxu0 %v355
        %599 = vmatprep.subr.mxu0 %v360
        %600 = vmatpush1.msra.mxu0 %v359
        %601 = vmatprep.subr.mxu0 %v364
        %602 = vmatpush1.msra.mxu0 %v363
        %603 = vmatprep.subr.mxu0 %v368
        %604 = vmatpush1.msra.mxu0 %v367
        %605 = vmatprep.subr.mxu0 %v372
        %606 = vmatpush1.msra.mxu0 %v371
        %607 = vmatprep.subr.mxu0 %v376
        %608 = vmatpush1.msra.mxu0 %v375
        %609 = vmatprep.subr.mxu0 %v380
        %610 = vmatpush1.msra.mxu0 %v379
        %611 = vmatprep.subr.mxu0 %v384
        %612 = vmatpush1.msra.mxu0 %v383
        %613 = vmatprep.mubr.f32.mxu0 %v255
        %614 = vmatmul.mubr.f32.gmra.mrb[0].mxu0 %v253
        %v615 = vpop.f32.mrb[0].mxu0
        %v616 = vadd.f32 0.0, %v615
        %v617 = vpop.f32.mrb[0].mxu0
        %v618 = vadd.f32 0.0, %v617
        %619 = vdwg.mxu0
        %620 = vmatprep.subr.mxu0 %v388
        %621 = vmatpush1.msra.mxu0 %v387
        %622 = vmatprep.subr.mxu0 %v392
        %623 = vmatpush1.msra.mxu0 %v391
        %624 = vmatprep.subr.mxu0 %v396
        %625 = vmatpush1.msra.mxu0 %v395
        %626 = vmatprep.subr.mxu0 %v400
        %627 = vmatpush1.msra.mxu0 %v399
        %628 = vmatprep.subr.mxu0 %v404
        %629 = vmatpush1.msra.mxu0 %v403
        %630 = vmatprep.subr.mxu0 %v408
        %631 = vmatpush1.msra.mxu0 %v407
        %632 = vmatprep.subr.mxu0 %v412
        %633 = vmatpush1.msra.mxu0 %v411
        %634 = vmatprep.subr.mxu0 %v416
        %635 = vmatpush1.msra.mxu0 %v415
        %636 = vmatprep.subr.mxu0 %v420
        %637 = vmatpush1.msra.mxu0 %v419
        %638 = vmatprep.subr.mxu0 %v424
        %639 = vmatpush1.msra.mxu0 %v423
        %640 = vmatprep.subr.mxu0 %v428
        %641 = vmatpush1.msra.mxu0 %v427
        %642 = vmatprep.subr.mxu0 %v432
        %643 = vmatpush1.msra.mxu0 %v431
        %644 = vmatprep.subr.mxu0 %v436
        %645 = vmatpush1.msra.mxu0 %v435
        %646 = vmatprep.subr.mxu0 %v440
        %647 = vmatpush1.msra.mxu0 %v439
        %648 = vmatprep.subr.mxu0 %v444
        %649 = vmatpush1.msra.mxu0 %v443
        %650 = vmatprep.subr.mxu0 %v448
        %651 = vmatpush1.msra.mxu0 %v447
        %652 = vmatprep.subr.mxu0 %v452
        %653 = vmatpush1.msra.mxu0 %v451
        %654 = vmatprep.subr.mxu0 %v456
        %655 = vmatpush1.msra.mxu0 %v455
        %656 = vmatprep.subr.mxu0 %v460
        %657 = vmatpush1.msra.mxu0 %v459
        %658 = vmatprep.subr.mxu0 %v464
        %659 = vmatpush1.msra.mxu0 %v463
        %660 = vmatprep.subr.mxu0 %v468
        %661 = vmatpush1.msra.mxu0 %v467
        %662 = vmatprep.subr.mxu0 %v472
        %663 = vmatpush1.msra.mxu0 %v471
        %664 = vmatprep.subr.mxu0 %v476
        %665 = vmatpush1.msra.mxu0 %v475
        %666 = vmatprep.subr.mxu0 %v480
        %667 = vmatpush1.msra.mxu0 %v479
        %668 = vmatprep.subr.mxu0 %v484
        %669 = vmatpush1.msra.mxu0 %v483
        %670 = vmatprep.subr.mxu0 %v488
        %671 = vmatpush1.msra.mxu0 %v487
        %672 = vmatprep.subr.mxu0 %v492
        %673 = vmatpush1.msra.mxu0 %v491
        %674 = vmatprep.subr.mxu0 %v496
        %675 = vmatpush1.msra.mxu0 %v495
        %676 = vmatprep.subr.mxu0 %v500
        %677 = vmatpush1.msra.mxu0 %v499
        %678 = vmatprep.subr.mxu0 %v504
        %679 = vmatpush1.msra.mxu0 %v503
        %680 = vmatprep.subr.mxu0 %v508
        %681 = vmatpush1.msra.mxu0 %v507
        %682 = vmatprep.subr.mxu0 %v512
        %683 = vmatpush1.msra.mxu0 %v511
        %684 = vmatprep.mubr.f32.mxu0 %v258
        %685 = vmatmul.mubr.f32.gmra.mrb[0].mxu0 %v257
        %v686 = vpop.f32.mrb[0].mxu0
        %v687 = vadd.f32 %v616, %v686
        %v688 = vpop.f32.mrb[0].mxu0
        %v689 = vadd.f32 %v618, %v688
        %690 = vdwg.mxu0
        %691 = vmatprep.subr.mxu0 %v516
        %692 = vmatpush1.msra.mxu0 %v515
        %693 = vmatprep.subr.mxu0 %v520
        %694 = vmatpush1.msra.mxu0 %v519
        %695 = vmatprep.subr.mxu0 %v524
        %696 = vmatpush1.msra.mxu0 %v523
        %697 = vmatprep.subr.mxu0 %v528
        %698 = vmatpush1.msra.mxu0 %v527
        %699 = vmatprep.subr.mxu0 %v532
        %700 = vmatpush1.msra.mxu0 %v531
        %701 = vmatprep.subr.mxu0 %v536
        %702 = vmatpush1.msra.mxu0 %v535
        %703 = vmatprep.subr.mxu0 %v540
        %704 = vmatpush1.msra.mxu0 %v539
        %705 = vmatprep.subr.mxu0 %v544
        %706 = vmatpush1.msra.mxu0 %v543
        %707 = vmatprep.subr.mxu0 0.0
        %708 = vmatpush1.msra.mxu0 0.0
        %709 = vmatprep.subr.mxu0 0.0
        %710 = vmatpush1.msra.mxu0 0.0
        %711 = vmatprep.subr.mxu0 0.0
        %712 = vmatpush1.msra.mxu0 0.0
        %713 = vmatprep.subr.mxu0 0.0
        %714 = vmatpush1.msra.mxu0 0.0
        %715 = vmatprep.subr.mxu0 0.0
        %716 = vmatpush1.msra.mxu0 0.0
        %717 = vmatprep.subr.mxu0 0.0
        %718 = vmatpush1.msra.mxu0 0.0
        %719 = vmatprep.subr.mxu0 0.0
        %720 = vmatpush1.msra.mxu0 0.0
        %721 = vmatprep.subr.mxu0 0.0
        %722 = vmatpush1.msra.mxu0 0.0
        %723 = vmatprep.subr.mxu0 0.0
        %724 = vmatpush1.msra.mxu0 0.0
        %725 = vmatprep.subr.mxu0 0.0
        %726 = vmatpush1.msra.mxu0 0.0
        %727 = vmatprep.subr.mxu0 0.0
        %728 = vmatpush1.msra.mxu0 0.0
        %729 = vmatprep.subr.mxu0 0.0
        %730 = vmatpush1.msra.mxu0 0.0
        %731 = vmatprep.subr.mxu0 0.0
        %732 = vmatpush1.msra.mxu0 0.0
        %733 = vmatprep.subr.mxu0 0.0
        %734 = vmatpush1.msra.mxu0 0.0
        %735 = vmatprep.subr.mxu0 0.0
        %736 = vmatpush1.msra.mxu0 0.0
        %737 = vmatprep.subr.mxu0 0.0
        %738 = vmatpush1.msra.mxu0 0.0
        %739 = vmatprep.subr.mxu0 0.0
        %740 = vmatpush1.msra.mxu0 0.0
        %741 = vmatprep.subr.mxu0 0.0
        %742 = vmatpush1.msra.mxu0 0.0
        %743 = vmatprep.subr.mxu0 0.0
        %744 = vmatpush1.msra.mxu0 0.0
        %745 = vmatprep.subr.mxu0 0.0
        %746 = vmatpush1.msra.mxu0 0.0
        %747 = vmatprep.subr.mxu0 0.0
        %748 = vmatpush1.msra.mxu0 0.0
        %749 = vmatprep.subr.mxu0 0.0
        %750 = vmatpush1.msra.mxu0 0.0
        %751 = vmatprep.subr.mxu0 0.0
        %752 = vmatpush1.msra.mxu0 0.0
        %753 = vmatprep.subr.mxu0 0.0
        %754 = vmatpush1.msra.mxu0 0.0
        %755 = vmatprep.mubr.f32.mxu0 0.0
        %756 = vmatmul.mubr.f32.gmra.mrb[0].mxu0 %v547
        %v757 = vpop.f32.mrb[0].mxu0
        %v758 = vadd.f32 %v687, %v757
        %v759 = vpop.f32.mrb[0].mxu0
        %v760 = vadd.f32 %v689, %v759
        %761 = vdwg.mxu0
        %762 = vmatprep.subr.mxu0 %v262
        %763 = vmatpush1.msra.mxu0 %v261
        %764 = vmatprep.subr.mxu0 %v266
        %765 = vmatpush1.msra.mxu0 %v265
        %766 = vmatprep.subr.mxu0 %v270
        %767 = vmatpush1.msra.mxu0 %v269
        %768 = vmatprep.subr.mxu0 %v274
        %769 = vmatpush1.msra.mxu0 %v273
        %770 = vmatprep.subr.mxu0 %v278
        %771 = vmatpush1.msra.mxu0 %v277
        %772 = vmatprep.subr.mxu0 %v282
        %773 = vmatpush1.msra.mxu0 %v281
        %774 = vmatprep.subr.mxu0 %v286
        %775 = vmatpush1.msra.mxu0 %v285
        %776 = vmatprep.subr.mxu0 %v290
        %777 = vmatpush1.msra.mxu0 %v289
        %778 = vmatprep.subr.mxu0 %v294
        %779 = vmatpush1.msra.mxu0 %v293
        %780 = vmatprep.subr.mxu0 %v298
        %781 = vmatpush1.msra.mxu0 %v297
        %782 = vmatprep.subr.mxu0 %v302
        %783 = vmatpush1.msra.mxu0 %v301
        %784 = vmatprep.subr.mxu0 %v306
        %785 = vmatpush1.msra.mxu0 %v305
        %786 = vmatprep.subr.mxu0 %v310
        %787 = vmatpush1.msra.mxu0 %v309
        %788 = vmatprep.subr.mxu0 %v314
        %789 = vmatpush1.msra.mxu0 %v313
        %790 = vmatprep.subr.mxu0 %v318
        %791 = vmatpush1.msra.mxu0 %v317
        %792 = vmatprep.subr.mxu0 %v322
        %793 = vmatpush1.msra.mxu0 %v321
        %794 = vmatprep.subr.mxu0 %v326
        %795 = vmatpush1.msra.mxu0 %v325
        %796 = vmatprep.subr.mxu0 %v330
        %797 = vmatpush1.msra.mxu0 %v329
        %798 = vmatprep.subr.mxu0 %v334
        %799 = vmatpush1.msra.mxu0 %v333
        %800 = vmatprep.subr.mxu0 %v338
        %801 = vmatpush1.msra.mxu0 %v337
        %802 = vmatprep.subr.mxu0 %v342
        %803 = vmatpush1.msra.mxu0 %v341
        %804 = vmatprep.subr.mxu0 %v346
        %805 = vmatpush1.msra.mxu0 %v345
        %806 = vmatprep.subr.mxu0 %v350
        %807 = vmatpush1.msra.mxu0 %v349
        %808 = vmatprep.subr.mxu0 %v354
        %809 = vmatpush1.msra.mxu0 %v353
        %810 = vmatprep.subr.mxu0 %v358
        %811 = vmatpush1.msra.mxu0 %v357
        %812 = vmatprep.subr.mxu0 %v362
        %813 = vmatpush1.msra.mxu0 %v361
        %814 = vmatprep.subr.mxu0 %v366
        %815 = vmatpush1.msra.mxu0 %v365
        %816 = vmatprep.subr.mxu0 %v370
        %817 = vmatpush1.msra.mxu0 %v369
        %818 = vmatprep.subr.mxu0 %v374
        %819 = vmatpush1.msra.mxu0 %v373
        %820 = vmatprep.subr.mxu0 %v378
        %821 = vmatpush1.msra.mxu0 %v377
        %822 = vmatprep.subr.mxu0 %v382
        %823 = vmatpush1.msra.mxu0 %v381
        %824 = vmatprep.subr.mxu0 %v386
        %825 = vmatpush1.msra.mxu0 %v385
        %826 = vmatprep.mubr.f32.mxu0 %v255
        %827 = vmatmul.mubr.f32.gmra.mrb[0].mxu0 %v253
        %v828 = vpop.f32.mrb[0].mxu0
        %v829 = vadd.f32 0.0, %v828
        %v830 = vpop.f32.mrb[0].mxu0
        %v831 = vadd.f32 0.0, %v830
        %832 = vdwg.mxu0
        %833 = vmatprep.subr.mxu0 %v390
        %834 = vmatpush1.msra.mxu0 %v389
        %835 = vmatprep.subr.mxu0 %v394
        %836 = vmatpush1.msra.mxu0 %v393
        %837 = vmatprep.subr.mxu0 %v398
        %838 = vmatpush1.msra.mxu0 %v397
        %839 = vmatprep.subr.mxu0 %v402
        %840 = vmatpush1.msra.mxu0 %v401
        %841 = vmatprep.subr.mxu0 %v406
        %842 = vmatpush1.msra.mxu0 %v405
        %843 = vmatprep.subr.mxu0 %v410
        %844 = vmatpush1.msra.mxu0 %v409
        %845 = vmatprep.subr.mxu0 %v414
        %846 = vmatpush1.msra.mxu0 %v413
        %847 = vmatprep.subr.mxu0 %v418
        %848 = vmatpush1.msra.mxu0 %v417
        %849 = vmatprep.subr.mxu0 %v422
        %850 = vmatpush1.msra.mxu0 %v421
        %851 = vmatprep.subr.mxu0 %v426
        %852 = vmatpush1.msra.mxu0 %v425
        %853 = vmatprep.subr.mxu0 %v430
        %854 = vmatpush1.msra.mxu0 %v429
        %855 = vmatprep.subr.mxu0 %v434
        %856 = vmatpush1.msra.mxu0 %v433
        %857 = vmatprep.subr.mxu0 %v438
        %858 = vmatpush1.msra.mxu0 %v437
        %859 = vmatprep.subr.mxu0 %v442
        %860 = vmatpush1.msra.mxu0 %v441
        %861 = vmatprep.subr.mxu0 %v446
        %862 = vmatpush1.msra.mxu0 %v445
        %863 = vmatprep.subr.mxu0 %v450
        %864 = vmatpush1.msra.mxu0 %v449
        %865 = vmatprep.subr.mxu0 %v454
        %866 = vmatpush1.msra.mxu0 %v453
        %867 = vmatprep.subr.mxu0 %v458
        %868 = vmatpush1.msra.mxu0 %v457
        %869 = vmatprep.subr.mxu0 %v462
        %870 = vmatpush1.msra.mxu0 %v461
        %871 = vmatprep.subr.mxu0 %v466
        %872 = vmatpush1.msra.mxu0 %v465
        %873 = vmatprep.subr.mxu0 %v470
        %874 = vmatpush1.msra.mxu0 %v469
        %875 = vmatprep.subr.mxu0 %v474
        %876 = vmatpush1.msra.mxu0 %v473
        %877 = vmatprep.subr.mxu0 %v478
        %878 = vmatpush1.msra.mxu0 %v477
        %879 = vmatprep.subr.mxu0 %v482
        %880 = vmatpush1.msra.mxu0 %v481
        %881 = vmatprep.subr.mxu0 %v486
        %882 = vmatpush1.msra.mxu0 %v485
        %883 = vmatprep.subr.mxu0 %v490
        %884 = vmatpush1.msra.mxu0 %v489
        %885 = vmatprep.subr.mxu0 %v494
        %886 = vmatpush1.msra.mxu0 %v493
        %887 = vmatprep.subr.mxu0 %v498
        %888 = vmatpush1.msra.mxu0 %v497
        %889 = vmatprep.subr.mxu0 %v502
        %890 = vmatpush1.msra.mxu0 %v501
        %891 = vmatprep.subr.mxu0 %v506
        %892 = vmatpush1.msra.mxu0 %v505
        %893 = vmatprep.subr.mxu0 %v510
        %894 = vmatpush1.msra.mxu0 %v509
        %895 = vmatprep.subr.mxu0 %v514
        %896 = vmatpush1.msra.mxu0 %v513
        %897 = vmatprep.mubr.f32.mxu0 %v258
        %898 = vmatmul.mubr.f32.gmra.mrb[0].mxu0 %v257
        %v899 = vpop.f32.mrb[0].mxu0
        %v900 = vadd.f32 %v829, %v899
        %v901 = vpop.f32.mrb[0].mxu0
        %v902 = vadd.f32 %v831, %v901
        %903 = vdwg.mxu0
        %904 = vmatprep.subr.mxu0 %v518
        %905 = vmatpush1.msra.mxu0 %v517
        %906 = vmatprep.subr.mxu0 %v522
        %907 = vmatpush1.msra.mxu0 %v521
        %908 = vmatprep.subr.mxu0 %v526
        %909 = vmatpush1.msra.mxu0 %v525
        %910 = vmatprep.subr.mxu0 %v530
        %911 = vmatpush1.msra.mxu0 %v529
        %912 = vmatprep.subr.mxu0 %v534
        %913 = vmatpush1.msra.mxu0 %v533
        %914 = vmatprep.subr.mxu0 %v538
        %915 = vmatpush1.msra.mxu0 %v537
        %916 = vmatprep.subr.mxu0 %v542
        %917 = vmatpush1.msra.mxu0 %v541
        %918 = vmatprep.subr.mxu0 %v546
        %919 = vmatpush1.msra.mxu0 %v545
        %920 = vmatprep.subr.mxu0 0.0
        %921 = vmatpush1.msra.mxu0 0.0
        %922 = vmatprep.subr.mxu0 0.0
        %923 = vmatpush1.msra.mxu0 0.0
        %924 = vmatprep.subr.mxu0 0.0
        %925 = vmatpush1.msra.mxu0 0.0
        %926 = vmatprep.subr.mxu0 0.0
        %927 = vmatpush1.msra.mxu0 0.0
        %928 = vmatprep.subr.mxu0 0.0
        %929 = vmatpush1.msra.mxu0 0.0
        %930 = vmatprep.subr.mxu0 0.0
        %931 = vmatpush1.msra.mxu0 0.0
        %932 = vmatprep.subr.mxu0 0.0
        %933 = vmatpush1.msra.mxu0 0.0
        %934 = vmatprep.subr.mxu0 0.0
        %935 = vmatpush1.msra.mxu0 0.0
        %936 = vmatprep.subr.mxu0 0.0
        %937 = vmatpush1.msra.mxu0 0.0
        %938 = vmatprep.subr.mxu0 0.0
        %939 = vmatpush1.msra.mxu0 0.0
        %940 = vmatprep.subr.mxu0 0.0
        %941 = vmatpush1.msra.mxu0 0.0
        %942 = vmatprep.subr.mxu0 0.0
        %943 = vmatpush1.msra.mxu0 0.0
        %944 = vmatprep.subr.mxu0 0.0
        %945 = vmatpush1.msra.mxu0 0.0
        %946 = vmatprep.subr.mxu0 0.0
        %947 = vmatpush1.msra.mxu0 0.0
        %948 = vmatprep.subr.mxu0 0.0
        %949 = vmatpush1.msra.mxu0 0.0
        %950 = vmatprep.subr.mxu0 0.0
        %951 = vmatpush1.msra.mxu0 0.0
        %952 = vmatprep.subr.mxu0 0.0
        %953 = vmatpush1.msra.mxu0 0.0
        %954 = vmatprep.subr.mxu0 0.0
        %955 = vmatpush1.msra.mxu0 0.0
        %956 = vmatprep.subr.mxu0 0.0
        %957 = vmatpush1.msra.mxu0 0.0
        %958 = vmatprep.subr.mxu0 0.0
        %959 = vmatpush1.msra.mxu0 0.0
        %960 = vmatprep.subr.mxu0 0.0
        %961 = vmatpush1.msra.mxu0 0.0
        %962 = vmatprep.subr.mxu0 0.0
        %963 = vmatpush1.msra.mxu0 0.0
        %964 = vmatprep.subr.mxu0 0.0
        %965 = vmatpush1.msra.mxu0 0.0
        %966 = vmatprep.subr.mxu0 0.0
        %967 = vmatpush1.msra.mxu0 0.0
        %968 = vmatprep.mubr.f32.mxu0 0.0
        %969 = vmatmul.mubr.f32.gmra.mrb[0].mxu0 %v547
        %v970 = vpop.f32.mrb[0].mxu0
        %v971 = vadd.f32 %v900, %v970
        %v972 = vpop.f32.mrb[0].mxu0
        %v973 = vadd.f32 %v902, %v972
        %974 = vdwg.mxu0
        %v975 = vmax.f32 %v758, %v760
        %v976 = vmax.f32 %v971, %v973
        %v977 = vmax.f32 %v975, %v976
        %v978 = vld [vmem:[#allocation4] sm:$0x1]
        %v980 = vlaneseq
        %v981 = vshrl.u32 %v980, 7
        %v982 = vsub.s32 0, %v981
        %v983 = vrot.slane %v978, %v982
        %v985 = vadd.f32 %v977, %v983
        %v986 = vmax.f32 %v985, 0.0
        %v987 = vpack.c.bf16 %v986, %v986
        %vm988 = vcmask 679936
        %989 = vst.msk [vmem:[%s211] sm:$0x1] %vm988, %v987
        %p990 = scmp.lt.s32.totalorder %s21, 13
        %s991 = scalar_select %p990, %s21, 13
        %p992 = scmp.lt.s32.totalorder %s20, 0
        %s993 = scalar_select %p992, %s20, 0
        %s994 = sadd.s32 %s993, %s991
        %s995 = scalar_lea.vmem %s3, %s994
        // Predicated region
        $region41: #{cnn_forward.2} parent=31 // pred_check
          %p996 = pneg %p116
        $region42: #{cnn_forward.2} parent=31 // pred_check_branch
          %998 = sbr.rel (%p996) target = $region44
        $region43: #{cnn_forward.2} parent=31 // pred_region
          _
        $region44: #{cnn_forward.2} parent=31 // pred_fallthru
          _
      $region32: #{cnn_forward.2} parent=5 // pred_fallthru
        _
      %p999 = scmp.le.s32.totalorder 2, %s11
      // Predicated region
      $region45: #{cnn_forward.2} parent=5 // pred_check
        %p1000 = pneg %p999
      $region46: #{cnn_forward.2} parent=5 // pred_check_branch
        %1002 = sbr.rel (%p1000) target = $region48
      $region47: #{cnn_forward.2} parent=5 // pred_region
        %s1003 = ssub.s32 %s11, 2
        // Predicated region
        $region49: #{cnn_forward.2} parent=47 // pred_check
          %p1004 = pneg %p122
        $region50: #{cnn_forward.2} parent=47 // pred_check_branch
          %1006 = sbr.rel (%p1004) target = $region52
        $region51: #{cnn_forward.2} parent=47 // pred_region
          %p1007 = scmp.lt.s32.totalorder %s23, 13
          %s1008 = scalar_select %p1007, %s23, 13
          %p1009 = scmp.lt.s32.totalorder %s22, 0
          %s1010 = scalar_select %p1009, %s22, 0
          %s1011 = sadd.s32 %s1010, %s1008
          %s1012 = scalar_lea.vmem %s3, %s1011
        $region52: #{cnn_forward.2} parent=47 // pred_fallthru
          _
      $region48: #{cnn_forward.2} parent=5 // pred_fallthru
        _
    $region6: #{cnn_forward.2} parent=1 // loop_footer
      %s15 = sadd.s32 1, %s11
    $region7: #{cnn_forward.2} parent=1 // loop_footer_branch
      %10 = sbr.rel target = $region3
    $region8: #{cnn_forward.2} parent=1 // loop_exit
      _
    %1013 = vsyncpa [#allocation3], 1
    %s1014 = scalar_lea.sflag [#allocation3], 1
    %1015 = vsyncpa %s1014, 1
    %1016 = vsyncpa [#allocation5], 1

// kernel: cnn_forward.3
$region0: #{cnn_forward.3}
  #allocation0 [shape = 'u32[]', space=smem, size = 0x4, offset = 0x4, fixed_abs, tag = 'smem constant byte address 0x4 - core index']
  #allocation1 [shape = 'u32[144,128]{1,0:T(1,128)}', space=vmem, size = 0x12000, scoped, tag = 'internal scratch']
  %s0 = inlined_call_operand.vmem [shape: bf16[14,2,84], index: 0, kind: input, shape index: {}]
  %s1 = inlined_call_operand.vmem [shape: f32[504,512], index: 1, kind: input, shape index: {}]
  %s2 = inlined_call_operand.vmem [shape: f32[1,128], index: 2, kind: input, shape index: {}]
  %s3 = inlined_call_operand.vmem [shape: f32[5,128,128], index: 3, kind: input, shape index: {}]
  %s4 = inlined_call_operand.vmem [shape: f32[1,128], index: 4, kind: input, shape index: {}]
  %s5 = inlined_call_operand.vmem [shape: f32[128,128], index: 5, kind: input, shape index: {}]
  %s6 = inlined_call_operand.vmem [shape: f32[1,128], index: 6, kind: input, shape index: {}]
  %s7 = inlined_call_operand.vmem [shape: f32[128,16], index: 7, kind: input, shape index: {}]
  %s8 = inlined_call_operand.vmem [shape: f32[1,16], index: 8, kind: input, shape index: {}]
  %s9 = inlined_call_operand.hbm [shape: f32[2,16], index: 9, kind: output, shape index: {}]
  %s10 = sld [smem:[#allocation0]]
  $region46: #{cnn_forward.3} parent=0
    _
  %s12 = ssub.s32 1, %s10
  %s13 = scalar_select 0, %s12, %s10
  $region1: #{cnn_forward.3} parent=0
    #allocation2 [shape = 'u8[1024]{0}', space=vmem, size = 0x400, scoped, tag = 'output window, operand 0, single buffered']
    #allocation3 [shape = 's32[1]{0}', space=sflag, size = 0x4, scoped, tag = 'scoped memory for cnn_forward.3']
    %14 = vsyncpa [#allocation3], 0
    // Predicated region
    $region2: #{cnn_forward.3} parent=1 // pred_check
      _
    $region3: #{cnn_forward.3} parent=1 // pred_check_branch
      %16 = sbr.rel (0) target = $region5
    $region4: #{cnn_forward.3} parent=1 // pred_region
      _
    $region5: #{cnn_forward.3} parent=1 // pred_fallthru
      _
    // Predicated region
    $region6: #{cnn_forward.3} parent=1 // pred_check
      _
    $region7: #{cnn_forward.3} parent=1 // pred_check_branch
      %18 = sbr.rel (0) target = $region9
    $region8: #{cnn_forward.3} parent=1 // pred_region
      _
    $region9: #{cnn_forward.3} parent=1 // pred_fallthru
      _
    // Predicated region
    $region10: #{cnn_forward.3} parent=1 // pred_check
      _
    $region11: #{cnn_forward.3} parent=1 // pred_check_branch
      %20 = sbr.rel (0) target = $region13
    $region12: #{cnn_forward.3} parent=1 // pred_region
      _
    $region13: #{cnn_forward.3} parent=1 // pred_fallthru
      _
    // Predicated region
    $region14: #{cnn_forward.3} parent=1 // pred_check
      _
    $region15: #{cnn_forward.3} parent=1 // pred_check_branch
      %22 = sbr.rel (0) target = $region17
    $region16: #{cnn_forward.3} parent=1 // pred_region
      _
    $region17: #{cnn_forward.3} parent=1 // pred_fallthru
      _
    // Predicated region
    $region18: #{cnn_forward.3} parent=1 // pred_check
      _
    $region19: #{cnn_forward.3} parent=1 // pred_check_branch
      %24 = sbr.rel (0) target = $region21
    $region20: #{cnn_forward.3} parent=1 // pred_region
      _
    $region21: #{cnn_forward.3} parent=1 // pred_fallthru
      _
    // Predicated region
    $region22: #{cnn_forward.3} parent=1 // pred_check
      _
    $region23: #{cnn_forward.3} parent=1 // pred_check_branch
      %26 = sbr.rel (0) target = $region25
    $region24: #{cnn_forward.3} parent=1 // pred_region
      _
    $region25: #{cnn_forward.3} parent=1 // pred_fallthru
      _
    // Predicated region
    $region26: #{cnn_forward.3} parent=1 // pred_check
      _
    $region27: #{cnn_forward.3} parent=1 // pred_check_branch
      %28 = sbr.rel (0) target = $region29
    $region28: #{cnn_forward.3} parent=1 // pred_region
      _
    $region29: #{cnn_forward.3} parent=1 // pred_fallthru
      _
    // Predicated region
    $region30: #{cnn_forward.3} parent=1 // pred_check
      _
    $region31: #{cnn_forward.3} parent=1 // pred_check_branch
      %30 = sbr.rel (0) target = $region33
    $region32: #{cnn_forward.3} parent=1 // pred_region
      _
    $region33: #{cnn_forward.3} parent=1 // pred_fallthru
      _
    // Predicated region
    $region34: #{cnn_forward.3} parent=1 // pred_check
      _
    $region35: #{cnn_forward.3} parent=1 // pred_check_branch
      %32 = sbr.rel (0) target = $region37
    $region36: #{cnn_forward.3} parent=1 // pred_region
      _
    $region37: #{cnn_forward.3} parent=1 // pred_fallthru
      _
    %v33 = vld [vmem:[%s4] sm:$0x1]
    %v34 = vld [vmem:[%s0] sm:$0x1]
    %v35 = vunpack.c.l.bf16 %v34
    %s36 = scalar_lea.vmem %s0, 1
    %v37 = vld [vmem:[%s36] sm:$0x1]
    %v38 = vunpack.c.l.bf16 %v37
    %s39 = scalar_lea.vmem %s0, 2
    %v40 = vld [vmem:[%s39] sm:$0x1]
    %v41 = vunpack.c.l.bf16 %v40
    %s42 = scalar_lea.vmem %s0, 3
    %v43 = vld [vmem:[%s42] sm:$0x1]
    %v44 = vunpack.c.l.bf16 %v43
    %s45 = scalar_lea.vmem %s0, 4
    %v46 = vld [vmem:[%s45] sm:$0x1]
    %v47 = vunpack.c.l.bf16 %v46
    %s48 = scalar_lea.vmem %s0, 5
    %v49 = vld [vmem:[%s48] sm:$0x1]
    %v50 = vunpack.c.l.bf16 %v49
    %v53 = vunpack.c.l.s4 1983009808
    %v54 = vunpack.c.0.s8 %v53
    %v55 = vlaneseq
    %v56 = vshrl.u32 %v55, 7
    %v57 = vsub.s32 %v54, %v56
    %v58 = vrot.slane %v38, %v57
    %59 = vrot.lane.b32.xlu0 %v58, 84
    %v60 = vpop.permute.xlu0 %59
    %v64 = vunpack.c.l.s4 1983009808
    %v65 = vunpack.c.0.s8 %v64
    %v66 = vlaneseq
    %v67 = vshrl.u32 %v66, 7
    %v68 = vsub.s32 %v65, %v67
    %v69 = vrot.slane %v41, %v68
    %70 = vrot.lane.b32.xlu0 %v69, 40
    %v71 = vpop.permute.xlu0 %70
    %v75 = vunpack.c.l.s4 1983009808
    %v76 = vunpack.c.0.s8 %v75
    %v77 = vlaneseq
    %v78 = vshrl.u32 %v77, 7
    %v79 = vsub.s32 %v76, %v78
    %v80 = vrot.slane %v44, %v79
    %81 = vrot.lane.b32.xlu0 %v80, 124
    %v82 = vpop.permute.xlu0 %81
    %v86 = vunpack.c.l.s4 1983009808
    %v87 = vunpack.c.0.s8 %v86
    %v88 = vlaneseq
    %v89 = vshrl.u32 %v88, 7
    %v90 = vsub.s32 %v87, %v89
    %v91 = vrot.slane %v47, %v90
    %92 = vrot.lane.b32.xlu0 %v91, 80
    %v93 = vpop.permute.xlu0 %92
    %v97 = vunpack.c.l.s4 1983009808
    %v98 = vunpack.c.0.s8 %v97
    %v99 = vlaneseq
    %v100 = vshrl.u32 %v99, 7
    %v101 = vsub.s32 %v98, %v100
    %v102 = vrot.slane %v50, %v101
    %103 = vrot.lane.b32.xlu0 %v102, 36
    %v104 = vpop.permute.xlu0 %103
    %vm106 = vcmask 687104
    %v107 = vsel %vm106, %v35, %v60
    %vm108 = vcmask 326656
    %v109 = vsel %vm108, %v60, %v71
    %vm110 = vcmask 1014784
    %v111 = vsel %vm110, %v109, %v82
    %vm112 = vcmask 654336
    %v113 = vsel %vm112, %v82, %v93
    %vm114 = vcmask 293888
    %v115 = vsel %vm114, %v93, %v104
    %v116 = vld [vmem:[%s1] sm:$0xff]
    %v117 = vld [vmem:[%s1 + $0x8] sm:$0xff]
    %v118 = vld [vmem:[%s1 + $0x10] sm:$0xff]
    %v119 = vld [vmem:[%s1 + $0x18] sm:$0xff]
    %v120 = vld [vmem:[%s1 + $0x20] sm:$0xff]
    %v121 = vld [vmem:[%s1 + $0x28] sm:$0xff]
    %v122 = vld [vmem:[%s1 + $0x30] sm:$0xff]
    %v123 = vld [vmem:[%s1 + $0x38] sm:$0xff]
    %v124 = vld [vmem:[%s1 + $0x40] sm:$0xff]
    %v125 = vld [vmem:[%s1 + $0x48] sm:$0xff]
    %v126 = vld [vmem:[%s1 + $0x50] sm:$0xff]
    %v127 = vld [vmem:[%s1 + $0x58] sm:$0xff]
    %v128 = vld [vmem:[%s1 + $0x60] sm:$0xff]
    %v129 = vld [vmem:[%s1 + $0x68] sm:$0xff]
    %v130 = vld [vmem:[%s1 + $0x70] sm:$0xff]
    %v131 = vld [vmem:[%s1 + $0x78] sm:$0xff]
    %v132 = vld [vmem:[%s1 + $0x80] sm:$0xff]
    %v133 = vld [vmem:[%s1 + $0x88] sm:$0xff]
    %v134 = vld [vmem:[%s1 + $0x90] sm:$0xff]
    %v135 = vld [vmem:[%s1 + $0x98] sm:$0xff]
    %v136 = vld [vmem:[%s1 + $0xa0] sm:$0xff]
    %v137 = vld [vmem:[%s1 + $0xa8] sm:$0xff]
    %v138 = vld [vmem:[%s1 + $0xb0] sm:$0xff]
    %v139 = vld [vmem:[%s1 + $0xb8] sm:$0xff]
    %v140 = vld [vmem:[%s1 + $0xc0] sm:$0xff]
    %v141 = vld [vmem:[%s1 + $0xc8] sm:$0xff]
    %v142 = vld [vmem:[%s1 + $0xd0] sm:$0xff]
    %v143 = vld [vmem:[%s1 + $0xd8] sm:$0xff]
    %v144 = vld [vmem:[%s1 + $0xe0] sm:$0xff]
    %v145 = vld [vmem:[%s1 + $0xe8] sm:$0xff]
    %v146 = vld [vmem:[%s1 + $0xf0] sm:$0xff]
    %v147 = vld [vmem:[%s1 + $0xf8] sm:$0xff]
    %v148 = vld [vmem:[%s1 + $0x100] sm:$0xff]
    %v149 = vld [vmem:[%s1 + $0x108] sm:$0xff]
    %v150 = vld [vmem:[%s1 + $0x110] sm:$0xff]
    %v151 = vld [vmem:[%s1 + $0x118] sm:$0xff]
    %v152 = vld [vmem:[%s1 + $0x120] sm:$0xff]
    %v153 = vld [vmem:[%s1 + $0x128] sm:$0xff]
    %v154 = vld [vmem:[%s1 + $0x130] sm:$0xff]
    %v155 = vld [vmem:[%s1 + $0x138] sm:$0xff]
    %v156 = vld [vmem:[%s1 + $0x140] sm:$0xff]
    %v157 = vld [vmem:[%s1 + $0x148] sm:$0xff]
    %v158 = vld [vmem:[%s1 + $0x150] sm:$0xff]
    %v159 = vld [vmem:[%s1 + $0x158] sm:$0xff]
    %v160 = vld [vmem:[%s1 + $0x160] sm:$0xff]
    %v161 = vld [vmem:[%s1 + $0x168] sm:$0xff]
    %v162 = vld [vmem:[%s1 + $0x170] sm:$0xff]
    %v163 = vld [vmem:[%s1 + $0x178] sm:$0xff]
    %v164 = vld [vmem:[%s1 + $0x180] sm:$0xff]
    %v165 = vld [vmem:[%s1 + $0x188] sm:$0xff]
    %v166 = vld [vmem:[%s1 + $0x190] sm:$0xff]
    %v167 = vld [vmem:[%s1 + $0x198] sm:$0xff]
    %v168 = vld [vmem:[%s1 + $0x1a0] sm:$0xff]
    %v169 = vld [vmem:[%s1 + $0x1a8] sm:$0xff]
    %v170 = vld [vmem:[%s1 + $0x1b0] sm:$0xff]
    %v171 = vld [vmem:[%s1 + $0x1b8] sm:$0xff]
    %v172 = vld [vmem:[%s1 + $0x1c0] sm:$0xff]
    %v173 = vld [vmem:[%s1 + $0x1c8] sm:$0xff]
    %v174 = vld [vmem:[%s1 + $0x1d0] sm:$0xff]
    %v175 = vld [vmem:[%s1 + $0x1d8] sm:$0xff]
    %v176 = vld [vmem:[%s1 + $0x1e0] sm:$0xff]
    %v177 = vld [vmem:[%s1 + $0x1e8] sm:$0xff]
    %v178 = vld [vmem:[%s1 + $0x1f0] sm:$0xff]
    %v179 = vld [vmem:[%s1 + $0x1f8] sm:$0xff]
    %v180 = vld [vmem:[%s1 + $0x200] sm:$0xff]
    %v181 = vld [vmem:[%s1 + $0x208] sm:$0xff]
    %v182 = vld [vmem:[%s1 + $0x210] sm:$0xff]
    %v183 = vld [vmem:[%s1 + $0x218] sm:$0xff]
    %v184 = vld [vmem:[%s1 + $0x220] sm:$0xff]
    %v185 = vld [vmem:[%s1 + $0x228] sm:$0xff]
    %v186 = vld [vmem:[%s1 + $0x230] sm:$0xff]
    %v187 = vld [vmem:[%s1 + $0x238] sm:$0xff]
    %v188 = vld [vmem:[%s1 + $0x240] sm:$0xff]
    %v189 = vld [vmem:[%s1 + $0x248] sm:$0xff]
    %v190 = vld [vmem:[%s1 + $0x250] sm:$0xff]
    %v191 = vld [vmem:[%s1 + $0x258] sm:$0xff]
    %v192 = vld [vmem:[%s1 + $0x260] sm:$0xff]
    %v193 = vld [vmem:[%s1 + $0x268] sm:$0xff]
    %v194 = vld [vmem:[%s1 + $0x270] sm:$0xff]
    %v195 = vld [vmem:[%s1 + $0x278] sm:$0xff]
    %v196 = vld [vmem:[%s1 + $0x280] sm:$0xff]
    %v197 = vld [vmem:[%s1 + $0x288] sm:$0xff]
    %v198 = vld [vmem:[%s1 + $0x290] sm:$0xff]
    %v199 = vld [vmem:[%s1 + $0x298] sm:$0xff]
    %v200 = vld [vmem:[%s1 + $0x2a0] sm:$0xff]
    %v201 = vld [vmem:[%s1 + $0x2a8] sm:$0xff]
    %v202 = vld [vmem:[%s1 + $0x2b0] sm:$0xff]
    %v203 = vld [vmem:[%s1 + $0x2b8] sm:$0xff]
    %v204 = vld [vmem:[%s1 + $0x2c0] sm:$0xff]
    %v205 = vld [vmem:[%s1 + $0x2c8] sm:$0xff]
    %v206 = vld [vmem:[%s1 + $0x2d0] sm:$0xff]
    %v207 = vld [vmem:[%s1 + $0x2d8] sm:$0xff]
    %v208 = vld [vmem:[%s1 + $0x2e0] sm:$0xff]
    %v209 = vld [vmem:[%s1 + $0x2e8] sm:$0xff]
    %v210 = vld [vmem:[%s1 + $0x2f0] sm:$0xff]
    %v211 = vld [vmem:[%s1 + $0x2f8] sm:$0xff]
    %v212 = vld [vmem:[%s1 + $0x300] sm:$0xff]
    %v213 = vld [vmem:[%s1 + $0x308] sm:$0xff]
    %v214 = vld [vmem:[%s1 + $0x310] sm:$0xff]
    %v215 = vld [vmem:[%s1 + $0x318] sm:$0xff]
    %v216 = vld [vmem:[%s1 + $0x320] sm:$0xff]
    %v217 = vld [vmem:[%s1 + $0x328] sm:$0xff]
    %v218 = vld [vmem:[%s1 + $0x330] sm:$0xff]
    %v219 = vld [vmem:[%s1 + $0x338] sm:$0xff]
    %v220 = vld [vmem:[%s1 + $0x340] sm:$0xff]
    %v221 = vld [vmem:[%s1 + $0x348] sm:$0xff]
    %v222 = vld [vmem:[%s1 + $0x350] sm:$0xff]
    %v223 = vld [vmem:[%s1 + $0x358] sm:$0xff]
    %v224 = vld [vmem:[%s1 + $0x360] sm:$0xff]
    %v225 = vld [vmem:[%s1 + $0x368] sm:$0xff]
    %v226 = vld [vmem:[%s1 + $0x370] sm:$0xff]
    %v227 = vld [vmem:[%s1 + $0x378] sm:$0xff]
    %v228 = vld [vmem:[%s1 + $0x380] sm:$0xff]
    %v229 = vld [vmem:[%s1 + $0x388] sm:$0xff]
    %v230 = vld [vmem:[%s1 + $0x390] sm:$0xff]
    %v231 = vld [vmem:[%s1 + $0x398] sm:$0xff]
    %v232 = vld [vmem:[%s1 + $0x3a0] sm:$0xff]
    %v233 = vld [vmem:[%s1 + $0x3a8] sm:$0xff]
    %v234 = vld [vmem:[%s1 + $0x3b0] sm:$0xff]
    %v235 = vld [vmem:[%s1 + $0x3b8] sm:$0xff]
    %v236 = vld [vmem:[%s1 + $0x3c0] sm:$0xff]
    %v237 = vld [vmem:[%s1 + $0x3c8] sm:$0xff]
    %v238 = vld [vmem:[%s1 + $0x3d0] sm:$0xff]
    %v239 = vld [vmem:[%s1 + $0x3d8] sm:$0xff]
    %v240 = vld [vmem:[%s1 + $0x3e0] sm:$0xff]
    %v241 = vld [vmem:[%s1 + $0x3e8] sm:$0xff]
    %v242 = vld [vmem:[%s1 + $0x3f0] sm:$0xff]
    %v243 = vld [vmem:[%s1 + $0x3f8] sm:$0xff]
    %v244 = vld [vmem:[%s1 + $0x400] sm:$0xff]
    %v245 = vld [vmem:[%s1 + $0x408] sm:$0xff]
    %v246 = vld [vmem:[%s1 + $0x410] sm:$0xff]
    %v247 = vld [vmem:[%s1 + $0x418] sm:$0xff]
    %v248 = vld [vmem:[%s1 + $0x420] sm:$0xff]
    %v249 = vld [vmem:[%s1 + $0x428] sm:$0xff]
    %v250 = vld [vmem:[%s1 + $0x430] sm:$0xff]
    %v251 = vld [vmem:[%s1 + $0x438] sm:$0xff]
    %v252 = vld [vmem:[%s1 + $0x440] sm:$0xff]
    %v253 = vld [vmem:[%s1 + $0x448] sm:$0xff]
    %v254 = vld [vmem:[%s1 + $0x450] sm:$0xff]
    %v255 = vld [vmem:[%s1 + $0x458] sm:$0xff]
    %v256 = vld [vmem:[%s1 + $0x460] sm:$0xff]
    %v257 = vld [vmem:[%s1 + $0x468] sm:$0xff]
    %v258 = vld [vmem:[%s1 + $0x470] sm:$0xff]
    %v259 = vld [vmem:[%s1 + $0x478] sm:$0xff]
    %v260 = vld [vmem:[%s1 + $0x480] sm:$0xff]
    %v261 = vld [vmem:[%s1 + $0x488] sm:$0xff]
    %v262 = vld [vmem:[%s1 + $0x490] sm:$0xff]
    %v263 = vld [vmem:[%s1 + $0x498] sm:$0xff]
    %v264 = vld [vmem:[%s1 + $0x4a0] sm:$0xff]
    %v265 = vld [vmem:[%s1 + $0x4a8] sm:$0xff]
    %v266 = vld [vmem:[%s1 + $0x4b0] sm:$0xff]
    %v267 = vld [vmem:[%s1 + $0x4b8] sm:$0xff]
    %v268 = vld [vmem:[%s1 + $0x4c0] sm:$0xff]
    %v269 = vld [vmem:[%s1 + $0x4c8] sm:$0xff]
    %v270 = vld [vmem:[%s1 + $0x4d0] sm:$0xff]
    %v271 = vld [vmem:[%s1 + $0x4d8] sm:$0xff]
    %v272 = vld [vmem:[%s1 + $0x4e0] sm:$0xff]
    %v273 = vld [vmem:[%s1 + $0x4e8] sm:$0xff]
    %v274 = vld [vmem:[%s1 + $0x4f0] sm:$0xff]
    %v275 = vld [vmem:[%s1 + $0x4f8] sm:$0xff]
    %v276 = vld [vmem:[%s1 + $0x500] sm:$0xff]
    %v277 = vld [vmem:[%s1 + $0x508] sm:$0xff]
    %v278 = vld [vmem:[%s1 + $0x510] sm:$0xff]
    %v279 = vld [vmem:[%s1 + $0x518] sm:$0xff]
    %v280 = vld [vmem:[%s1 + $0x520] sm:$0xff]
    %v281 = vld [vmem:[%s1 + $0x528] sm:$0xff]
    %v282 = vld [vmem:[%s1 + $0x530] sm:$0xff]
    %v283 = vld [vmem:[%s1 + $0x538] sm:$0xff]
    %v284 = vld [vmem:[%s1 + $0x540] sm:$0xff]
    %v285 = vld [vmem:[%s1 + $0x548] sm:$0xff]
    %v286 = vld [vmem:[%s1 + $0x550] sm:$0xff]
    %v287 = vld [vmem:[%s1 + $0x558] sm:$0xff]
    %v288 = vld [vmem:[%s1 + $0x560] sm:$0xff]
    %v289 = vld [vmem:[%s1 + $0x568] sm:$0xff]
    %v290 = vld [vmem:[%s1 + $0x570] sm:$0xff]
    %v291 = vld [vmem:[%s1 + $0x578] sm:$0xff]
    %v292 = vld [vmem:[%s1 + $0x580] sm:$0xff]
    %v293 = vld [vmem:[%s1 + $0x588] sm:$0xff]
    %v294 = vld [vmem:[%s1 + $0x590] sm:$0xff]
    %v295 = vld [vmem:[%s1 + $0x598] sm:$0xff]
    %v296 = vld [vmem:[%s1 + $0x5a0] sm:$0xff]
    %v297 = vld [vmem:[%s1 + $0x5a8] sm:$0xff]
    %v298 = vld [vmem:[%s1 + $0x5b0] sm:$0xff]
    %v299 = vld [vmem:[%s1 + $0x5b8] sm:$0xff]
    %v300 = vld [vmem:[%s1 + $0x5c0] sm:$0xff]
    %v301 = vld [vmem:[%s1 + $0x5c8] sm:$0xff]
    %v302 = vld [vmem:[%s1 + $0x5d0] sm:$0xff]
    %v303 = vld [vmem:[%s1 + $0x5d8] sm:$0xff]
    %v304 = vld [vmem:[%s1 + $0x5e0] sm:$0xff]
    %v305 = vld [vmem:[%s1 + $0x5e8] sm:$0xff]
    %v306 = vld [vmem:[%s1 + $0x5f0] sm:$0xff]
    %v307 = vld [vmem:[%s1 + $0x5f8] sm:$0xff]
    %v308 = vld [vmem:[%s1 + $0x600] sm:$0xff]
    %v309 = vld [vmem:[%s1 + $0x608] sm:$0xff]
    %v310 = vld [vmem:[%s1 + $0x610] sm:$0xff]
    %v311 = vld [vmem:[%s1 + $0x618] sm:$0xff]
    %v312 = vld [vmem:[%s1 + $0x620] sm:$0xff]
    %v313 = vld [vmem:[%s1 + $0x628] sm:$0xff]
    %v314 = vld [vmem:[%s1 + $0x630] sm:$0xff]
    %v315 = vld [vmem:[%s1 + $0x638] sm:$0xff]
    %v316 = vld [vmem:[%s1 + $0x640] sm:$0xff]
    %v317 = vld [vmem:[%s1 + $0x648] sm:$0xff]
    %v318 = vld [vmem:[%s1 + $0x650] sm:$0xff]
    %v319 = vld [vmem:[%s1 + $0x658] sm:$0xff]
    %v320 = vld [vmem:[%s1 + $0x660] sm:$0xff]
    %v321 = vld [vmem:[%s1 + $0x668] sm:$0xff]
    %v322 = vld [vmem:[%s1 + $0x670] sm:$0xff]
    %v323 = vld [vmem:[%s1 + $0x678] sm:$0xff]
    %v324 = vld [vmem:[%s1 + $0x680] sm:$0xff]
    %v325 = vld [vmem:[%s1 + $0x688] sm:$0xff]
    %v326 = vld [vmem:[%s1 + $0x690] sm:$0xff]
    %v327 = vld [vmem:[%s1 + $0x698] sm:$0xff]
    %v328 = vld [vmem:[%s1 + $0x6a0] sm:$0xff]
    %v329 = vld [vmem:[%s1 + $0x6a8] sm:$0xff]
    %v330 = vld [vmem:[%s1 + $0x6b0] sm:$0xff]
    %v331 = vld [vmem:[%s1 + $0x6b8] sm:$0xff]
    %v332 = vld [vmem:[%s1 + $0x6c0] sm:$0xff]
    %v333 = vld [vmem:[%s1 + $0x6c8] sm:$0xff]
    %v334 = vld [vmem:[%s1 + $0x6d0] sm:$0xff]
    %v335 = vld [vmem:[%s1 + $0x6d8] sm:$0xff]
    %v336 = vld [vmem:[%s1 + $0x6e0] sm:$0xff]
    %v337 = vld [vmem:[%s1 + $0x6e8] sm:$0xff]
    %v338 = vld [vmem:[%s1 + $0x6f0] sm:$0xff]
    %v339 = vld [vmem:[%s1 + $0x6f8] sm:$0xff]
    %v340 = vld [vmem:[%s1 + $0x700] sm:$0xff]
    %v341 = vld [vmem:[%s1 + $0x708] sm:$0xff]
    %v342 = vld [vmem:[%s1 + $0x710] sm:$0xff]
    %v343 = vld [vmem:[%s1 + $0x718] sm:$0xff]
    %v344 = vld [vmem:[%s1 + $0x720] sm:$0xff]
    %v345 = vld [vmem:[%s1 + $0x728] sm:$0xff]
    %v346 = vld [vmem:[%s1 + $0x730] sm:$0xff]
    %v347 = vld [vmem:[%s1 + $0x738] sm:$0xff]
    %v348 = vld [vmem:[%s1 + $0x740] sm:$0xff]
    %v349 = vld [vmem:[%s1 + $0x748] sm:$0xff]
    %v350 = vld [vmem:[%s1 + $0x750] sm:$0xff]
    %v351 = vld [vmem:[%s1 + $0x758] sm:$0xff]
    %v352 = vld [vmem:[%s1 + $0x760] sm:$0xff]
    %v353 = vld [vmem:[%s1 + $0x768] sm:$0xff]
    %v354 = vld [vmem:[%s1 + $0x770] sm:$0xff]
    %v355 = vld [vmem:[%s1 + $0x778] sm:$0xff]
    %v356 = vld [vmem:[%s1 + $0x780] sm:$0xff]
    %v357 = vld [vmem:[%s1 + $0x788] sm:$0xff]
    %v358 = vld [vmem:[%s1 + $0x790] sm:$0xff]
    %v359 = vld [vmem:[%s1 + $0x798] sm:$0xff]
    %v360 = vld [vmem:[%s1 + $0x7a0] sm:$0xff]
    %v361 = vld [vmem:[%s1 + $0x7a8] sm:$0xff]
    %v362 = vld [vmem:[%s1 + $0x7b0] sm:$0xff]
    %v363 = vld [vmem:[%s1 + $0x7b8] sm:$0xff]
    %v364 = vld [vmem:[%s1 + $0x7c0] sm:$0xff]
    %v365 = vld [vmem:[%s1 + $0x7c8] sm:$0xff]
    %v366 = vld [vmem:[%s1 + $0x7d0] sm:$0xff]
    %v367 = vld [vmem:[%s1 + $0x7d8] sm:$0xff]
    %vm368 = vcmask 982016
    %v370 = vsel %vm368, %v115, 0
    %372 = vmatprep.subr.mxu0 %v117
    %373 = vmatpush1.msra.mxu0 %v116
    %374 = vmatprep.subr.mxu0 %v121
    %375 = vmatpush1.msra.mxu0 %v120
    %376 = vmatprep.subr.mxu0 %v125
    %377 = vmatpush1.msra.mxu0 %v124
    %378 = vmatprep.subr.mxu0 %v129
    %379 = vmatpush1.msra.mxu0 %v128
    %380 = vmatprep.subr.mxu0 %v133
    %381 = vmatpush1.msra.mxu0 %v132
    %382 = vmatprep.subr.mxu0 %v137
    %383 = vmatpush1.msra.mxu0 %v136
    %384 = vmatprep.subr.mxu0 %v141
    %385 = vmatpush1.msra.mxu0 %v140
    %386 = vmatprep.subr.mxu0 %v145
    %387 = vmatpush1.msra.mxu0 %v144
    %388 = vmatprep.subr.mxu0 %v149
    %389 = vmatpush1.msra.mxu0 %v148
    %390 = vmatprep.subr.mxu0 %v153
    %391 = vmatpush1.msra.mxu0 %v152
    %392 = vmatprep.subr.mxu0 %v157
    %393 = vmatpush1.msra.mxu0 %v156
    %394 = vmatprep.subr.mxu0 %v161
    %395 = vmatpush1.msra.mxu0 %v160
    %396 = vmatprep.subr.mxu0 %v165
    %397 = vmatpush1.msra.mxu0 %v164
    %398 = vmatprep.subr.mxu0 %v169
    %399 = vmatpush1.msra.mxu0 %v168
    %400 = vmatprep.subr.mxu0 %v173
    %401 = vmatpush1.msra.mxu0 %v172
    %402 = vmatprep.subr.mxu0 %v177
    %403 = vmatpush1.msra.mxu0 %v176
    %404 = vmatprep.subr.mxu0 %v181
    %405 = vmatpush1.msra.mxu0 %v180
    %406 = vmatprep.subr.mxu0 %v185
    %407 = vmatpush1.msra.mxu0 %v184
    %408 = vmatprep.subr.mxu0 %v189
    %409 = vmatpush1.msra.mxu0 %v188
    %410 = vmatprep.subr.mxu0 %v193
    %411 = vmatpush1.msra.mxu0 %v192
    %412 = vmatprep.subr.mxu0 %v197
    %413 = vmatpush1.msra.mxu0 %v196
    %414 = vmatprep.subr.mxu0 %v201
    %415 = vmatpush1.msra.mxu0 %v200
    %416 = vmatprep.subr.mxu0 %v205
    %417 = vmatpush1.msra.mxu0 %v204
    %418 = vmatprep.subr.mxu0 %v209
    %419 = vmatpush1.msra.mxu0 %v208
    %420 = vmatprep.subr.mxu0 %v213
    %421 = vmatpush1.msra.mxu0 %v212
    %422 = vmatprep.subr.mxu0 %v217
    %423 = vmatpush1.msra.mxu0 %v216
    %424 = vmatprep.subr.mxu0 %v221
    %425 = vmatpush1.msra.mxu0 %v220
    %426 = vmatprep.subr.mxu0 %v225
    %427 = vmatpush1.msra.mxu0 %v224
    %428 = vmatprep.subr.mxu0 %v229
    %429 = vmatpush1.msra.mxu0 %v228
    %430 = vmatprep.subr.mxu0 %v233
    %431 = vmatpush1.msra.mxu0 %v232
    %432 = vmatprep.subr.mxu0 %v237
    %433 = vmatpush1.msra.mxu0 %v236
    %434 = vmatprep.subr.mxu0 %v241
    %435 = vmatpush1.msra.mxu0 %v240
    %436 = vmatprep.mubr.f32.mxu0 %v111
    %437 = vmatmul.mubr.f32.gmra.mrb[0].mxu0 %v107
    %v438 = vpop.f32.mrb[0].mxu0
    %v439 = vadd.f32 0.0, %v438
    %v440 = vpop.f32.mrb[0].mxu0
    %v441 = vadd.f32 0.0, %v440
    %442 = vdwg.mxu0
    %443 = vmatprep.subr.mxu0 %v245
    %444 = vmatpush1.msra.mxu0 %v244
    %445 = vmatprep.subr.mxu0 %v249
    %446 = vmatpush1.msra.mxu0 %v248
    %447 = vmatprep.subr.mxu0 %v253
    %448 = vmatpush1.msra.mxu0 %v252
    %449 = vmatprep.subr.mxu0 %v257
    %450 = vmatpush1.msra.mxu0 %v256
    %451 = vmatprep.subr.mxu0 %v261
    %452 = vmatpush1.msra.mxu0 %v260
    %453 = vmatprep.subr.mxu0 %v265
    %454 = vmatpush1.msra.mxu0 %v264
    %455 = vmatprep.subr.mxu0 %v269
    %456 = vmatpush1.msra.mxu0 %v268
    %457 = vmatprep.subr.mxu0 %v273
    %458 = vmatpush1.msra.mxu0 %v272
    %459 = vmatprep.subr.mxu0 %v277
    %460 = vmatpush1.msra.mxu0 %v276
    %461 = vmatprep.subr.mxu0 %v281
    %462 = vmatpush1.msra.mxu0 %v280
    %463 = vmatprep.subr.mxu0 %v285
    %464 = vmatpush1.msra.mxu0 %v284
    %465 = vmatprep.subr.mxu0 %v289
    %466 = vmatpush1.msra.mxu0 %v288
    %467 = vmatprep.subr.mxu0 %v293
    %468 = vmatpush1.msra.mxu0 %v292
    %469 = vmatprep.subr.mxu0 %v297
    %470 = vmatpush1.msra.mxu0 %v296
    %471 = vmatprep.subr.mxu0 %v301
    %472 = vmatpush1.msra.mxu0 %v300
    %473 = vmatprep.subr.mxu0 %v305
    %474 = vmatpush1.msra.mxu0 %v304
    %475 = vmatprep.subr.mxu0 %v309
    %476 = vmatpush1.msra.mxu0 %v308
    %477 = vmatprep.subr.mxu0 %v313
    %478 = vmatpush1.msra.mxu0 %v312
    %479 = vmatprep.subr.mxu0 %v317
    %480 = vmatpush1.msra.mxu0 %v316
    %481 = vmatprep.subr.mxu0 %v321
    %482 = vmatpush1.msra.mxu0 %v320
    %483 = vmatprep.subr.mxu0 %v325
    %484 = vmatpush1.msra.mxu0 %v324
    %485 = vmatprep.subr.mxu0 %v329
    %486 = vmatpush1.msra.mxu0 %v328
    %487 = vmatprep.subr.mxu0 %v333
    %488 = vmatpush1.msra.mxu0 %v332
    %489 = vmatprep.subr.mxu0 %v337
    %490 = vmatpush1.msra.mxu0 %v336
    %491 = vmatprep.subr.mxu0 %v341
    %492 = vmatpush1.msra.mxu0 %v340
    %493 = vmatprep.subr.mxu0 %v345
    %494 = vmatpush1.msra.mxu0 %v344
    %495 = vmatprep.subr.mxu0 %v349
    %496 = vmatpush1.msra.mxu0 %v348
    %497 = vmatprep.subr.mxu0 %v353
    %498 = vmatpush1.msra.mxu0 %v352
    %499 = vmatprep.subr.mxu0 %v357
    %500 = vmatpush1.msra.mxu0 %v356
    %501 = vmatprep.subr.mxu0 %v361
    %502 = vmatpush1.msra.mxu0 %v360
    %503 = vmatprep.subr.mxu0 %v365
    %504 = vmatpush1.msra.mxu0 %v364
    %505 = vmatprep.subr.mxu0 0.0
    %506 = vmatpush1.msra.mxu0 0.0
    %507 = vmatprep.mubr.f32.mxu0 %v370
    %508 = vmatmul.mubr.f32.gmra.mrb[0].mxu0 %v113
    %v509 = vpop.f32.mrb[0].mxu0
    %v510 = vadd.f32 %v439, %v509
    %v511 = vpop.f32.mrb[0].mxu0
    %v512 = vadd.f32 %v441, %v511
    %513 = vdwg.mxu0
    %514 = vmatprep.subr.mxu0 %v119
    %515 = vmatpush1.msra.mxu0 %v118
    %516 = vmatprep.subr.mxu0 %v123
    %517 = vmatpush1.msra.mxu0 %v122
    %518 = vmatprep.subr.mxu0 %v127
    %519 = vmatpush1.msra.mxu0 %v126
    %520 = vmatprep.subr.mxu0 %v131
    %521 = vmatpush1.msra.mxu0 %v130
    %522 = vmatprep.subr.mxu0 %v135
    %523 = vmatpush1.msra.mxu0 %v134
    %524 = vmatprep.subr.mxu0 %v139
    %525 = vmatpush1.msra.mxu0 %v138
    %526 = vmatprep.subr.mxu0 %v143
    %527 = vmatpush1.msra.mxu0 %v142
    %528 = vmatprep.subr.mxu0 %v147
    %529 = vmatpush1.msra.mxu0 %v146
    %530 = vmatprep.subr.mxu0 %v151
    %531 = vmatpush1.msra.mxu0 %v150
    %532 = vmatprep.subr.mxu0 %v155
    %533 = vmatpush1.msra.mxu0 %v154
    %534 = vmatprep.subr.mxu0 %v159
    %535 = vmatpush1.msra.mxu0 %v158
    %536 = vmatprep.subr.mxu0 %v163
    %537 = vmatpush1.msra.mxu0 %v162
    %538 = vmatprep.subr.mxu0 %v167
    %539 = vmatpush1.msra.mxu0 %v166
    %540 = vmatprep.subr.mxu0 %v171
    %541 = vmatpush1.msra.mxu0 %v170
    %542 = vmatprep.subr.mxu0 %v175
    %543 = vmatpush1.msra.mxu0 %v174
    %544 = vmatprep.subr.mxu0 %v179
    %545 = vmatpush1.msra.mxu0 %v178
    %546 = vmatprep.subr.mxu0 %v183
    %547 = vmatpush1.msra.mxu0 %v182
    %548 = vmatprep.subr.mxu0 %v187
    %549 = vmatpush1.msra.mxu0 %v186
    %550 = vmatprep.subr.mxu0 %v191
    %551 = vmatpush1.msra.mxu0 %v190
    %552 = vmatprep.subr.mxu0 %v195
    %553 = vmatpush1.msra.mxu0 %v194
    %554 = vmatprep.subr.mxu0 %v199
    %555 = vmatpush1.msra.mxu0 %v198
    %556 = vmatprep.subr.mxu0 %v203
    %557 = vmatpush1.msra.mxu0 %v202
    %558 = vmatprep.subr.mxu0 %v207
    %559 = vmatpush1.msra.mxu0 %v206
    %560 = vmatprep.subr.mxu0 %v211
    %561 = vmatpush1.msra.mxu0 %v210
    %562 = vmatprep.subr.mxu0 %v215
    %563 = vmatpush1.msra.mxu0 %v214
    %564 = vmatprep.subr.mxu0 %v219
    %565 = vmatpush1.msra.mxu0 %v218
    %566 = vmatprep.subr.mxu0 %v223
    %567 = vmatpush1.msra.mxu0 %v222
    %568 = vmatprep.subr.mxu0 %v227
    %569 = vmatpush1.msra.mxu0 %v226
    %570 = vmatprep.subr.mxu0 %v231
    %571 = vmatpush1.msra.mxu0 %v230
    %572 = vmatprep.subr.mxu0 %v235
    %573 = vmatpush1.msra.mxu0 %v234
    %574 = vmatprep.subr.mxu0 %v239
    %575 = vmatpush1.msra.mxu0 %v238
    %576 = vmatprep.subr.mxu0 %v243
    %577 = vmatpush1.msra.mxu0 %v242
    %578 = vmatprep.mubr.f32.mxu0 %v111
    %579 = vmatmul.mubr.f32.gmra.mrb[0].mxu0 %v107
    %v580 = vpop.f32.mrb[0].mxu0
    %v581 = vadd.f32 0.0, %v580
    %v582 = vpop.f32.mrb[0].mxu0
    %v583 = vadd.f32 0.0, %v582
    %584 = vdwg.mxu0
    %585 = vmatprep.subr.mxu0 %v247
    %586 = vmatpush1.msra.mxu0 %v246
    %587 = vmatprep.subr.mxu0 %v251
    %588 = vmatpush1.msra.mxu0 %v250
    %589 = vmatprep.subr.mxu0 %v255
    %590 = vmatpush1.msra.mxu0 %v254
    %591 = vmatprep.subr.mxu0 %v259
    %592 = vmatpush1.msra.mxu0 %v258
    %593 = vmatprep.subr.mxu0 %v263
    %594 = vmatpush1.msra.mxu0 %v262
    %595 = vmatprep.subr.mxu0 %v267
    %596 = vmatpush1.msra.mxu0 %v266
    %597 = vmatprep.subr.mxu0 %v271
    %598 = vmatpush1.msra.mxu0 %v270
    %599 = vmatprep.subr.mxu0 %v275
    %600 = vmatpush1.msra.mxu0 %v274
    %601 = vmatprep.subr.mxu0 %v279
    %602 = vmatpush1.msra.mxu0 %v278
    %603 = vmatprep.subr.mxu0 %v283
    %604 = vmatpush1.msra.mxu0 %v282
    %605 = vmatprep.subr.mxu0 %v287
    %606 = vmatpush1.msra.mxu0 %v286
    %607 = vmatprep.subr.mxu0 %v291
    %608 = vmatpush1.msra.mxu0 %v290
    %609 = vmatprep.subr.mxu0 %v295
    %610 = vmatpush1.msra.mxu0 %v294
    %611 = vmatprep.subr.mxu0 %v299
    %612 = vmatpush1.msra.mxu0 %v298
    %613 = vmatprep.subr.mxu0 %v303
    %614 = vmatpush1.msra.mxu0 %v302
    %615 = vmatprep.subr.mxu0 %v307
    %616 = vmatpush1.msra.mxu0 %v306
    %617 = vmatprep.subr.mxu0 %v311
    %618 = vmatpush1.msra.mxu0 %v310
    %619 = vmatprep.subr.mxu0 %v315
    %620 = vmatpush1.msra.mxu0 %v314
    %621 = vmatprep.subr.mxu0 %v319
    %622 = vmatpush1.msra.mxu0 %v318
    %623 = vmatprep.subr.mxu0 %v323
    %624 = vmatpush1.msra.mxu0 %v322
    %625 = vmatprep.subr.mxu0 %v327
    %626 = vmatpush1.msra.mxu0 %v326
    %627 = vmatprep.subr.mxu0 %v331
    %628 = vmatpush1.msra.mxu0 %v330
    %629 = vmatprep.subr.mxu0 %v335
    %630 = vmatpush1.msra.mxu0 %v334
    %631 = vmatprep.subr.mxu0 %v339
    %632 = vmatpush1.msra.mxu0 %v338
    %633 = vmatprep.subr.mxu0 %v343
    %634 = vmatpush1.msra.mxu0 %v342
    %635 = vmatprep.subr.mxu0 %v347
    %636 = vmatpush1.msra.mxu0 %v346
    %637 = vmatprep.subr.mxu0 %v351
    %638 = vmatpush1.msra.mxu0 %v350
    %639 = vmatprep.subr.mxu0 %v355
    %640 = vmatpush1.msra.mxu0 %v354
    %641 = vmatprep.subr.mxu0 %v359
    %642 = vmatpush1.msra.mxu0 %v358
    %643 = vmatprep.subr.mxu0 %v363
    %644 = vmatpush1.msra.mxu0 %v362
    %645 = vmatprep.subr.mxu0 %v367
    %646 = vmatpush1.msra.mxu0 %v366
    %647 = vmatprep.subr.mxu0 0.0
    %648 = vmatpush1.msra.mxu0 0.0
    %649 = vmatprep.mubr.f32.mxu0 %v370
    %650 = vmatmul.mubr.f32.gmra.mrb[0].mxu0 %v113
    %v651 = vpop.f32.mrb[0].mxu0
    %v652 = vadd.f32 %v581, %v651
    %v653 = vpop.f32.mrb[0].mxu0
    %v654 = vadd.f32 %v583, %v653
    %655 = vdwg.mxu0
    %v656 = vmax.f32 %v510, %v512
    %v657 = vmax.f32 %v652, %v654
    %v658 = vmax.f32 %v656, %v657
    %v659 = vld [vmem:[%s2] sm:$0x1]
    %v661 = vlaneseq
    %v662 = vshrl.u32 %v661, 7
    %v663 = vsub.s32 0, %v662
    %v664 = vrot.slane %v659, %v663
    %v666 = vadd.f32 %v658, %v664
    %v667 = vmax.f32 %v666, 0.0
    %v668 = vld [vmem:[%s3] sm:$0xff]
    %v669 = vld [vmem:[%s3 + $0x8] sm:$0xff]
    %v670 = vld [vmem:[%s3 + $0x10] sm:$0xff]
    %v671 = vld [vmem:[%s3 + $0x18] sm:$0xff]
    %v672 = vld [vmem:[%s3 + $0x20] sm:$0xff]
    %v673 = vld [vmem:[%s3 + $0x28] sm:$0xff]
    %v674 = vld [vmem:[%s3 + $0x30] sm:$0xff]
    %v675 = vld [vmem:[%s3 + $0x38] sm:$0xff]
    %v676 = vld [vmem:[%s3 + $0x40] sm:$0xff]
    %v677 = vld [vmem:[%s3 + $0x48] sm:$0xff]
    %v678 = vld [vmem:[%s3 + $0x50] sm:$0xff]
    %v679 = vld [vmem:[%s3 + $0x58] sm:$0xff]
    %v680 = vld [vmem:[%s3 + $0x60] sm:$0xff]
    %v681 = vld [vmem:[%s3 + $0x68] sm:$0xff]
    %v682 = vld [vmem:[%s3 + $0x70] sm:$0xff]
    %v683 = vld [vmem:[%s3 + $0x78] sm:$0xff]
    %684 = vmatprep.subr.mxu0 0.0
    %685 = vmatpush1.msra.mxu0 %v668
    %686 = vmatprep.subr.mxu0 0.0
    %687 = vmatpush1.msra.mxu0 %v669
    %688 = vmatprep.subr.mxu0 0.0
    %689 = vmatpush1.msra.mxu0 %v670
    %690 = vmatprep.subr.mxu0 0.0
    %691 = vmatpush1.msra.mxu0 %v671
    %692 = vmatprep.subr.mxu0 0.0
    %693 = vmatpush1.msra.mxu0 %v672
    %694 = vmatprep.subr.mxu0 0.0
    %695 = vmatpush1.msra.mxu0 %v673
    %696 = vmatprep.subr.mxu0 0.0
    %697 = vmatpush1.msra.mxu0 %v674
    %698 = vmatprep.subr.mxu0 0.0
    %699 = vmatpush1.msra.mxu0 %v675
    %700 = vmatprep.subr.mxu0 0.0
    %701 = vmatpush1.msra.mxu0 %v676
    %702 = vmatprep.subr.mxu0 0.0
    %703 = vmatpush1.msra.mxu0 %v677
    %704 = vmatprep.subr.mxu0 0.0
    %705 = vmatpush1.msra.mxu0 %v678
    %706 = vmatprep.subr.mxu0 0.0
    %707 = vmatpush1.msra.mxu0 %v679
    %708 = vmatprep.subr.mxu0 0.0
    %709 = vmatpush1.msra.mxu0 %v680
    %710 = vmatprep.subr.mxu0 0.0
    %711 = vmatpush1.msra.mxu0 %v681
    %712 = vmatprep.subr.mxu0 0.0
    %713 = vmatpush1.msra.mxu0 %v682
    %714 = vmatprep.subr.mxu0 0.0
    %715 = vmatpush1.msra.mxu0 %v683
    %716 = vmatprep.subr.mxu0 0.0
    %717 = vmatpush1.msra.mxu0 0.0
    %718 = vmatprep.subr.mxu0 0.0
    %719 = vmatpush1.msra.mxu0 0.0
    %720 = vmatprep.subr.mxu0 0.0
    %721 = vmatpush1.msra.mxu0 0.0
    %722 = vmatprep.subr.mxu0 0.0
    %723 = vmatpush1.msra.mxu0 0.0
    %724 = vmatprep.subr.mxu0 0.0
    %725 = vmatpush1.msra.mxu0 0.0
    %726 = vmatprep.subr.mxu0 0.0
    %727 = vmatpush1.msra.mxu0 0.0
    %728 = vmatprep.subr.mxu0 0.0
    %729 = vmatpush1.msra.mxu0 0.0
    %730 = vmatprep.subr.mxu0 0.0
    %731 = vmatpush1.msra.mxu0 0.0
    %732 = vmatprep.subr.mxu0 0.0
    %733 = vmatpush1.msra.mxu0 0.0
    %734 = vmatprep.subr.mxu0 0.0
    %735 = vmatpush1.msra.mxu0 0.0
    %736 = vmatprep.subr.mxu0 0.0
    %737 = vmatpush1.msra.mxu0 0.0
    %738 = vmatprep.subr.mxu0 0.0
    %739 = vmatpush1.msra.mxu0 0.0
    %740 = vmatprep.subr.mxu0 0.0
    %741 = vmatpush1.msra.mxu0 0.0
    %742 = vmatprep.subr.mxu0 0.0
    %743 = vmatpush1.msra.mxu0 0.0
    %744 = vmatprep.subr.mxu0 0.0
    %745 = vmatpush1.msra.mxu0 0.0
    %746 = vmatprep.subr.mxu0 0.0
    %747 = vmatpush1.msra.mxu0 0.0
    %748 = vmatprep.mubr.f32.mxu0 0.0
    %749 = vmatmul.mubr.f32.gmra.mrb[0].mxu0 %v667
    %v750 = vpop.f32.mrb[0].mxu0
    %v751 = vadd.f32 0.0, %v750
    %v752 = vpop.f32.mrb[0].mxu0
    %753 = vdwg.mxu0
    %v755 = vlaneseq
    %v756 = vshrl.u32 %v755, 7
    %v757 = vsub.s32 0, %v756
    %v758 = vrot.slane %v33, %v757
    %v760 = vadd.f32 %v758, %v751
    %s761 = scalar_lea.vmem %s0, 6
    %v762 = vld [vmem:[%s761] sm:$0x1]
    %v763 = vunpack.c.l.bf16 %v762
    %s764 = scalar_lea.vmem %s0, 7
    %v765 = vld [vmem:[%s764] sm:$0x1]
    %v766 = vunpack.c.l.bf16 %v765
    %767 = vrot.lane.b32.xlu0 %v80, 84
    %v768 = vpop.permute.xlu0 %767
    %770 = vrot.lane.b32.xlu0 %v91, 40
    %v771 = vpop.permute.xlu0 %770
    %773 = vrot.lane.b32.xlu0 %v102, 124
    %v774 = vpop.permute.xlu0 %773
    %v778 = vunpack.c.l.s4 1983009808
    %v779 = vunpack.c.0.s8 %v778
    %v780 = vlaneseq
    %v781 = vshrl.u32 %v780, 7
    %v782 = vsub.s32 %v779, %v781
    %v783 = vrot.slane %v763, %v782
    %784 = vrot.lane.b32.xlu0 %v783, 80
    %v785 = vpop.permute.xlu0 %784
    %v789 = vunpack.c.l.s4 1983009808
    %v790 = vunpack.c.0.s8 %v789
    %v791 = vlaneseq
    %v792 = vshrl.u32 %v791, 7
    %v793 = vsub.s32 %v790, %v792
    %v794 = vrot.slane %v766, %v793
    %795 = vrot.lane.b32.xlu0 %v794, 36
    %v796 = vpop.permute.xlu0 %795
    %v798 = vsel %vm106, %v41, %v768
    %v799 = vsel %vm108, %v768, %v771
    %v800 = vsel %vm110, %v799, %v774
    %v801 = vsel %vm112, %v774, %v785
    %v802 = vsel %vm114, %v785, %v796
    %v804 = vsel %vm368, %v802, 0
    %806 = vmatprep.subr.mxu0 %v117
    %807 = vmatpush1.msra.mxu0 %v116
    %808 = vmatprep.subr.mxu0 %v121
    %809 = vmatpush1.msra.mxu0 %v120
    %810 = vmatprep.subr.mxu0 %v125
    %811 = vmatpush1.msra.mxu0 %v124
    %812 = vmatprep.subr.mxu0 %v129
    %813 = vmatpush1.msra.mxu0 %v128
    %814 = vmatprep.subr.mxu0 %v133
    %815 = vmatpush1.msra.mxu0 %v132
    %816 = vmatprep.subr.mxu0 %v137
    %817 = vmatpush1.msra.mxu0 %v136
    %818 = vmatprep.subr.mxu0 %v141
    %819 = vmatpush1.msra.mxu0 %v140
    %820 = vmatprep.subr.mxu0 %v145
    %821 = vmatpush1.msra.mxu0 %v144
    %822 = vmatprep.subr.mxu0 %v149
    %823 = vmatpush1.msra.mxu0 %v148
    %824 = vmatprep.subr.mxu0 %v153
    %825 = vmatpush1.msra.mxu0 %v152
    %826 = vmatprep.subr.mxu0 %v157
    %827 = vmatpush1.msra.mxu0 %v156
    %828 = vmatprep.subr.mxu0 %v161
    %829 = vmatpush1.msra.mxu0 %v160
    %830 = vmatprep.subr.mxu0 %v165
    %831 = vmatpush1.msra.mxu0 %v164
    %832 = vmatprep.subr.mxu0 %v169
    %833 = vmatpush1.msra.mxu0 %v168
    %834 = vmatprep.subr.mxu0 %v173
    %835 = vmatpush1.msra.mxu0 %v172
    %836 = vmatprep.subr.mxu0 %v177
    %837 = vmatpush1.msra.mxu0 %v176
    %838 = vmatprep.subr.mxu0 %v181
    %839 = vmatpush1.msra.mxu0 %v180
    %840 = vmatprep.subr.mxu0 %v185
    %841 = vmatpush1.msra.mxu0 %v184
    %842 = vmatprep.subr.mxu0 %v189
    %843 = vmatpush1.msra.mxu0 %v188
    %844 = vmatprep.subr.mxu0 %v193
    %845 = vmatpush1.msra.mxu0 %v192
    %846 = vmatprep.subr.mxu0 %v197
    %847 = vmatpush1.msra.mxu0 %v196
    %848 = vmatprep.subr.mxu0 %v201
    %849 = vmatpush1.msra.mxu0 %v200
    %850 = vmatprep.subr.mxu0 %v205
    %851 = vmatpush1.msra.mxu0 %v204
    %852 = vmatprep.subr.mxu0 %v209
    %853 = vmatpush1.msra.mxu0 %v208
    %854 = vmatprep.subr.mxu0 %v213
    %855 = vmatpush1.msra.mxu0 %v212
    %856 = vmatprep.subr.mxu0 %v217
    %857 = vmatpush1.msra.mxu0 %v216
    %858 = vmatprep.subr.mxu0 %v221
    %859 = vmatpush1.msra.mxu0 %v220
    %860 = vmatprep.subr.mxu0 %v225
    %861 = vmatpush1.msra.mxu0 %v224
    %862 = vmatprep.subr.mxu0 %v229
    %863 = vmatpush1.msra.mxu0 %v228
    %864 = vmatprep.subr.mxu0 %v233
    %865 = vmatpush1.msra.mxu0 %v232
    %866 = vmatprep.subr.mxu0 %v237
    %867 = vmatpush1.msra.mxu0 %v236
    %868 = vmatprep.subr.mxu0 %v241
    %869 = vmatpush1.msra.mxu0 %v240
    %870 = vmatprep.mubr.f32.mxu0 %v800
    %871 = vmatmul.mubr.f32.gmra.mrb[0].mxu0 %v798
    %v872 = vpop.f32.mrb[0].mxu0
    %v873 = vadd.f32 0.0, %v872
    %v874 = vpop.f32.mrb[0].mxu0
    %v875 = vadd.f32 0.0, %v874
    %876 = vdwg.mxu0
    %877 = vmatprep.subr.mxu0 %v245
    %878 = vmatpush1.msra.mxu0 %v244
    %879 = vmatprep.subr.mxu0 %v249
    %880 = vmatpush1.msra.mxu0 %v248
    %881 = vmatprep.subr.mxu0 %v253
    %882 = vmatpush1.msra.mxu0 %v252
    %883 = vmatprep.subr.mxu0 %v257
    %884 = vmatpush1.msra.mxu0 %v256
    %885 = vmatprep.subr.mxu0 %v261
    %886 = vmatpush1.msra.mxu0 %v260
    %887 = vmatprep.subr.mxu0 %v265
    %888 = vmatpush1.msra.mxu0 %v264
    %889 = vmatprep.subr.mxu0 %v269
    %890 = vmatpush1.msra.mxu0 %v268
    %891 = vmatprep.subr.mxu0 %v273
    %892 = vmatpush1.msra.mxu0 %v272
    %893 = vmatprep.subr.mxu0 %v277
    %894 = vmatpush1.msra.mxu0 %v276
    %895 = vmatprep.subr.mxu0 %v281
    %896 = vmatpush1.msra.mxu0 %v280
    %897 = vmatprep.subr.mxu0 %v285
    %898 = vmatpush1.msra.mxu0 %v284
    %899 = vmatprep.subr.mxu0 %v289
    %900 = vmatpush1.msra.mxu0 %v288
    %901 = vmatprep.subr.mxu0 %v293
    %902 = vmatpush1.msra.mxu0 %v292
    %903 = vmatprep.subr.mxu0 %v297
    %904 = vmatpush1.msra.mxu0 %v296
    %905 = vmatprep.subr.mxu0 %v301
    %906 = vmatpush1.msra.mxu0 %v300
    %907 = vmatprep.subr.mxu0 %v305
    %908 = vmatpush1.msra.mxu0 %v304
    %909 = vmatprep.subr.mxu0 %v309
    %910 = vmatpush1.msra.mxu0 %v308
    %911 = vmatprep.subr.mxu0 %v313
    %912 = vmatpush1.msra.mxu0 %v312
    %913 = vmatprep.subr.mxu0 %v317
    %914 = vmatpush1.msra.mxu0 %v316
    %915 = vmatprep.subr.mxu0 %v321
    %916 = vmatpush1.msra.mxu0 %v320
    %917 = vmatprep.subr.mxu0 %v325
    %918 = vmatpush1.msra.mxu0 %v324
    %919 = vmatprep.subr.mxu0 %v329
    %920 = vmatpush1.msra.mxu0 %v328
    %921 = vmatprep.subr.mxu0 %v333
    %922 = vmatpush1.msra.mxu0 %v332
    %923 = vmatprep.subr.mxu0 %v337
    %924 = vmatpush1.msra.mxu0 %v336
    %925 = vmatprep.subr.mxu0 %v341
    %926 = vmatpush1.msra.mxu0 %v340
    %927 = vmatprep.subr.mxu0 %v345
    %928 = vmatpush1.msra.mxu0 %v344
    %929 = vmatprep.subr.mxu0 %v349
    %930 = vmatpush1.msra.mxu0 %v348
    %931 = vmatprep.subr.mxu0 %v353
    %932 = vmatpush1.msra.mxu0 %v352
    %933 = vmatprep.subr.mxu0 %v357
    %934 = vmatpush1.msra.mxu0 %v356
    %935 = vmatprep.subr.mxu0 %v361
    %936 = vmatpush1.msra.mxu0 %v360
    %937 = vmatprep.subr.mxu0 %v365
    %938 = vmatpush1.msra.mxu0 %v364
    %939 = vmatprep.subr.mxu0 0.0
    %940 = vmatpush1.msra.mxu0 0.0
    %941 = vmatprep.mubr.f32.mxu0 %v804
    %942 = vmatmul.mubr.f32.gmra.mrb[0].mxu0 %v801
    %v943 = vpop.f32.mrb[0].mxu0
    %v944 = vadd.f32 %v873, %v943
    %v945 = vpop.f32.mrb[0].mxu0
    %v946 = vadd.f32 %v875, %v945
    %947 = vdwg.mxu0
    %948 = vmatprep.subr.mxu0 %v119
    %949 = vmatpush1.msra.mxu0 %v118
    %950 = vmatprep.subr.mxu0 %v123
    %951 = vmatpush1.msra.mxu0 %v122
    %952 = vmatprep.subr.mxu0 %v127
    %953 = vmatpush1.msra.mxu0 %v126
    %954 = vmatprep.subr.mxu0 %v131
    %955 = vmatpush1.msra.mxu0 %v130
    %956 = vmatprep.subr.mxu0 %v135
    %957 = vmatpush1.msra.mxu0 %v134
    %958 = vmatprep.subr.mxu0 %v139
    %959 = vmatpush1.msra.mxu0 %v138
    %960 = vmatprep.subr.mxu0 %v143
    %961 = vmatpush1.msra.mxu0 %v142
    %962 = vmatprep.subr.mxu0 %v147
    %963 = vmatpush1.msra.mxu0 %v146
    %964 = vmatprep.subr.mxu0 %v151
    %965 = vmatpush1.msra.mxu0 %v150
    %966 = vmatprep.subr.mxu0 %v155
    %967 = vmatpush1.msra.mxu0 %v154
    %968 = vmatprep.subr.mxu0 %v159
    %969 = vmatpush1.msra.mxu0 %v158
    %970 = vmatprep.subr.mxu0 %v163
    %971 = vmatpush1.msra.mxu0 %v162
    %972 = vmatprep.subr.mxu0 %v167
    %973 = vmatpush1.msra.mxu0 %v166
    %974 = vmatprep.subr.mxu0 %v171
    %975 = vmatpush1.msra.mxu0 %v170
    %976 = vmatprep.subr.mxu0 %v175
    %977 = vmatpush1.msra.mxu0 %v174
    %978 = vmatprep.subr.mxu0 %v179
    %979 = vmatpush1.msra.mxu0 %v178
    %980 = vmatprep.subr.mxu0 %v183
    %981 = vmatpush1.msra.mxu0 %v182
    %982 = vmatprep.subr.mxu0 %v187
    %983 = vmatpush1.msra.mxu0 %v186
    %984 = vmatprep.subr.mxu0 %v191
    %985 = vmatpush1.msra.mxu0 %v190
    %986 = vmatprep.subr.mxu0 %v195
    %987 = vmatpush1.msra.mxu0 %v194
    %988 = vmatprep.subr.mxu0 %v199
    %989 = vmatpush1.msra.mxu0 %v198
    %990 = vmatprep.subr.mxu0 %v203
    %991 = vmatpush1.msra.mxu0 %v202
    %992 = vmatprep.subr.mxu0 %v207
    %993 = vmatpush1.msra.mxu0 %v206
    %994 = vmatprep.subr.mxu0 %v211
    %995 = vmatpush1.msra.mxu0 %v210
    %996 = vmatprep.subr.mxu0 %v215
    %997 = vmatpush1.msra.mxu0 %v214
    %998 = vmatprep.subr.mxu0 %v219
    %999 = vmatpush1.msra.mxu0 %v218
    %1000 = vmatprep.subr.mxu0 %v223
    %1001 = vmatpush1.msra.mxu0 %v222
    %1002 = vmatprep.subr.mxu0 %v227
    %1003 = vmatpush1.msra.mxu0 %v226
    %1004 = vmatprep.subr.mxu0 %v231
    %1005 = vmatpush1.msra.mxu0 %v230
    %1006 = vmatprep.subr.mxu0 %v235
    %1007 = vmatpush1.msra.mxu0 %v234
    %1008 = vmatprep.subr.mxu0 %v239
    %1009 = vmatpush1.msra.mxu0 %v238
    %1010 = vmatprep.subr.mxu0 %v243
    %1011 = vmatpush1.msra.mxu0 %v242
    %1012 = vmatprep.mubr.f32.mxu0 %v800
    %1013 = vmatmul.mubr.f32.gmra.mrb[0].mxu0 %v798
    %v1014 = vpop.f32.mrb[0].mxu0
    %v1015 = vadd.f32 0.0, %v1014
    %v1016 = vpop.f32.mrb[0].mxu0
    %v1017 = vadd.f32 0.0, %v1016
    %1018 = vdwg.mxu0
    %1019 = vmatprep.subr.mxu0 %v247
    %1020 = vmatpush1.msra.mxu0 %v246
    %1021 = vmatprep.subr.mxu0 %v251
    %1022 = vmatpush1.msra.mxu0 %v250
    %1023 = vmatprep.subr.mxu0 %v255
    %1024 = vmatpush1.msra.mxu0 %v254
    %1025 = vmatprep.subr.mxu0 %v259
    %1026 = vmatpush1.msra.mxu0 %v258
    %1027 = vmatprep.subr.mxu0 %v263
    %1028 = vmatpush1.msra.mxu0 %v262
    %1029 = vmatprep.subr.mxu0 %v267
    %1030 = vmatpush1.msra.mxu0 %v266
    %1031 = vmatprep.subr.mxu0 %v271
    %1032 = vmatpush1.msra.mxu0 %v270
    %1033 = vmatprep.subr.mxu0 %v275
    %1034 = vmatpush1.msra.mxu0 %v274
    %1035 = vmatprep.subr.mxu0 %v279
    %1036 = vmatpush1.msra.mxu0 %v278
    %1037 = vmatprep.subr.mxu0 %v283
    %1038 = vmatpush1.msra.mxu0 %v282
    %1039 = vmatprep.subr.mxu0 %v287
    %1040 = vmatpush1.msra.mxu0 %v286
    %1041 = vmatprep.subr.mxu0 %v291
    %1042 = vmatpush1.msra.mxu0 %v290
    %1043 = vmatprep.subr.mxu0 %v295
    %1044 = vmatpush1.msra.mxu0 %v294
    %1045 = vmatprep.subr.mxu0 %v299
    %1046 = vmatpush1.msra.mxu0 %v298
    %1047 = vmatprep.subr.mxu0 %v303
    %1048 = vmatpush1.msra.mxu0 %v302
    %1049 = vmatprep.subr.mxu0 %v307
    %1050 = vmatpush1.msra.mxu0 %v306
    %1051 = vmatprep.subr.mxu0 %v311
    %1052 = vmatpush1.msra.mxu0 %v310
    %1053 = vmatprep.subr.mxu0 %v315
    %1054 = vmatpush1.msra.mxu0 %v314
    %1055 = vmatprep.subr.mxu0 %v319
    %1056 = vmatpush1.msra.mxu0 %v318
    %1057 = vmatprep.subr.mxu0 %v323
    %1058 = vmatpush1.msra.mxu0 %v322
    %1059 = vmatprep.subr.mxu0 %v327
    %1060 = vmatpush1.msra.mxu0 %v326
    %1061 = vmatprep.subr.mxu0 %v331
    %1062 = vmatpush1.msra.mxu0 %v330
    %1063 = vmatprep.subr.mxu0 %v335
    %1064 = vmatpush1.msra.mxu0 %v334
    %1065 = vmatprep.subr.mxu0 %v339
    %1066 = vmatpush1.msra.mxu0 %v338
    %1067 = vmatprep.subr.mxu0 %v343
    %1068 = vmatpush1.msra.mxu0 %v342
    %1069 = vmatprep.subr.mxu0 %v347
    %1070 = vmatpush1.msra.mxu0 %v346
    %1071 = vmatprep.subr.mxu0 %v351
    %1072 = vmatpush1.msra.mxu0 %v350
    %1073 = vmatprep.subr.mxu0 %v355
    %1074 = vmatpush1.msra.mxu0 %v354
    %1075 = vmatprep.subr.mxu0 %v359
    %1076 = vmatpush1.msra.mxu0 %v358
    %1077 = vmatprep.subr.mxu0 %v363
    %1078 = vmatpush1.msra.mxu0 %v362
    %1079 = vmatprep.subr.mxu0 %v367
    %1080 = vmatpush1.msra.mxu0 %v366
    %1081 = vmatprep.subr.mxu0 0.0
    %1082 = vmatpush1.msra.mxu0 0.0
    %1083 = vmatprep.mubr.f32.mxu0 %v804
    %1084 = vmatmul.mubr.f32.gmra.mrb[0].mxu0 %v801
    %v1085 = vpop.f32.mrb[0].mxu0
    %v1086 = vadd.f32 %v1015, %v1085
    %v1087 = vpop.f32.mrb[0].mxu0
    %v1088 = vadd.f32 %v1017, %v1087
    %1089 = vdwg.mxu0
    %v1090 = vmax.f32 %v944, %v946
    %v1091 = vmax.f32 %v1086, %v1088
    %v1092 = vmax.f32 %v1090, %v1091
    %v1093 = vadd.f32 %v1092, %v664
    %v1094 = vmax.f32 %v1093, 0.0
    %s1095 = scalar_lea.vmem %s3, 128
    %v1096 = vld [vmem:[%s1095] sm:$0xff]
    %v1097 = vld [vmem:[%s1095 + $0x8] sm:$0xff]
    %v1098 = vld [vmem:[%s1095 + $0x10] sm:$0xff]
    %v1099 = vld [vmem:[%s1095 + $0x18] sm:$0xff]
    %v1100 = vld [vmem:[%s1095 + $0x20] sm:$0xff]
    %v1101 = vld [vmem:[%s1095 + $0x28] sm:$0xff]
    %v1102 = vld [vmem:[%s1095 + $0x30] sm:$0xff]
    %v1103 = vld [vmem:[%s1095 + $0x38] sm:$0xff]
    %v1104 = vld [vmem:[%s1095 + $0x40] sm:$0xff]
    %v1105 = vld [vmem:[%s1095 + $0x48] sm:$0xff]
    %v1106 = vld [vmem:[%s1095 + $0x50] sm:$0xff]
    %v1107 = vld [vmem:[%s1095 + $0x58] sm:$0xff]
    %v1108 = vld [vmem:[%s1095 + $0x60] sm:$0xff]
    %v1109 = vld [vmem:[%s1095 + $0x68] sm:$0xff]
    %v1110 = vld [vmem:[%s1095 + $0x70] sm:$0xff]
    %v1111 = vld [vmem:[%s1095 + $0x78] sm:$0xff]
    %1112 = vmatprep.subr.mxu0 0.0
    %1113 = vmatpush1.msra.mxu0 %v1096
    %1114 = vmatprep.subr.mxu0 0.0
    %1115 = vmatpush1.msra.mxu0 %v1097
    %1116 = vmatprep.subr.mxu0 0.0
    %1117 = vmatpush1.msra.mxu0 %v1098
    %1118 = vmatprep.subr.mxu0 0.0
    %1119 = vmatpush1.msra.mxu0 %v1099
    %1120 = vmatprep.subr.mxu0 0.0
    %1121 = vmatpush1.msra.mxu0 %v1100
    %1122 = vmatprep.subr.mxu0 0.0
    %1123 = vmatpush1.msra.mxu0 %v1101
    %1124 = vmatprep.subr.mxu0 0.0
    %1125 = vmatpush1.msra.mxu0 %v1102
    %1126 = vmatprep.subr.mxu0 0.0
    %1127 = vmatpush1.msra.mxu0 %v1103
    %1128 = vmatprep.subr.mxu0 0.0
    %1129 = vmatpush1.msra.mxu0 %v1104
    %1130 = vmatprep.subr.mxu0 0.0
    %1131 = vmatpush1.msra.mxu0 %v1105
    %1132 = vmatprep.subr.mxu0 0.0
    %1133 = vmatpush1.msra.mxu0 %v1106
    %1134 = vmatprep.subr.mxu0 0.0
    %1135 = vmatpush1.msra.mxu0 %v1107
    %1136 = vmatprep.subr.mxu0 0.0
    %1137 = vmatpush1.msra.mxu0 %v1108
    %1138 = vmatprep.subr.mxu0 0.0
    %1139 = vmatpush1.msra.mxu0 %v1109
    %1140 = vmatprep.subr.mxu0 0.0
    %1141 = vmatpush1.msra.mxu0 %v1110
    %1142 = vmatprep.subr.mxu0 0.0
    %1143 = vmatpush1.msra.mxu0 %v1111
    %1144 = vmatprep.subr.mxu0 0.0
    %1145 = vmatpush1.msra.mxu0 0.0
    %1146 = vmatprep.subr.mxu0 0.0
    %1147 = vmatpush1.msra.mxu0 0.0
    %1148 = vmatprep.subr.mxu0 0.0
    %1149 = vmatpush1.msra.mxu0 0.0
    %1150 = vmatprep.subr.mxu0 0.0
    %1151 = vmatpush1.msra.mxu0 0.0
    %1152 = vmatprep.subr.mxu0 0.0
    %1153 = vmatpush1.msra.mxu0 0.0
    %1154 = vmatprep.subr.mxu0 0.0
    %1155 = vmatpush1.msra.mxu0 0.0
    %1156 = vmatprep.subr.mxu0 0.0
    %1157 = vmatpush1.msra.mxu0 0.0
    %1158 = vmatprep.subr.mxu0 0.0
    %1159 = vmatpush1.msra.mxu0 0.0
    %1160 = vmatprep.subr.mxu0 0.0
    %1161 = vmatpush1.msra.mxu0 0.0
    %1162 = vmatprep.subr.mxu0 0.0
    %1163 = vmatpush1.msra.mxu0 0.0
    %1164 = vmatprep.subr.mxu0 0.0
    %1165 = vmatpush1.msra.mxu0 0.0
    %1166 = vmatprep.subr.mxu0 0.0
    %1167 = vmatpush1.msra.mxu0 0.0
    %1168 = vmatprep.subr.mxu0 0.0
    %1169 = vmatpush1.msra.mxu0 0.0
    %1170 = vmatprep.subr.mxu0 0.0
    %1171 = vmatpush1.msra.mxu0 0.0
    %1172 = vmatprep.subr.mxu0 0.0
    %1173 = vmatpush1.msra.mxu0 0.0
    %1174 = vmatprep.subr.mxu0 0.0
    %1175 = vmatpush1.msra.mxu0 0.0
    %1176 = vmatprep.mubr.f32.mxu0 0.0
    %1177 = vmatmul.mubr.f32.gmra.mrb[0].mxu0 %v1094
    %v1178 = vpop.f32.mrb[0].mxu0
    %v1179 = vadd.f32 0.0, %v1178
    %v1180 = vpop.f32.mrb[0].mxu0
    %1181 = vdwg.mxu0
    %v1182 = vadd.f32 %v760, %v1179
    %s1183 = scalar_lea.vmem %s0, 8
    %v1184 = vld [vmem:[%s1183] sm:$0x1]
    %v1185 = vunpack.c.l.bf16 %v1184
    %s1186 = scalar_lea.vmem %s0, 9
    %v1187 = vld [vmem:[%s1186] sm:$0x1]
    %v1188 = vunpack.c.l.bf16 %v1187
    %1189 = vrot.lane.b32.xlu0 %v102, 84
    %v1190 = vpop.permute.xlu0 %1189
    %1192 = vrot.lane.b32.xlu0 %v783, 40
    %v1193 = vpop.permute.xlu0 %1192
    %1195 = vrot.lane.b32.xlu0 %v794, 124
    %v1196 = vpop.permute.xlu0 %1195
    %v1200 = vunpack.c.l.s4 1983009808
    %v1201 = vunpack.c.0.s8 %v1200
    %v1202 = vlaneseq
    %v1203 = vshrl.u32 %v1202, 7
    %v1204 = vsub.s32 %v1201, %v1203
    %v1205 = vrot.slane %v1185, %v1204
    %1206 = vrot.lane.b32.xlu0 %v1205, 80
    %v1207 = vpop.permute.xlu0 %1206
    %v1211 = vunpack.c.l.s4 1983009808
    %v1212 = vunpack.c.0.s8 %v1211
    %v1213 = vlaneseq
    %v1214 = vshrl.u32 %v1213, 7
    %v1215 = vsub.s32 %v1212, %v1214
    %v1216 = vrot.slane %v1188, %v1215
    %1217 = vrot.lane.b32.xlu0 %v1216, 36
    %v1218 = vpop.permute.xlu0 %1217
    %v1220 = vsel %vm106, %v47, %v1190
    %v1221 = vsel %vm108, %v1190, %v1193
    %v1222 = vsel %vm110, %v1221, %v1196
    %v1223 = vsel %vm112, %v1196, %v1207
    %v1224 = vsel %vm114, %v1207, %v1218
    %v1226 = vsel %vm368, %v1224, 0
    %1228 = vmatprep.subr.mxu0 %v117
    %1229 = vmatpush1.msra.mxu0 %v116
    %1230 = vmatprep.subr.mxu0 %v121
    %1231 = vmatpush1.msra.mxu0 %v120
    %1232 = vmatprep.subr.mxu0 %v125
    %1233 = vmatpush1.msra.mxu0 %v124
    %1234 = vmatprep.subr.mxu0 %v129
    %1235 = vmatpush1.msra.mxu0 %v128
    %1236 = vmatprep.subr.mxu0 %v133
    %1237 = vmatpush1.msra.mxu0 %v132
    %1238 = vmatprep.subr.mxu0 %v137
    %1239 = vmatpush1.msra.mxu0 %v136
    %1240 = vmatprep.subr.mxu0 %v141
    %1241 = vmatpush1.msra.mxu0 %v140
    %1242 = vmatprep.subr.mxu0 %v145
    %1243 = vmatpush1.msra.mxu0 %v144
    %1244 = vmatprep.subr.mxu0 %v149
    %1245 = vmatpush1.msra.mxu0 %v148
    %1246 = vmatprep.subr.mxu0 %v153
    %1247 = vmatpush1.msra.mxu0 %v152
    %1248 = vmatprep.subr.mxu0 %v157
    %1249 = vmatpush1.msra.mxu0 %v156
    %1250 = vmatprep.subr.mxu0 %v161
    %1251 = vmatpush1.msra.mxu0 %v160
    %1252 = vmatprep.subr.mxu0 %v165
    %1253 = vmatpush1.msra.mxu0 %v164
    %1254 = vmatprep.subr.mxu0 %v169
    %1255 = vmatpush1.msra.mxu0 %v168
    %1256 = vmatprep.subr.mxu0 %v173
    %1257 = vmatpush1.msra.mxu0 %v172
    %1258 = vmatprep.subr.mxu0 %v177
    %1259 = vmatpush1.msra.mxu0 %v176
    %1260 = vmatprep.subr.mxu0 %v181
    %1261 = vmatpush1.msra.mxu0 %v180
    %1262 = vmatprep.subr.mxu0 %v185
    %1263 = vmatpush1.msra.mxu0 %v184
    %1264 = vmatprep.subr.mxu0 %v189
    %1265 = vmatpush1.msra.mxu0 %v188
    %1266 = vmatprep.subr.mxu0 %v193
    %1267 = vmatpush1.msra.mxu0 %v192
    %1268 = vmatprep.subr.mxu0 %v197
    %1269 = vmatpush1.msra.mxu0 %v196
    %1270 = vmatprep.subr.mxu0 %v201
    %1271 = vmatpush1.msra.mxu0 %v200
    %1272 = vmatprep.subr.mxu0 %v205
    %1273 = vmatpush1.msra.mxu0 %v204
    %1274 = vmatprep.subr.mxu0 %v209
    %1275 = vmatpush1.msra.mxu0 %v208
    %1276 = vmatprep.subr.mxu0 %v213
    %1277 = vmatpush1.msra.mxu0 %v212
    %1278 = vmatprep.subr.mxu0 %v217
    %1279 = vmatpush1.msra.mxu0 %v216
    %1280 = vmatprep.subr.mxu0 %v221
    %1281 = vmatpush1.msra.mxu0 %v220
    %1282 = vmatprep.subr.mxu0 %v225
    %1283 = vmatpush1.msra.mxu0 %v224
    %1284 = vmatprep.subr.mxu0 %v229
    %1285 = vmatpush1.msra.mxu0 %v228
    %1286 = vmatprep.subr.mxu0 %v233
    %1287 = vmatpush1.msra.mxu0 %v232
    %1288 = vmatprep.subr.mxu0 %v237
    %1289 = vmatpush1.msra.mxu0 %v236
    %1290 = vmatprep.subr.mxu0 %v241
    %1291 = vmatpush1.msra.mxu0 %v240
    %1292 = vmatprep.mubr.f32.mxu0 %v1222
    %1293 = vmatmul.mubr.f32.gmra.mrb[0].mxu0 %v1220
    %v1294 = vpop.f32.mrb[0].mxu0
    %v1295 = vadd.f32 0.0, %v1294
    %v1296 = vpop.f32.mrb[0].mxu0
    %v1297 = vadd.f32 0.0, %v1296
    %1298 = vdwg.mxu0
    %1299 = vmatprep.subr.mxu0 %v245
    %1300 = vmatpush1.msra.mxu0 %v244
    %1301 = vmatprep.subr.mxu0 %v249
    %1302 = vmatpush1.msra.mxu0 %v248
    %1303 = vmatprep.subr.mxu0 %v253
    %1304 = vmatpush1.msra.mxu0 %v252
    %1305 = vmatprep.subr.mxu0 %v257
    %1306 = vmatpush1.msra.mxu0 %v256
    %1307 = vmatprep.subr.mxu0 %v261
    %1308 = vmatpush1.msra.mxu0 %v260
    %1309 = vmatprep.subr.mxu0 %v265
    %1310 = vmatpush1.msra.mxu0 %v264
    %1311 = vmatprep.subr.mxu0 %v269
    %1312 = vmatpush1.msra.mxu0 %v268
    %1313 = vmatprep.subr.mxu0 %v273
    %1314 = vmatpush1.msra.mxu0 %v272
    %1315 = vmatprep.subr.mxu0 %v277
    %1316 = vmatpush1.msra.mxu0 %v276
    %1317 = vmatprep.subr.mxu0 %v281
    %1318 = vmatpush1.msra.mxu0 %v280
    %1319 = vmatprep.subr.mxu0 %v285
    %1320 = vmatpush1.msra.mxu0 %v284
    %1321 = vmatprep.subr.mxu0 %v289
    %1322 = vmatpush1.msra.mxu0 %v288
    %1323 = vmatprep.subr.mxu0 %v293
    %1324 = vmatpush1.msra.mxu0 %v292
    %1325 = vmatprep.subr.mxu0 %v297
    %1326 = vmatpush1.msra.mxu0 %v296
    %1327 = vmatprep.subr.mxu0 %v301
    %1328 = vmatpush1.msra.mxu0 %v300
    %1329 = vmatprep.subr.mxu0 %v305
    %1330 = vmatpush1.msra.mxu0 %v304
    %1331 = vmatprep.subr.mxu0 %v309
    %1332 = vmatpush1.msra.mxu0 %v308
    %1333 = vmatprep.subr.mxu0 %v313
    %1334 = vmatpush1.msra.mxu0 %v312
    %1335 = vmatprep.subr.mxu0 %v317
    %1336 = vmatpush1.msra.mxu0 %v316
    %1337 = vmatprep.subr.mxu0 %v321
    %1338 = vmatpush1.msra.mxu0 %v320
    %1339 = vmatprep.subr.mxu0 %v325
    %1340 = vmatpush1.msra.mxu0 %v324
    %1341 = vmatprep.subr.mxu0 %v329
    %1342 = vmatpush1.msra.mxu0 %v328
    %1343 = vmatprep.subr.mxu0 %v333
    %1344 = vmatpush1.msra.mxu0 %v332
    %1345 = vmatprep.subr.mxu0 %v337
    %1346 = vmatpush1.msra.mxu0 %v336
    %1347 = vmatprep.subr.mxu0 %v341
    %1348 = vmatpush1.msra.mxu0 %v340
    %1349 = vmatprep.subr.mxu0 %v345
    %1350 = vmatpush1.msra.mxu0 %v344
    %1351 = vmatprep.subr.mxu0 %v349
    %1352 = vmatpush1.msra.mxu0 %v348
    %1353 = vmatprep.subr.mxu0 %v353
    %1354 = vmatpush1.msra.mxu0 %v352
    %1355 = vmatprep.subr.mxu0 %v357
    %1356 = vmatpush1.msra.mxu0 %v356
    %1357 = vmatprep.subr.mxu0 %v361
    %1358 = vmatpush1.msra.mxu0 %v360
    %1359 = vmatprep.subr.mxu0 %v365
    %1360 = vmatpush1.msra.mxu0 %v364
    %1361 = vmatprep.subr.mxu0 0.0
    %1362 = vmatpush1.msra.mxu0 0.0
    %1363 = vmatprep.mubr.f32.mxu0 %v1226
    %1364 = vmatmul.mubr.f32.gmra.mrb[0].mxu0 %v1223
    %v1365 = vpop.f32.mrb[0].mxu0
    %v1366 = vadd.f32 %v1295, %v1365
    %v1367 = vpop.f32.mrb[0].mxu0
    %v1368 = vadd.f32 %v1297, %v1367
    %1369 = vdwg.mxu0
    %1370 = vmatprep.subr.mxu0 %v119
    %1371 = vmatpush1.msra.mxu0 %v118
    %1372 = vmatprep.subr.mxu0 %v123
    %1373 = vmatpush1.msra.mxu0 %v122
    %1374 = vmatprep.subr.mxu0 %v127
    %1375 = vmatpush1.msra.mxu0 %v126
    %1376 = vmatprep.subr.mxu0 %v131
    %1377 = vmatpush1.msra.mxu0 %v130
    %1378 = vmatprep.subr.mxu0 %v135
    %1379 = vmatpush1.msra.mxu0 %v134
    %1380 = vmatprep.subr.mxu0 %v139
    %1381 = vmatpush1.msra.mxu0 %v138
    %1382 = vmatprep.subr.mxu0 %v143
    %1383 = vmatpush1.msra.mxu0 %v142
    %1384 = vmatprep.subr.mxu0 %v147
    %1385 = vmatpush1.msra.mxu0 %v146
    %1386 = vmatprep.subr.mxu0 %v151
    %1387 = vmatpush1.msra.mxu0 %v150
    %1388 = vmatprep.subr.mxu0 %v155
    %1389 = vmatpush1.msra.mxu0 %v154
    %1390 = vmatprep.subr.mxu0 %v159
    %1391 = vmatpush1.msra.mxu0 %v158
    %1392 = vmatprep.subr.mxu0 %v163
    %1393 = vmatpush1.msra.mxu0 %v162
    %1394 = vmatprep.subr.mxu0 %v167
    %1395 = vmatpush1.msra.mxu0 %v166
    %1396 = vmatprep.subr.mxu0 %v171
    %1397 = vmatpush1.msra.mxu0 %v170
    %1398 = vmatprep.subr.mxu0 %v175
    %1399 = vmatpush1.msra.mxu0 %v174
    %1400 = vmatprep.subr.mxu0 %v179
    %1401 = vmatpush1.msra.mxu0 %v178
    %1402 = vmatprep.subr.mxu0 %v183
    %1403 = vmatpush1.msra.mxu0 %v182
    %1404 = vmatprep.subr.mxu0 %v187
    %1405 = vmatpush1.msra.mxu0 %v186
    %1406 = vmatprep.subr.mxu0 %v191
    %1407 = vmatpush1.msra.mxu0 %v190
    %1408 = vmatprep.subr.mxu0 %v195
    %1409 = vmatpush1.msra.mxu0 %v194
    %1410 = vmatprep.subr.mxu0 %v199
    %1411 = vmatpush1.msra.mxu0 %v198
    %1412 = vmatprep.subr.mxu0 %v203
    %1413 = vmatpush1.msra.mxu0 %v202
    %1414 = vmatprep.subr.mxu0 %v207
    %1415 = vmatpush1.msra.mxu0 %v206
    %1416 = vmatprep.subr.mxu0 %v211
    %1417 = vmatpush1.msra.mxu0 %v210
    %1418 = vmatprep.subr.mxu0 %v215
    %1419 = vmatpush1.msra.mxu0 %v214
    %1420 = vmatprep.subr.mxu0 %v219
    %1421 = vmatpush1.msra.mxu0 %v218
    %1422 = vmatprep.subr.mxu0 %v223
    %1423 = vmatpush1.msra.mxu0 %v222
    %1424 = vmatprep.subr.mxu0 %v227
    %1425 = vmatpush1.msra.mxu0 %v226
    %1426 = vmatprep.subr.mxu0 %v231
    %1427 = vmatpush1.msra.mxu0 %v230
    %1428 = vmatprep.subr.mxu0 %v235
    %1429 = vmatpush1.msra.mxu0 %v234
    %1430 = vmatprep.subr.mxu0 %v239
    %1431 = vmatpush1.msra.mxu0 %v238
    %1432 = vmatprep.subr.mxu0 %v243
    %1433 = vmatpush1.msra.mxu0 %v242
    %1434 = vmatprep.mubr.f32.mxu0 %v1222
    %1435 = vmatmul.mubr.f32.gmra.mrb[0].mxu0 %v1220
    %v1436 = vpop.f32.mrb[0].mxu0
    %v1437 = vadd.f32 0.0, %v1436
    %v1438 = vpop.f32.mrb[0].mxu0
    %v1439 = vadd.f32 0.0, %v1438
    %1440 = vdwg.mxu0
    %1441 = vmatprep.subr.mxu0 %v247
    %1442 = vmatpush1.msra.mxu0 %v246
    %1443 = vmatprep.subr.mxu0 %v251
    %1444 = vmatpush1.msra.mxu0 %v250
    %1445 = vmatprep.subr.mxu0 %v255
    %1446 = vmatpush1.msra.mxu0 %v254
    %1447 = vmatprep.subr.mxu0 %v259
    %1448 = vmatpush1.msra.mxu0 %v258
    %1449 = vmatprep.subr.mxu0 %v263
    %1450 = vmatpush1.msra.mxu0 %v262
    %1451 = vmatprep.subr.mxu0 %v267
    %1452 = vmatpush1.msra.mxu0 %v266
    %1453 = vmatprep.subr.mxu0 %v271
    %1454 = vmatpush1.msra.mxu0 %v270
    %1455 = vmatprep.subr.mxu0 %v275
    %1456 = vmatpush1.msra.mxu0 %v274
    %1457 = vmatprep.subr.mxu0 %v279
    %1458 = vmatpush1.msra.mxu0 %v278
    %1459 = vmatprep.subr.mxu0 %v283
    %1460 = vmatpush1.msra.mxu0 %v282
    %1461 = vmatprep.subr.mxu0 %v287
    %1462 = vmatpush1.msra.mxu0 %v286
    %1463 = vmatprep.subr.mxu0 %v291
    %1464 = vmatpush1.msra.mxu0 %v290
    %1465 = vmatprep.subr.mxu0 %v295
    %1466 = vmatpush1.msra.mxu0 %v294
    %1467 = vmatprep.subr.mxu0 %v299
    %1468 = vmatpush1.msra.mxu0 %v298
    %1469 = vmatprep.subr.mxu0 %v303
    %1470 = vmatpush1.msra.mxu0 %v302
    %1471 = vmatprep.subr.mxu0 %v307
    %1472 = vmatpush1.msra.mxu0 %v306
    %1473 = vmatprep.subr.mxu0 %v311
    %1474 = vmatpush1.msra.mxu0 %v310
    %1475 = vmatprep.subr.mxu0 %v315
    %1476 = vmatpush1.msra.mxu0 %v314
    %1477 = vmatprep.subr.mxu0 %v319
    %1478 = vmatpush1.msra.mxu0 %v318
    %1479 = vmatprep.subr.mxu0 %v323
    %1480 = vmatpush1.msra.mxu0 %v322
    %1481 = vmatprep.subr.mxu0 %v327
    %1482 = vmatpush1.msra.mxu0 %v326
    %1483 = vmatprep.subr.mxu0 %v331
    %1484 = vmatpush1.msra.mxu0 %v330
    %1485 = vmatprep.subr.mxu0 %v335
    %1486 = vmatpush1.msra.mxu0 %v334
    %1487 = vmatprep.subr.mxu0 %v339
    %1488 = vmatpush1.msra.mxu0 %v338
    %1489 = vmatprep.subr.mxu0 %v343
    %1490 = vmatpush1.msra.mxu0 %v342
    %1491 = vmatprep.subr.mxu0 %v347
    %1492 = vmatpush1.msra.mxu0 %v346
    %1493 = vmatprep.subr.mxu0 %v351
    %1494 = vmatpush1.msra.mxu0 %v350
    %1495 = vmatprep.subr.mxu0 %v355
    %1496 = vmatpush1.msra.mxu0 %v354
    %1497 = vmatprep.subr.mxu0 %v359
    %1498 = vmatpush1.msra.mxu0 %v358
    %1499 = vmatprep.subr.mxu0 %v363
    %1500 = vmatpush1.msra.mxu0 %v362
    %1501 = vmatprep.subr.mxu0 %v367
    %1502 = vmatpush1.msra.mxu0 %v366
    %1503 = vmatprep.subr.mxu0 0.0
    %1504 = vmatpush1.msra.mxu0 0.0
    %1505 = vmatprep.mubr.f32.mxu0 %v1226
    %1506 = vmatmul.mubr.f32.gmra.mrb[0].mxu0 %v1223
    %v1507 = vpop.f32.mrb[0].mxu0
    %v1508 = vadd.f32 %v1437, %v1507
    %v1509 = vpop.f32.mrb[0].mxu0
    %v1510 = vadd.f32 %v1439, %v1509
    %1511 = vdwg.mxu0
    %v1512 = vmax.f32 %v1366, %v1368
    %v1513 = vmax.f32 %v1508, %v1510
    %v1514 = vmax.f32 %v1512, %v1513
    %v1515 = vadd.f32 %v1514, %v664
    %v1516 = vmax.f32 %v1515, 0.0
    %s1517 = scalar_lea.vmem %s3, 256
    %v1518 = vld [vmem:[%s1517] sm:$0xff]
    %v1519 = vld [vmem:[%s1517 + $0x8] sm:$0xff]
    %v1520 = vld [vmem:[%s1517 + $0x10] sm:$0xff]
    %v1521 = vld [vmem:[%s1517 + $0x18] sm:$0xff]
    %v1522 = vld [vmem:[%s1517 + $0x20] sm:$0xff]
    %v1523 = vld [vmem:[%s1517 + $0x28] sm:$0xff]
    %v1524 = vld [vmem:[%s1517 + $0x30] sm:$0xff]
    %v1525 = vld [vmem:[%s1517 + $0x38] sm:$0xff]
    %v1526 = vld [vmem:[%s1517 + $0x40] sm:$0xff]
    %v1527 = vld [vmem:[%s1517 + $0x48] sm:$0xff]
    %v1528 = vld [vmem:[%s1517 + $0x50] sm:$0xff]
    %v1529 = vld [vmem:[%s1517 + $0x58] sm:$0xff]
    %v1530 = vld [vmem:[%s1517 + $0x60] sm:$0xff]
    %v1531 = vld [vmem:[%s1517 + $0x68] sm:$0xff]
    %v1532 = vld [vmem:[%s1517 + $0x70] sm:$0xff]
    %v1533 = vld [vmem:[%s1517 + $0x78] sm:$0xff]
    %1534 = vmatprep.subr.mxu0 0.0
    %1535 = vmatpush1.msra.mxu0 %v1518
    %1536 = vmatprep.subr.mxu0 0.0
    %1537 = vmatpush1.msra.mxu0 %v1519
    %1538 = vmatprep.subr.mxu0 0.0
    %1539 = vmatpush1.msra.mxu0 %v1520
    %1540 = vmatprep.subr.mxu0 0.0
    %1541 = vmatpush1.msra.mxu0 %v1521
    %1542 = vmatprep.subr.mxu0 0.0
    %1543 = vmatpush1.msra.mxu0 %v1522
    %1544 = vmatprep.subr.mxu0 0.0
    %1545 = vmatpush1.msra.mxu0 %v1523
    %1546 = vmatprep.subr.mxu0 0.0
    %1547 = vmatpush1.msra.mxu0 %v1524
    %1548 = vmatprep.subr.mxu0 0.0
    %1549 = vmatpush1.msra.mxu0 %v1525
    %1550 = vmatprep.subr.mxu0 0.0
    %1551 = vmatpush1.msra.mxu0 %v1526
    %1552 = vmatprep.subr.mxu0 0.0
    %1553 = vmatpush1.msra.mxu0 %v1527
    %1554 = vmatprep.subr.mxu0 0.0
    %1555 = vmatpush1.msra.mxu0 %v1528
    %1556 = vmatprep.subr.mxu0 0.0
    %1557 = vmatpush1.msra.mxu0 %v1529
    %1558 = vmatprep.subr.mxu0 0.0
    %1559 = vmatpush1.msra.mxu0 %v1530
    %1560 = vmatprep.subr.mxu0 0.0
    %1561 = vmatpush1.msra.mxu0 %v1531
    %1562 = vmatprep.subr.mxu0 0.0
    %1563 = vmatpush1.msra.mxu0 %v1532
    %1564 = vmatprep.subr.mxu0 0.0
    %1565 = vmatpush1.msra.mxu0 %v1533
    %1566 = vmatprep.subr.mxu0 0.0
    %1567 = vmatpush1.msra.mxu0 0.0
    %1568 = vmatprep.subr.mxu0 0.0
    %1569 = vmatpush1.msra.mxu0 0.0
    %1570 = vmatprep.subr.mxu0 0.0
    %1571 = vmatpush1.msra.mxu0 0.0
    %1572 = vmatprep.subr.mxu0 0.0
    %1573 = vmatpush1.msra.mxu0 0.0
    %1574 = vmatprep.subr.mxu0 0.0
    %1575 = vmatpush1.msra.mxu0 0.0
    %1576 = vmatprep.subr.mxu0 0.0
    %1577 = vmatpush1.msra.mxu0 0.0
    %1578 = vmatprep.subr.mxu0 0.0
    %1579 = vmatpush1.msra.mxu0 0.0
    %1580 = vmatprep.subr.mxu0 0.0
    %1581 = vmatpush1.msra.mxu0 0.0
    %1582 = vmatprep.subr.mxu0 0.0
    %1583 = vmatpush1.msra.mxu0 0.0
    %1584 = vmatprep.subr.mxu0 0.0
    %1585 = vmatpush1.msra.mxu0 0.0
    %1586 = vmatprep.subr.mxu0 0.0
    %1587 = vmatpush1.msra.mxu0 0.0
    %1588 = vmatprep.subr.mxu0 0.0
    %1589 = vmatpush1.msra.mxu0 0.0
    %1590 = vmatprep.subr.mxu0 0.0
    %1591 = vmatpush1.msra.mxu0 0.0
    %1592 = vmatprep.subr.mxu0 0.0
    %1593 = vmatpush1.msra.mxu0 0.0
    %1594 = vmatprep.subr.mxu0 0.0
    %1595 = vmatpush1.msra.mxu0 0.0
    %1596 = vmatprep.subr.mxu0 0.0
    %1597 = vmatpush1.msra.mxu0 0.0
    %1598 = vmatprep.mubr.f32.mxu0 0.0
    %1599 = vmatmul.mubr.f32.gmra.mrb[0].mxu0 %v1516
    %v1600 = vpop.f32.mrb[0].mxu0
    %v1601 = vadd.f32 0.0, %v1600
    %v1602 = vpop.f32.mrb[0].mxu0
    %1603 = vdwg.mxu0
    %v1604 = vadd.f32 %v1182, %v1601
    %s1605 = scalar_lea.vmem %s0, 10
    %v1606 = vld [vmem:[%s1605] sm:$0x1]
    %v1607 = vunpack.c.l.bf16 %v1606
    %s1608 = scalar_lea.vmem %s0, 11
    %v1609 = vld [vmem:[%s1608] sm:$0x1]
    %v1610 = vunpack.c.l.bf16 %v1609
    %1611 = vrot.lane.b32.xlu0 %v794, 84
    %v1612 = vpop.permute.xlu0 %1611
    %1614 = vrot.lane.b32.xlu0 %v1205, 40
    %v1615 = vpop.permute.xlu0 %1614
    %1617 = vrot.lane.b32.xlu0 %v1216, 124
    %v1618 = vpop.permute.xlu0 %1617
    %v1622 = vunpack.c.l.s4 1983009808
    %v1623 = vunpack.c.0.s8 %v1622
    %v1624 = vlaneseq
    %v1625 = vshrl.u32 %v1624, 7
    %v1626 = vsub.s32 %v1623, %v1625
    %v1627 = vrot.slane %v1607, %v1626
    %1628 = vrot.lane.b32.xlu0 %v1627, 80
    %v1629 = vpop.permute.xlu0 %1628
    %v1633 = vunpack.c.l.s4 1983009808
    %v1634 = vunpack.c.0.s8 %v1633
    %v1635 = vlaneseq
    %v1636 = vshrl.u32 %v1635, 7
    %v1637 = vsub.s32 %v1634, %v1636
    %v1638 = vrot.slane %v1610, %v1637
    %1639 = vrot.lane.b32.xlu0 %v1638, 36
    %v1640 = vpop.permute.xlu0 %1639
    %v1642 = vsel %vm106, %v763, %v1612
    %v1643 = vsel %vm108, %v1612, %v1615
    %v1644 = vsel %vm110, %v1643, %v1618
    %v1645 = vsel %vm112, %v1618, %v1629
    %v1646 = vsel %vm114, %v1629, %v1640
    %v1648 = vsel %vm368, %v1646, 0
    %1650 = vmatprep.subr.mxu0 %v117
    %1651 = vmatpush1.msra.mxu0 %v116
    %1652 = vmatprep.subr.mxu0 %v121
    %1653 = vmatpush1.msra.mxu0 %v120
    %1654 = vmatprep.subr.mxu0 %v125
    %1655 = vmatpush1.msra.mxu0 %v124
    %1656 = vmatprep.subr.mxu0 %v129
    %1657 = vmatpush1.msra.mxu0 %v128
    %1658 = vmatprep.subr.mxu0 %v133
    %1659 = vmatpush1.msra.mxu0 %v132
    %1660 = vmatprep.subr.mxu0 %v137
    %1661 = vmatpush1.msra.mxu0 %v136
    %1662 = vmatprep.subr.mxu0 %v141
    %1663 = vmatpush1.msra.mxu0 %v140
    %1664 = vmatprep.subr.mxu0 %v145
    %1665 = vmatpush1.msra.mxu0 %v144
    %1666 = vmatprep.subr.mxu0 %v149
    %1667 = vmatpush1.msra.mxu0 %v148
    %1668 = vmatprep.subr.mxu0 %v153
    %1669 = vmatpush1.msra.mxu0 %v152
    %1670 = vmatprep.subr.mxu0 %v157
    %1671 = vmatpush1.msra.mxu0 %v156
    %1672 = vmatprep.subr.mxu0 %v161
    %1673 = vmatpush1.msra.mxu0 %v160
    %1674 = vmatprep.subr.mxu0 %v165
    %1675 = vmatpush1.msra.mxu0 %v164
    %1676 = vmatprep.subr.mxu0 %v169
    %1677 = vmatpush1.msra.mxu0 %v168
    %1678 = vmatprep.subr.mxu0 %v173
    %1679 = vmatpush1.msra.mxu0 %v172
    %1680 = vmatprep.subr.mxu0 %v177
    %1681 = vmatpush1.msra.mxu0 %v176
    %1682 = vmatprep.subr.mxu0 %v181
    %1683 = vmatpush1.msra.mxu0 %v180
    %1684 = vmatprep.subr.mxu0 %v185
    %1685 = vmatpush1.msra.mxu0 %v184
    %1686 = vmatprep.subr.mxu0 %v189
    %1687 = vmatpush1.msra.mxu0 %v188
    %1688 = vmatprep.subr.mxu0 %v193
    %1689 = vmatpush1.msra.mxu0 %v192
    %1690 = vmatprep.subr.mxu0 %v197
    %1691 = vmatpush1.msra.mxu0 %v196
    %1692 = vmatprep.subr.mxu0 %v201
    %1693 = vmatpush1.msra.mxu0 %v200
    %1694 = vmatprep.subr.mxu0 %v205
    %1695 = vmatpush1.msra.mxu0 %v204
    %1696 = vmatprep.subr.mxu0 %v209
    %1697 = vmatpush1.msra.mxu0 %v208
    %1698 = vmatprep.subr.mxu0 %v213
    %1699 = vmatpush1.msra.mxu0 %v212
    %1700 = vmatprep.subr.mxu0 %v217
    %1701 = vmatpush1.msra.mxu0 %v216
    %1702 = vmatprep.subr.mxu0 %v221
    %1703 = vmatpush1.msra.mxu0 %v220
    %1704 = vmatprep.subr.mxu0 %v225
    %1705 = vmatpush1.msra.mxu0 %v224
    %1706 = vmatprep.subr.mxu0 %v229
    %1707 = vmatpush1.msra.mxu0 %v228
    %1708 = vmatprep.subr.mxu0 %v233
    %1709 = vmatpush1.msra.mxu0 %v232
    %1710 = vmatprep.subr.mxu0 %v237
    %1711 = vmatpush1.msra.mxu0 %v236
    %1712 = vmatprep.subr.mxu0 %v241
    %1713 = vmatpush1.msra.mxu0 %v240
    %1714 = vmatprep.mubr.f32.mxu0 %v1644
    %1715 = vmatmul.mubr.f32.gmra.mrb[0].mxu0 %v1642
    %v1716 = vpop.f32.mrb[0].mxu0
    %v1717 = vadd.f32 0.0, %v1716
    %v1718 = vpop.f32.mrb[0].mxu0
    %v1719 = vadd.f32 0.0, %v1718
    %1720 = vdwg.mxu0
    %1721 = vmatprep.subr.mxu0 %v245
    %1722 = vmatpush1.msra.mxu0 %v244
    %1723 = vmatprep.subr.mxu0 %v249
    %1724 = vmatpush1.msra.mxu0 %v248
    %1725 = vmatprep.subr.mxu0 %v253
    %1726 = vmatpush1.msra.mxu0 %v252
    %1727 = vmatprep.subr.mxu0 %v257
    %1728 = vmatpush1.msra.mxu0 %v256
    %1729 = vmatprep.subr.mxu0 %v261
    %1730 = vmatpush1.msra.mxu0 %v260
    %1731 = vmatprep.subr.mxu0 %v265
    %1732 = vmatpush1.msra.mxu0 %v264
    %1733 = vmatprep.subr.mxu0 %v269
    %1734 = vmatpush1.msra.mxu0 %v268
    %1735 = vmatprep.subr.mxu0 %v273
    %1736 = vmatpush1.msra.mxu0 %v272
    %1737 = vmatprep.subr.mxu0 %v277
    %1738 = vmatpush1.msra.mxu0 %v276
    %1739 = vmatprep.subr.mxu0 %v281
    %1740 = vmatpush1.msra.mxu0 %v280
    %1741 = vmatprep.subr.mxu0 %v285
    %1742 = vmatpush1.msra.mxu0 %v284
    %1743 = vmatprep.subr.mxu0 %v289
    %1744 = vmatpush1.msra.mxu0 %v288
    %1745 = vmatprep.subr.mxu0 %v293
    %1746 = vmatpush1.msra.mxu0 %v292
    %1747 = vmatprep.subr.mxu0 %v297
    %1748 = vmatpush1.msra.mxu0 %v296
    %1749 = vmatprep.subr.mxu0 %v301
    %1750 = vmatpush1.msra.mxu0 %v300
    %1751 = vmatprep.subr.mxu0 %v305
    %1752 = vmatpush1.msra.mxu0 %v304
    %1753 = vmatprep.subr.mxu0 %v309
    %1754 = vmatpush1.msra.mxu0 %v308
    %1755 = vmatprep.subr.mxu0 %v313
    %1756 = vmatpush1.msra.mxu0 %v312
    %1757 = vmatprep.subr.mxu0 %v317
    %1758 = vmatpush1.msra.mxu0 %v316
    %1759 = vmatprep.subr.mxu0 %v321
    %1760 = vmatpush1.msra.mxu0 %v320
    %1761 = vmatprep.subr.mxu0 %v325
    %1762 = vmatpush1.msra.mxu0 %v324
    %1763 = vmatprep.subr.mxu0 %v329
    %1764 = vmatpush1.msra.mxu0 %v328
    %1765 = vmatprep.subr.mxu0 %v333
    %1766 = vmatpush1.msra.mxu0 %v332
    %1767 = vmatprep.subr.mxu0 %v337
    %1768 = vmatpush1.msra.mxu0 %v336
    %1769 = vmatprep.subr.mxu0 %v341
    %1770 = vmatpush1.msra.mxu0 %v340
    %1771 = vmatprep.subr.mxu0 %v345
    %1772 = vmatpush1.msra.mxu0 %v344
    %1773 = vmatprep.subr.mxu0 %v349
    %1774 = vmatpush1.msra.mxu0 %v348
    %1775 = vmatprep.subr.mxu0 %v353
    %1776 = vmatpush1.msra.mxu0 %v352
    %1777 = vmatprep.subr.mxu0 %v357
    %1778 = vmatpush1.msra.mxu0 %v356
    %1779 = vmatprep.subr.mxu0 %v361
    %1780 = vmatpush1.msra.mxu0 %v360
    %1781 = vmatprep.subr.mxu0 %v365
    %1782 = vmatpush1.msra.mxu0 %v364
    %1783 = vmatprep.subr.mxu0 0.0
    %1784 = vmatpush1.msra.mxu0 0.0
    %1785 = vmatprep.mubr.f32.mxu0 %v1648
    %1786 = vmatmul.mubr.f32.gmra.mrb[0].mxu0 %v1645
    %v1787 = vpop.f32.mrb[0].mxu0
    %v1788 = vadd.f32 %v1717, %v1787
    %v1789 = vpop.f32.mrb[0].mxu0
    %v1790 = vadd.f32 %v1719, %v1789
    %1791 = vdwg.mxu0
    %1792 = vmatprep.subr.mxu0 %v119
    %1793 = vmatpush1.msra.mxu0 %v118
    %1794 = vmatprep.subr.mxu0 %v123
    %1795 = vmatpush1.msra.mxu0 %v122
    %1796 = vmatprep.subr.mxu0 %v127
    %1797 = vmatpush1.msra.mxu0 %v126
    %1798 = vmatprep.subr.mxu0 %v131
    %1799 = vmatpush1.msra.mxu0 %v130
    %1800 = vmatprep.subr.mxu0 %v135
    %1801 = vmatpush1.msra.mxu0 %v134
    %1802 = vmatprep.subr.mxu0 %v139
    %1803 = vmatpush1.msra.mxu0 %v138
    %1804 = vmatprep.subr.mxu0 %v143
    %1805 = vmatpush1.msra.mxu0 %v142
    %1806 = vmatprep.subr.mxu0 %v147
    %1807 = vmatpush1.msra.mxu0 %v146
    %1808 = vmatprep.subr.mxu0 %v151
    %1809 = vmatpush1.msra.mxu0 %v150
    %1810 = vmatprep.subr.mxu0 %v155
    %1811 = vmatpush1.msra.mxu0 %v154
    %1812 = vmatprep.subr.mxu0 %v159
    %1813 = vmatpush1.msra.mxu0 %v158
    %1814 = vmatprep.subr.mxu0 %v163
    %1815 = vmatpush1.msra.mxu0 %v162
    %1816 = vmatprep.subr.mxu0 %v167
    %1817 = vmatpush1.msra.mxu0 %v166
    %1818 = vmatprep.subr.mxu0 %v171
    %1819 = vmatpush1.msra.mxu0 %v170
    %1820 = vmatprep.subr.mxu0 %v175
    %1821 = vmatpush1.msra.mxu0 %v174
    %1822 = vmatprep.subr.mxu0 %v179
    %1823 = vmatpush1.msra.mxu0 %v178
    %1824 = vmatprep.subr.mxu0 %v183
    %1825 = vmatpush1.msra.mxu0 %v182
    %1826 = vmatprep.subr.mxu0 %v187
    %1827 = vmatpush1.msra.mxu0 %v186
    %1828 = vmatprep.subr.mxu0 %v191
    %1829 = vmatpush1.msra.mxu0 %v190
    %1830 = vmatprep.subr.mxu0 %v195
    %1831 = vmatpush1.msra.mxu0 %v194
    %1832 = vmatprep.subr.mxu0 %v199
    %1833 = vmatpush1.msra.mxu0 %v198
    %1834 = vmatprep.subr.mxu0 %v203
    %1835 = vmatpush1.msra.mxu0 %v202
    %1836 = vmatprep.subr.mxu0 %v207
    %1837 = vmatpush1.msra.mxu0 %v206
    %1838 = vmatprep.subr.mxu0 %v211
    %1839 = vmatpush1.msra.mxu0 %v210
    %1840 = vmatprep.subr.mxu0 %v215
    %1841 = vmatpush1.msra.mxu0 %v214
    %1842 = vmatprep.subr.mxu0 %v219
    %1843 = vmatpush1.msra.mxu0 %v218
    %1844 = vmatprep.subr.mxu0 %v223
    %1845 = vmatpush1.msra.mxu0 %v222
    %1846 = vmatprep.subr.mxu0 %v227
    %1847 = vmatpush1.msra.mxu0 %v226
    %1848 = vmatprep.subr.mxu0 %v231
    %1849 = vmatpush1.msra.mxu0 %v230
    %1850 = vmatprep.subr.mxu0 %v235
    %1851 = vmatpush1.msra.mxu0 %v234
    %1852 = vmatprep.subr.mxu0 %v239
    %1853 = vmatpush1.msra.mxu0 %v238
    %1854 = vmatprep.subr.mxu0 %v243
    %1855 = vmatpush1.msra.mxu0 %v242
    %1856 = vmatprep.mubr.f32.mxu0 %v1644
    %1857 = vmatmul.mubr.f32.gmra.mrb[0].mxu0 %v1642
    %v1858 = vpop.f32.mrb[0].mxu0
    %v1859 = vadd.f32 0.0, %v1858
    %v1860 = vpop.f32.mrb[0].mxu0
    %v1861 = vadd.f32 0.0, %v1860
    %1862 = vdwg.mxu0
    %1863 = vmatprep.subr.mxu0 %v247
    %1864 = vmatpush1.msra.mxu0 %v246
    %1865 = vmatprep.subr.mxu0 %v251
    %1866 = vmatpush1.msra.mxu0 %v250
    %1867 = vmatprep.subr.mxu0 %v255
    %1868 = vmatpush1.msra.mxu0 %v254
    %1869 = vmatprep.subr.mxu0 %v259
    %1870 = vmatpush1.msra.mxu0 %v258
    %1871 = vmatprep.subr.mxu0 %v263
    %1872 = vmatpush1.msra.mxu0 %v262
    %1873 = vmatprep.subr.mxu0 %v267
    %1874 = vmatpush1.msra.mxu0 %v266
    %1875 = vmatprep.subr.mxu0 %v271
    %1876 = vmatpush1.msra.mxu0 %v270
    %1877 = vmatprep.subr.mxu0 %v275
    %1878 = vmatpush1.msra.mxu0 %v274
    %1879 = vmatprep.subr.mxu0 %v279
    %1880 = vmatpush1.msra.mxu0 %v278
    %1881 = vmatprep.subr.mxu0 %v283
    %1882 = vmatpush1.msra.mxu0 %v282
    %1883 = vmatprep.subr.mxu0 %v287
    %1884 = vmatpush1.msra.mxu0 %v286
    %1885 = vmatprep.subr.mxu0 %v291
    %1886 = vmatpush1.msra.mxu0 %v290
    %1887 = vmatprep.subr.mxu0 %v295
    %1888 = vmatpush1.msra.mxu0 %v294
    %1889 = vmatprep.subr.mxu0 %v299
    %1890 = vmatpush1.msra.mxu0 %v298
    %1891 = vmatprep.subr.mxu0 %v303
    %1892 = vmatpush1.msra.mxu0 %v302
    %1893 = vmatprep.subr.mxu0 %v307
    %1894 = vmatpush1.msra.mxu0 %v306
    %1895 = vmatprep.subr.mxu0 %v311
    %1896 = vmatpush1.msra.mxu0 %v310
    %1897 = vmatprep.subr.mxu0 %v315
    %1898 = vmatpush1.msra.mxu0 %v314
    %1899 = vmatprep.subr.mxu0 %v319
    %1900 = vmatpush1.msra.mxu0 %v318
    %1901 = vmatprep.subr.mxu0 %v323
    %1902 = vmatpush1.msra.mxu0 %v322
    %1903 = vmatprep.subr.mxu0 %v327
    %1904 = vmatpush1.msra.mxu0 %v326
    %1905 = vmatprep.subr.mxu0 %v331
    %1906 = vmatpush1.msra.mxu0 %v330
    %1907 = vmatprep.subr.mxu0 %v335
    %1908 = vmatpush1.msra.mxu0 %v334
    %1909 = vmatprep.subr.mxu0 %v339
    %1910 = vmatpush1.msra.mxu0 %v338
    %1911 = vmatprep.subr.mxu0 %v343
    %1912 = vmatpush1.msra.mxu0 %v342
    %1913 = vmatprep.subr.mxu0 %v347
    %1914 = vmatpush1.msra.mxu0 %v346
    %1915 = vmatprep.subr.mxu0 %v351
    %1916 = vmatpush1.msra.mxu0 %v350
    %1917 = vmatprep.subr.mxu0 %v355
    %1918 = vmatpush1.msra.mxu0 %v354
    %1919 = vmatprep.subr.mxu0 %v359
    %1920 = vmatpush1.msra.mxu0 %v358
    %1921 = vmatprep.subr.mxu0 %v363
    %1922 = vmatpush1.msra.mxu0 %v362
    %1923 = vmatprep.subr.mxu0 %v367
    %1924 = vmatpush1.msra.mxu0 %v366
    %1925 = vmatprep.subr.mxu0 0.0
    %1926 = vmatpush1.msra.mxu0 0.0
    %1927 = vmatprep.mubr.f32.mxu0 %v1648
    %1928 = vmatmul.mubr.f32.gmra.mrb[0].mxu0 %v1645
    %v1929 = vpop.f32.mrb[0].mxu0
    %v1930 = vadd.f32 %v1859, %v1929
    %v1931 = vpop.f32.mrb[0].mxu0
    %v1932 = vadd.f32 %v1861, %v1931
    %1933 = vdwg.mxu0
    %v1934 = vmax.f32 %v1788, %v1790
    %v1935 = vmax.f32 %v1930, %v1932
    %v1936 = vmax.f32 %v1934, %v1935
    %v1937 = vadd.f32 %v1936, %v664
    %v1938 = vmax.f32 %v1937, 0.0
    %s1939 = scalar_lea.vmem %s3, 384
    %v1940 = vld [vmem:[%s1939] sm:$0xff]
    %v1941 = vld [vmem:[%s1939 + $0x8] sm:$0xff]
    %v1942 = vld [vmem:[%s1939 + $0x10] sm:$0xff]
    %v1943 = vld [vmem:[%s1939 + $0x18] sm:$0xff]
    %v1944 = vld [vmem:[%s1939 + $0x20] sm:$0xff]
    %v1945 = vld [vmem:[%s1939 + $0x28] sm:$0xff]
    %v1946 = vld [vmem:[%s1939 + $0x30] sm:$0xff]
    %v1947 = vld [vmem:[%s1939 + $0x38] sm:$0xff]
    %v1948 = vld [vmem:[%s1939 + $0x40] sm:$0xff]
    %v1949 = vld [vmem:[%s1939 + $0x48] sm:$0xff]
    %v1950 = vld [vmem:[%s1939 + $0x50] sm:$0xff]
    %v1951 = vld [vmem:[%s1939 + $0x58] sm:$0xff]
    %v1952 = vld [vmem:[%s1939 + $0x60] sm:$0xff]
    %v1953 = vld [vmem:[%s1939 + $0x68] sm:$0xff]
    %v1954 = vld [vmem:[%s1939 + $0x70] sm:$0xff]
    %v1955 = vld [vmem:[%s1939 + $0x78] sm:$0xff]
    %1956 = vmatprep.subr.mxu0 0.0
    %1957 = vmatpush1.msra.mxu0 %v1940
    %1958 = vmatprep.subr.mxu0 0.0
    %1959 = vmatpush1.msra.mxu0 %v1941
    %1960 = vmatprep.subr.mxu0 0.0
    %1961 = vmatpush1.msra.mxu0 %v1942
    %1962 = vmatprep.subr.mxu0 0.0
    %1963 = vmatpush1.msra.mxu0 %v1943
    %1964 = vmatprep.subr.mxu0 0.0
    %1965 = vmatpush1.msra.mxu0 %v1944
    %1966 = vmatprep.subr.mxu0 0.0
    %1967 = vmatpush1.msra.mxu0 %v1945
    %1968 = vmatprep.subr.mxu0 0.0
    %1969 = vmatpush1.msra.mxu0 %v1946
    %1970 = vmatprep.subr.mxu0 0.0
    %1971 = vmatpush1.msra.mxu0 %v1947
    %1972 = vmatprep.subr.mxu0 0.0
    %1973 = vmatpush1.msra.mxu0 %v1948
    %1974 = vmatprep.subr.mxu0 0.0
    %1975 = vmatpush1.msra.mxu0 %v1949
    %1976 = vmatprep.subr.mxu0 0.0
    %1977 = vmatpush1.msra.mxu0 %v1950
    %1978 = vmatprep.subr.mxu0 0.0
    %1979 = vmatpush1.msra.mxu0 %v1951
    %1980 = vmatprep.subr.mxu0 0.0
    %1981 = vmatpush1.msra.mxu0 %v1952
    %1982 = vmatprep.subr.mxu0 0.0
    %1983 = vmatpush1.msra.mxu0 %v1953
    %1984 = vmatprep.subr.mxu0 0.0
    %1985 = vmatpush1.msra.mxu0 %v1954
    %1986 = vmatprep.subr.mxu0 0.0
    %1987 = vmatpush1.msra.mxu0 %v1955
    %1988 = vmatprep.subr.mxu0 0.0
    %1989 = vmatpush1.msra.mxu0 0.0
    %1990 = vmatprep.subr.mxu0 0.0
    %1991 = vmatpush1.msra.mxu0 0.0
    %1992 = vmatprep.subr.mxu0 0.0
    %1993 = vmatpush1.msra.mxu0 0.0
    %1994 = vmatprep.subr.mxu0 0.0
    %1995 = vmatpush1.msra.mxu0 0.0
    %1996 = vmatprep.subr.mxu0 0.0
    %1997 = vmatpush1.msra.mxu0 0.0
    %1998 = vmatprep.subr.mxu0 0.0
    %1999 = vmatpush1.msra.mxu0 0.0
    %2000 = vmatprep.subr.mxu0 0.0
    %2001 = vmatpush1.msra.mxu0 0.0
    %2002 = vmatprep.subr.mxu0 0.0
    %2003 = vmatpush1.msra.mxu0 0.0
    %2004 = vmatprep.subr.mxu0 0.0
    %2005 = vmatpush1.msra.mxu0 0.0
    %2006 = vmatprep.subr.mxu0 0.0
    %2007 = vmatpush1.msra.mxu0 0.0
    %2008 = vmatprep.subr.mxu0 0.0
    %2009 = vmatpush1.msra.mxu0 0.0
    %2010 = vmatprep.subr.mxu0 0.0
    %2011 = vmatpush1.msra.mxu0 0.0
    %2012 = vmatprep.subr.mxu0 0.0
    %2013 = vmatpush1.msra.mxu0 0.0
    %2014 = vmatprep.subr.mxu0 0.0
    %2015 = vmatpush1.msra.mxu0 0.0
    %2016 = vmatprep.subr.mxu0 0.0
    %2017 = vmatpush1.msra.mxu0 0.0
    %2018 = vmatprep.subr.mxu0 0.0
    %2019 = vmatpush1.msra.mxu0 0.0
    %2020 = vmatprep.mubr.f32.mxu0 0.0
    %2021 = vmatmul.mubr.f32.gmra.mrb[0].mxu0 %v1938
    %v2022 = vpop.f32.mrb[0].mxu0
    %v2023 = vadd.f32 0.0, %v2022
    %v2024 = vpop.f32.mrb[0].mxu0
    %2025 = vdwg.mxu0
    %v2026 = vadd.f32 %v1604, %v2023
    %s2027 = scalar_lea.vmem %s0, 12
    %v2028 = vld [vmem:[%s2027] sm:$0x1]
    %v2029 = vunpack.c.l.bf16 %v2028
    %s2030 = scalar_lea.vmem %s0, 13
    %v2031 = vld [vmem:[%s2030] sm:$0x1]
    %v2032 = vunpack.c.l.bf16 %v2031
    %2033 = vrot.lane.b32.xlu0 %v1216, 84
    %v2034 = vpop.permute.xlu0 %2033
    %2036 = vrot.lane.b32.xlu0 %v1627, 40
    %v2037 = vpop.permute.xlu0 %2036
    %2039 = vrot.lane.b32.xlu0 %v1638, 124
    %v2040 = vpop.permute.xlu0 %2039
    %v2044 = vunpack.c.l.s4 1983009808
    %v2045 = vunpack.c.0.s8 %v2044
    %v2046 = vlaneseq
    %v2047 = vshrl.u32 %v2046, 7
    %v2048 = vsub.s32 %v2045, %v2047
    %v2049 = vrot.slane %v2029, %v2048
    %2050 = vrot.lane.b32.xlu0 %v2049, 80
    %v2051 = vpop.permute.xlu0 %2050
    %v2055 = vunpack.c.l.s4 1983009808
    %v2056 = vunpack.c.0.s8 %v2055
    %v2057 = vlaneseq
    %v2058 = vshrl.u32 %v2057, 7
    %v2059 = vsub.s32 %v2056, %v2058
    %v2060 = vrot.slane %v2032, %v2059
    %2061 = vrot.lane.b32.xlu0 %v2060, 36
    %v2062 = vpop.permute.xlu0 %2061
    %v2064 = vsel %vm106, %v1185, %v2034
    %v2065 = vsel %vm108, %v2034, %v2037
    %v2066 = vsel %vm110, %v2065, %v2040
    %v2067 = vsel %vm112, %v2040, %v2051
    %v2068 = vsel %vm114, %v2051, %v2062
    %v2070 = vsel %vm368, %v2068, 0
    %2072 = vmatprep.subr.mxu0 %v117
    %2073 = vmatpush1.msra.mxu0 %v116
    %2074 = vmatprep.subr.mxu0 %v121
    %2075 = vmatpush1.msra.mxu0 %v120
    %2076 = vmatprep.subr.mxu0 %v125
    %2077 = vmatpush1.msra.mxu0 %v124
    %2078 = vmatprep.subr.mxu0 %v129
    %2079 = vmatpush1.msra.mxu0 %v128
    %2080 = vmatprep.subr.mxu0 %v133
    %2081 = vmatpush1.msra.mxu0 %v132
    %2082 = vmatprep.subr.mxu0 %v137
    %2083 = vmatpush1.msra.mxu0 %v136
    %2084 = vmatprep.subr.mxu0 %v141
    %2085 = vmatpush1.msra.mxu0 %v140
    %2086 = vmatprep.subr.mxu0 %v145
    %2087 = vmatpush1.msra.mxu0 %v144
    %2088 = vmatprep.subr.mxu0 %v149
    %2089 = vmatpush1.msra.mxu0 %v148
    %2090 = vmatprep.subr.mxu0 %v153
    %2091 = vmatpush1.msra.mxu0 %v152
    %2092 = vmatprep.subr.mxu0 %v157
    %2093 = vmatpush1.msra.mxu0 %v156
    %2094 = vmatprep.subr.mxu0 %v161
    %2095 = vmatpush1.msra.mxu0 %v160
    %2096 = vmatprep.subr.mxu0 %v165
    %2097 = vmatpush1.msra.mxu0 %v164
    %2098 = vmatprep.subr.mxu0 %v169
    %2099 = vmatpush1.msra.mxu0 %v168
    %2100 = vmatprep.subr.mxu0 %v173
    %2101 = vmatpush1.msra.mxu0 %v172
    %2102 = vmatprep.subr.mxu0 %v177
    %2103 = vmatpush1.msra.mxu0 %v176
    %2104 = vmatprep.subr.mxu0 %v181
    %2105 = vmatpush1.msra.mxu0 %v180
    %2106 = vmatprep.subr.mxu0 %v185
    %2107 = vmatpush1.msra.mxu0 %v184
    %2108 = vmatprep.subr.mxu0 %v189
    %2109 = vmatpush1.msra.mxu0 %v188
    %2110 = vmatprep.subr.mxu0 %v193
    %2111 = vmatpush1.msra.mxu0 %v192
    %2112 = vmatprep.subr.mxu0 %v197
    %2113 = vmatpush1.msra.mxu0 %v196
    %2114 = vmatprep.subr.mxu0 %v201
    %2115 = vmatpush1.msra.mxu0 %v200
    %2116 = vmatprep.subr.mxu0 %v205
    %2117 = vmatpush1.msra.mxu0 %v204
    %2118 = vmatprep.subr.mxu0 %v209
    %2119 = vmatpush1.msra.mxu0 %v208
    %2120 = vmatprep.subr.mxu0 %v213
    %2121 = vmatpush1.msra.mxu0 %v212
    %2122 = vmatprep.subr.mxu0 %v217
    %2123 = vmatpush1.msra.mxu0 %v216
    %2124 = vmatprep.subr.mxu0 %v221
    %2125 = vmatpush1.msra.mxu0 %v220
    %2126 = vmatprep.subr.mxu0 %v225
    %2127 = vmatpush1.msra.mxu0 %v224
    %2128 = vmatprep.subr.mxu0 %v229
    %2129 = vmatpush1.msra.mxu0 %v228
    %2130 = vmatprep.subr.mxu0 %v233
    %2131 = vmatpush1.msra.mxu0 %v232
    %2132 = vmatprep.subr.mxu0 %v237
    %2133 = vmatpush1.msra.mxu0 %v236
    %2134 = vmatprep.subr.mxu0 %v241
    %2135 = vmatpush1.msra.mxu0 %v240
    %2136 = vmatprep.mubr.f32.mxu0 %v2066
    %2137 = vmatmul.mubr.f32.gmra.mrb[0].mxu0 %v2064
    %v2138 = vpop.f32.mrb[0].mxu0
    %v2139 = vadd.f32 0.0, %v2138
    %v2140 = vpop.f32.mrb[0].mxu0
    %v2141 = vadd.f32 0.0, %v2140
    %2142 = vdwg.mxu0
    %2143 = vmatprep.subr.mxu0 %v245
    %2144 = vmatpush1.msra.mxu0 %v244
    %2145 = vmatprep.subr.mxu0 %v249
    %2146 = vmatpush1.msra.mxu0 %v248
    %2147 = vmatprep.subr.mxu0 %v253
    %2148 = vmatpush1.msra.mxu0 %v252
    %2149 = vmatprep.subr.mxu0 %v257
    %2150 = vmatpush1.msra.mxu0 %v256
    %2151 = vmatprep.subr.mxu0 %v261
    %2152 = vmatpush1.msra.mxu0 %v260
    %2153 = vmatprep.subr.mxu0 %v265
    %2154 = vmatpush1.msra.mxu0 %v264
    %2155 = vmatprep.subr.mxu0 %v269
    %2156 = vmatpush1.msra.mxu0 %v268
    %2157 = vmatprep.subr.mxu0 %v273
    %2158 = vmatpush1.msra.mxu0 %v272
    %2159 = vmatprep.subr.mxu0 %v277
    %2160 = vmatpush1.msra.mxu0 %v276
    %2161 = vmatprep.subr.mxu0 %v281
    %2162 = vmatpush1.msra.mxu0 %v280
    %2163 = vmatprep.subr.mxu0 %v285
    %2164 = vmatpush1.msra.mxu0 %v284
    %2165 = vmatprep.subr.mxu0 %v289
    %2166 = vmatpush1.msra.mxu0 %v288
    %2167 = vmatprep.subr.mxu0 %v293
    %2168 = vmatpush1.msra.mxu0 %v292
    %2169 = vmatprep.subr.mxu0 %v297
    %2170 = vmatpush1.msra.mxu0 %v296
    %2171 = vmatprep.subr.mxu0 %v301
    %2172 = vmatpush1.msra.mxu0 %v300
    %2173 = vmatprep.subr.mxu0 %v305
    %2174 = vmatpush1.msra.mxu0 %v304
    %2175 = vmatprep.subr.mxu0 %v309
    %2176 = vmatpush1.msra.mxu0 %v308
    %2177 = vmatprep.subr.mxu0 %v313
    %2178 = vmatpush1.msra.mxu0 %v312
    %2179 = vmatprep.subr.mxu0 %v317
    %2180 = vmatpush1.msra.mxu0 %v316
    %2181 = vmatprep.subr.mxu0 %v321
    %2182 = vmatpush1.msra.mxu0 %v320
    %2183 = vmatprep.subr.mxu0 %v325
    %2184 = vmatpush1.msra.mxu0 %v324
    %2185 = vmatprep.subr.mxu0 %v329
    %2186 = vmatpush1.msra.mxu0 %v328
    %2187 = vmatprep.subr.mxu0 %v333
    %2188 = vmatpush1.msra.mxu0 %v332
    %2189 = vmatprep.subr.mxu0 %v337
    %2190 = vmatpush1.msra.mxu0 %v336
    %2191 = vmatprep.subr.mxu0 %v341
    %2192 = vmatpush1.msra.mxu0 %v340
    %2193 = vmatprep.subr.mxu0 %v345
    %2194 = vmatpush1.msra.mxu0 %v344
    %2195 = vmatprep.subr.mxu0 %v349
    %2196 = vmatpush1.msra.mxu0 %v348
    %2197 = vmatprep.subr.mxu0 %v353
    %2198 = vmatpush1.msra.mxu0 %v352
    %2199 = vmatprep.subr.mxu0 %v357
    %2200 = vmatpush1.msra.mxu0 %v356
    %2201 = vmatprep.subr.mxu0 %v361
    %2202 = vmatpush1.msra.mxu0 %v360
    %2203 = vmatprep.subr.mxu0 %v365
    %2204 = vmatpush1.msra.mxu0 %v364
    %2205 = vmatprep.subr.mxu0 0.0
    %2206 = vmatpush1.msra.mxu0 0.0
    %2207 = vmatprep.mubr.f32.mxu0 %v2070
    %2208 = vmatmul.mubr.f32.gmra.mrb[0].mxu0 %v2067
    %v2209 = vpop.f32.mrb[0].mxu0
    %v2210 = vadd.f32 %v2139, %v2209
    %v2211 = vpop.f32.mrb[0].mxu0
    %v2212 = vadd.f32 %v2141, %v2211
    %2213 = vdwg.mxu0
    %2214 = vmatprep.subr.mxu0 %v119
    %2215 = vmatpush1.msra.mxu0 %v118
    %2216 = vmatprep.subr.mxu0 %v123
    %2217 = vmatpush1.msra.mxu0 %v122
    %2218 = vmatprep.subr.mxu0 %v127
    %2219 = vmatpush1.msra.mxu0 %v126
    %2220 = vmatprep.subr.mxu0 %v131
    %2221 = vmatpush1.msra.mxu0 %v130
    %2222 = vmatprep.subr.mxu0 %v135
    %2223 = vmatpush1.msra.mxu0 %v134
    %2224 = vmatprep.subr.mxu0 %v139
    %2225 = vmatpush1.msra.mxu0 %v138
    %2226 = vmatprep.subr.mxu0 %v143
    %2227 = vmatpush1.msra.mxu0 %v142
    %2228 = vmatprep.subr.mxu0 %v147
    %2229 = vmatpush1.msra.mxu0 %v146
    %2230 = vmatprep.subr.mxu0 %v151
    %2231 = vmatpush1.msra.mxu0 %v150
    %2232 = vmatprep.subr.mxu0 %v155
    %2233 = vmatpush1.msra.mxu0 %v154
    %2234 = vmatprep.subr.mxu0 %v159
    %2235 = vmatpush1.msra.mxu0 %v158
    %2236 = vmatprep.subr.mxu0 %v163
    %2237 = vmatpush1.msra.mxu0 %v162
    %2238 = vmatprep.subr.mxu0 %v167
    %2239 = vmatpush1.msra.mxu0 %v166
    %2240 = vmatprep.subr.mxu0 %v171
    %2241 = vmatpush1.msra.mxu0 %v170
    %2242 = vmatprep.subr.mxu0 %v175
    %2243 = vmatpush1.msra.mxu0 %v174
    %2244 = vmatprep.subr.mxu0 %v179
    %2245 = vmatpush1.msra.mxu0 %v178
    %2246 = vmatprep.subr.mxu0 %v183
    %2247 = vmatpush1.msra.mxu0 %v182
    %2248 = vmatprep.subr.mxu0 %v187
    %2249 = vmatpush1.msra.mxu0 %v186
    %2250 = vmatprep.subr.mxu0 %v191
    %2251 = vmatpush1.msra.mxu0 %v190
    %2252 = vmatprep.subr.mxu0 %v195
    %2253 = vmatpush1.msra.mxu0 %v194
    %2254 = vmatprep.subr.mxu0 %v199
    %2255 = vmatpush1.msra.mxu0 %v198
    %2256 = vmatprep.subr.mxu0 %v203
    %2257 = vmatpush1.msra.mxu0 %v202
    %2258 = vmatprep.subr.mxu0 %v207
    %2259 = vmatpush1.msra.mxu0 %v206
    %2260 = vmatprep.subr.mxu0 %v211
    %2261 = vmatpush1.msra.mxu0 %v210
    %2262 = vmatprep.subr.mxu0 %v215
    %2263 = vmatpush1.msra.mxu0 %v214
    %2264 = vmatprep.subr.mxu0 %v219
    %2265 = vmatpush1.msra.mxu0 %v218
    %2266 = vmatprep.subr.mxu0 %v223
    %2267 = vmatpush1.msra.mxu0 %v222
    %2268 = vmatprep.subr.mxu0 %v227
    %2269 = vmatpush1.msra.mxu0 %v226
    %2270 = vmatprep.subr.mxu0 %v231
    %2271 = vmatpush1.msra.mxu0 %v230
    %2272 = vmatprep.subr.mxu0 %v235
    %2273 = vmatpush1.msra.mxu0 %v234
    %2274 = vmatprep.subr.mxu0 %v239
    %2275 = vmatpush1.msra.mxu0 %v238
    %2276 = vmatprep.subr.mxu0 %v243
    %2277 = vmatpush1.msra.mxu0 %v242
    %2278 = vmatprep.mubr.f32.mxu0 %v2066
    %2279 = vmatmul.mubr.f32.gmra.mrb[0].mxu0 %v2064
    %v2280 = vpop.f32.mrb[0].mxu0
    %v2281 = vadd.f32 0.0, %v2280
    %v2282 = vpop.f32.mrb[0].mxu0
    %v2283 = vadd.f32 0.0, %v2282
    %2284 = vdwg.mxu0
    %2285 = vmatprep.subr.mxu0 %v247
    %2286 = vmatpush1.msra.mxu0 %v246
    %2287 = vmatprep.subr.mxu0 %v251
    %2288 = vmatpush1.msra.mxu0 %v250
    %2289 = vmatprep.subr.mxu0 %v255
    %2290 = vmatpush1.msra.mxu0 %v254
    %2291 = vmatprep.subr.mxu0 %v259
    %2292 = vmatpush1.msra.mxu0 %v258
    %2293 = vmatprep.subr.mxu0 %v263
    %2294 = vmatpush1.msra.mxu0 %v262
    %2295 = vmatprep.subr.mxu0 %v267
    %2296 = vmatpush1.msra.mxu0 %v266
    %2297 = vmatprep.subr.mxu0 %v271
    %2298 = vmatpush1.msra.mxu0 %v270
    %2299 = vmatprep.subr.mxu0 %v275
    %2300 = vmatpush1.msra.mxu0 %v274
    %2301 = vmatprep.subr.mxu0 %v279
    %2302 = vmatpush1.msra.mxu0 %v278
    %2303 = vmatprep.subr.mxu0 %v283
    %2304 = vmatpush1.msra.mxu0 %v282
    %2305 = vmatprep.subr.mxu0 %v287
    %2306 = vmatpush1.msra.mxu0 %v286
    %2307 = vmatprep.subr.mxu0 %v291
    %2308 = vmatpush1.msra.mxu0 %v290
    %2309 = vmatprep.subr.mxu0 %v295
    %2310 = vmatpush1.msra.mxu0 %v294
    %2311 = vmatprep.subr.mxu0 %v299
    %2312 = vmatpush1.msra.mxu0 %v298
    %2313 = vmatprep.subr.mxu0 %v303
    %2314 = vmatpush1.msra.mxu0 %v302
    %2315 = vmatprep.subr.mxu0 %v307
    %2316 = vmatpush1.msra.mxu0 %v306
    %2317 = vmatprep.subr.mxu0 %v311
    %2318 = vmatpush1.msra.mxu0 %v310
    %2319 = vmatprep.subr.mxu0 %v315
    %2320 = vmatpush1.msra.mxu0 %v314
    %2321 = vmatprep.subr.mxu0 %v319
    %2322 = vmatpush1.msra.mxu0 %v318
    %2323 = vmatprep.subr.mxu0 %v323
    %2324 = vmatpush1.msra.mxu0 %v322
    %2325 = vmatprep.subr.mxu0 %v327
    %2326 = vmatpush1.msra.mxu0 %v326
    %2327 = vmatprep.subr.mxu0 %v331
    %2328 = vmatpush1.msra.mxu0 %v330
    %2329 = vmatprep.subr.mxu0 %v335
    %2330 = vmatpush1.msra.mxu0 %v334
    %2331 = vmatprep.subr.mxu0 %v339
    %2332 = vmatpush1.msra.mxu0 %v338
    %2333 = vmatprep.subr.mxu0 %v343
    %2334 = vmatpush1.msra.mxu0 %v342
    %2335 = vmatprep.subr.mxu0 %v347
    %2336 = vmatpush1.msra.mxu0 %v346
    %2337 = vmatprep.subr.mxu0 %v351
    %2338 = vmatpush1.msra.mxu0 %v350
    %2339 = vmatprep.subr.mxu0 %v355
    %2340 = vmatpush1.msra.mxu0 %v354
    %2341 = vmatprep.subr.mxu0 %v359
    %2342 = vmatpush1.msra.mxu0 %v358
    %2343 = vmatprep.subr.mxu0 %v363
    %2344 = vmatpush1.msra.mxu0 %v362
    %2345 = vmatprep.subr.mxu0 %v367
    %2346 = vmatpush1.msra.mxu0 %v366
    %2347 = vmatprep.subr.mxu0 0.0
    %2348 = vmatpush1.msra.mxu0 0.0
    %2349 = vmatprep.mubr.f32.mxu0 %v2070
    %2350 = vmatmul.mubr.f32.gmra.mrb[0].mxu0 %v2067
    %v2351 = vpop.f32.mrb[0].mxu0
    %v2352 = vadd.f32 %v2281, %v2351
    %v2353 = vpop.f32.mrb[0].mxu0
    %v2354 = vadd.f32 %v2283, %v2353
    %2355 = vdwg.mxu0
    %v2356 = vmax.f32 %v2210, %v2212
    %v2357 = vmax.f32 %v2352, %v2354
    %v2358 = vmax.f32 %v2356, %v2357
    %v2359 = vadd.f32 %v2358, %v664
    %v2360 = vmax.f32 %v2359, 0.0
    %s2361 = scalar_lea.vmem %s3, 512
    %v2362 = vld [vmem:[%s2361] sm:$0xff]
    %v2363 = vld [vmem:[%s2361 + $0x8] sm:$0xff]
    %v2364 = vld [vmem:[%s2361 + $0x10] sm:$0xff]
    %v2365 = vld [vmem:[%s2361 + $0x18] sm:$0xff]
    %v2366 = vld [vmem:[%s2361 + $0x20] sm:$0xff]
    %v2367 = vld [vmem:[%s2361 + $0x28] sm:$0xff]
    %v2368 = vld [vmem:[%s2361 + $0x30] sm:$0xff]
    %v2369 = vld [vmem:[%s2361 + $0x38] sm:$0xff]
    %v2370 = vld [vmem:[%s2361 + $0x40] sm:$0xff]
    %v2371 = vld [vmem:[%s2361 + $0x48] sm:$0xff]
    %v2372 = vld [vmem:[%s2361 + $0x50] sm:$0xff]
    %v2373 = vld [vmem:[%s2361 + $0x58] sm:$0xff]
    %v2374 = vld [vmem:[%s2361 + $0x60] sm:$0xff]
    %v2375 = vld [vmem:[%s2361 + $0x68] sm:$0xff]
    %v2376 = vld [vmem:[%s2361 + $0x70] sm:$0xff]
    %v2377 = vld [vmem:[%s2361 + $0x78] sm:$0xff]
    %2378 = vmatprep.subr.mxu0 0.0
    %2379 = vmatpush1.msra.mxu0 %v2362
    %2380 = vmatprep.subr.mxu0 0.0
    %2381 = vmatpush1.msra.mxu0 %v2363
    %2382 = vmatprep.subr.mxu0 0.0
    %2383 = vmatpush1.msra.mxu0 %v2364
    %2384 = vmatprep.subr.mxu0 0.0
    %2385 = vmatpush1.msra.mxu0 %v2365
    %2386 = vmatprep.subr.mxu0 0.0
    %2387 = vmatpush1.msra.mxu0 %v2366
    %2388 = vmatprep.subr.mxu0 0.0
    %2389 = vmatpush1.msra.mxu0 %v2367
    %2390 = vmatprep.subr.mxu0 0.0
    %2391 = vmatpush1.msra.mxu0 %v2368
    %2392 = vmatprep.subr.mxu0 0.0
    %2393 = vmatpush1.msra.mxu0 %v2369
    %2394 = vmatprep.subr.mxu0 0.0
    %2395 = vmatpush1.msra.mxu0 %v2370
    %2396 = vmatprep.subr.mxu0 0.0
    %2397 = vmatpush1.msra.mxu0 %v2371
    %2398 = vmatprep.subr.mxu0 0.0
    %2399 = vmatpush1.msra.mxu0 %v2372
    %2400 = vmatprep.subr.mxu0 0.0
    %2401 = vmatpush1.msra.mxu0 %v2373
    %2402 = vmatprep.subr.mxu0 0.0
    %2403 = vmatpush1.msra.mxu0 %v2374
    %2404 = vmatprep.subr.mxu0 0.0
    %2405 = vmatpush1.msra.mxu0 %v2375
    %2406 = vmatprep.subr.mxu0 0.0
    %2407 = vmatpush1.msra.mxu0 %v2376
    %2408 = vmatprep.subr.mxu0 0.0
    %2409 = vmatpush1.msra.mxu0 %v2377
    %2410 = vmatprep.subr.mxu0 0.0
    %2411 = vmatpush1.msra.mxu0 0.0
    %2412 = vmatprep.subr.mxu0 0.0
    %2413 = vmatpush1.msra.mxu0 0.0
    %2414 = vmatprep.subr.mxu0 0.0
    %2415 = vmatpush1.msra.mxu0 0.0
    %2416 = vmatprep.subr.mxu0 0.0
    %2417 = vmatpush1.msra.mxu0 0.0
    %2418 = vmatprep.subr.mxu0 0.0
    %2419 = vmatpush1.msra.mxu0 0.0
    %2420 = vmatprep.subr.mxu0 0.0
    %2421 = vmatpush1.msra.mxu0 0.0
    %2422 = vmatprep.subr.mxu0 0.0
    %2423 = vmatpush1.msra.mxu0 0.0
    %2424 = vmatprep.subr.mxu0 0.0
    %2425 = vmatpush1.msra.mxu0 0.0
    %2426 = vmatprep.subr.mxu0 0.0
    %2427 = vmatpush1.msra.mxu0 0.0
    %2428 = vmatprep.subr.mxu0 0.0
    %2429 = vmatpush1.msra.mxu0 0.0
    %2430 = vmatprep.subr.mxu0 0.0
    %2431 = vmatpush1.msra.mxu0 0.0
    %2432 = vmatprep.subr.mxu0 0.0
    %2433 = vmatpush1.msra.mxu0 0.0
    %2434 = vmatprep.subr.mxu0 0.0
    %2435 = vmatpush1.msra.mxu0 0.0
    %2436 = vmatprep.subr.mxu0 0.0
    %2437 = vmatpush1.msra.mxu0 0.0
    %2438 = vmatprep.subr.mxu0 0.0
    %2439 = vmatpush1.msra.mxu0 0.0
    %2440 = vmatprep.subr.mxu0 0.0
    %2441 = vmatpush1.msra.mxu0 0.0
    %2442 = vmatprep.mubr.f32.mxu0 0.0
    %2443 = vmatmul.mubr.f32.gmra.mrb[0].mxu0 %v2360
    %v2444 = vpop.f32.mrb[0].mxu0
    %v2445 = vadd.f32 0.0, %v2444
    %v2446 = vpop.f32.mrb[0].mxu0
    %2447 = vdwg.mxu0
    %v2448 = vadd.f32 %v2026, %v2445
    %v2449 = vmax.f32 %v2448, 0.0
    %v2450 = vld [vmem:[%s5] sm:$0xff]
    %v2451 = vld [vmem:[%s5 + $0x8] sm:$0xff]
    %v2452 = vld [vmem:[%s5 + $0x10] sm:$0xff]
    %v2453 = vld [vmem:[%s5 + $0x18] sm:$0xff]
    %v2454 = vld [vmem:[%s5 + $0x20] sm:$0xff]
    %v2455 = vld [vmem:[%s5 + $0x28] sm:$0xff]
    %v2456 = vld [vmem:[%s5 + $0x30] sm:$0xff]
    %v2457 = vld [vmem:[%s5 + $0x38] sm:$0xff]
    %v2458 = vld [vmem:[%s5 + $0x40] sm:$0xff]
    %v2459 = vld [vmem:[%s5 + $0x48] sm:$0xff]
    %v2460 = vld [vmem:[%s5 + $0x50] sm:$0xff]
    %v2461 = vld [vmem:[%s5 + $0x58] sm:$0xff]
    %v2462 = vld [vmem:[%s5 + $0x60] sm:$0xff]
    %v2463 = vld [vmem:[%s5 + $0x68] sm:$0xff]
    %v2464 = vld [vmem:[%s5 + $0x70] sm:$0xff]
    %v2465 = vld [vmem:[%s5 + $0x78] sm:$0xff]
    %v2466 = vld [vmem:[%s6] sm:$0x1]
    %v2468 = vlaneseq
    %v2469 = vshrl.u32 %v2468, 7
    %v2470 = vsub.s32 0, %v2469
    %v2471 = vrot.slane %v2466, %v2470
    %2473 = vmatprep.subr.mxu0 0.0
    %2474 = vmatpush1.msra.mxu0 %v2450
    %2475 = vmatprep.subr.mxu0 0.0
    %2476 = vmatpush1.msra.mxu0 %v2451
    %2477 = vmatprep.subr.mxu0 0.0
    %2478 = vmatpush1.msra.mxu0 %v2452
    %2479 = vmatprep.subr.mxu0 0.0
    %2480 = vmatpush1.msra.mxu0 %v2453
    %2481 = vmatprep.subr.mxu0 0.0
    %2482 = vmatpush1.msra.mxu0 %v2454
    %2483 = vmatprep.subr.mxu0 0.0
    %2484 = vmatpush1.msra.mxu0 %v2455
    %2485 = vmatprep.subr.mxu0 0.0
    %2486 = vmatpush1.msra.mxu0 %v2456
    %2487 = vmatprep.subr.mxu0 0.0
    %2488 = vmatpush1.msra.mxu0 %v2457
    %2489 = vmatprep.subr.mxu0 0.0
    %2490 = vmatpush1.msra.mxu0 %v2458
    %2491 = vmatprep.subr.mxu0 0.0
    %2492 = vmatpush1.msra.mxu0 %v2459
    %2493 = vmatprep.subr.mxu0 0.0
    %2494 = vmatpush1.msra.mxu0 %v2460
    %2495 = vmatprep.subr.mxu0 0.0
    %2496 = vmatpush1.msra.mxu0 %v2461
    %2497 = vmatprep.subr.mxu0 0.0
    %2498 = vmatpush1.msra.mxu0 %v2462
    %2499 = vmatprep.subr.mxu0 0.0
    %2500 = vmatpush1.msra.mxu0 %v2463
    %2501 = vmatprep.subr.mxu0 0.0
    %2502 = vmatpush1.msra.mxu0 %v2464
    %2503 = vmatprep.subr.mxu0 0.0
    %2504 = vmatpush1.msra.mxu0 %v2465
    %2505 = vmatprep.subr.mxu0 0.0
    %2506 = vmatpush1.msra.mxu0 0.0
    %2507 = vmatprep.subr.mxu0 0.0
    %2508 = vmatpush1.msra.mxu0 0.0
    %2509 = vmatprep.subr.mxu0 0.0
    %2510 = vmatpush1.msra.mxu0 0.0
    %2511 = vmatprep.subr.mxu0 0.0
    %2512 = vmatpush1.msra.mxu0 0.0
    %2513 = vmatprep.subr.mxu0 0.0
    %2514 = vmatpush1.msra.mxu0 0.0
    %2515 = vmatprep.subr.mxu0 0.0
    %2516 = vmatpush1.msra.mxu0 0.0
    %2517 = vmatprep.subr.mxu0 0.0
    %2518 = vmatpush1.msra.mxu0 0.0
    %2519 = vmatprep.subr.mxu0 0.0
    %2520 = vmatpush1.msra.mxu0 0.0
    %2521 = vmatprep.subr.mxu0 0.0
    %2522 = vmatpush1.msra.mxu0 0.0
    %2523 = vmatprep.subr.mxu0 0.0
    %2524 = vmatpush1.msra.mxu0 0.0
    %2525 = vmatprep.subr.mxu0 0.0
    %2526 = vmatpush1.msra.mxu0 0.0
    %2527 = vmatprep.subr.mxu0 0.0
    %2528 = vmatpush1.msra.mxu0 0.0
    %2529 = vmatprep.subr.mxu0 0.0
    %2530 = vmatpush1.msra.mxu0 0.0
    %2531 = vmatprep.subr.mxu0 0.0
    %2532 = vmatpush1.msra.mxu0 0.0
    %2533 = vmatprep.subr.mxu0 0.0
    %2534 = vmatpush1.msra.mxu0 0.0
    %2535 = vmatprep.subr.mxu0 0.0
    %2536 = vmatpush1.msra.mxu0 0.0
    %2537 = vmatprep.mubr.f32.mxu0 0.0
    %2538 = vmatmul.mubr.f32.gmra.mrb[0].mxu0 %v2449
    %v2539 = vpop.f32.mrb[0].mxu0
    %v2540 = vadd.f32 %v2471, %v2539
    %v2541 = vpop.f32.mrb[0].mxu0
    %2542 = vdwg.mxu0
    %v2543 = vmax.f32 %v2540, 0.0
    %v2544 = vld [vmem:[%s7] sm:$0xff]
    %v2545 = vld [vmem:[%s7 + $0x8] sm:$0xff]
    %v2546 = vld [vmem:[%s7 + $0x10] sm:$0xff]
    %v2547 = vld [vmem:[%s7 + $0x18] sm:$0xff]
    %v2548 = vld [vmem:[%s7 + $0x20] sm:$0xff]
    %v2549 = vld [vmem:[%s7 + $0x28] sm:$0xff]
    %v2550 = vld [vmem:[%s7 + $0x30] sm:$0xff]
    %v2551 = vld [vmem:[%s7 + $0x38] sm:$0xff]
    %v2552 = vld [vmem:[%s7 + $0x40] sm:$0xff]
    %v2553 = vld [vmem:[%s7 + $0x48] sm:$0xff]
    %v2554 = vld [vmem:[%s7 + $0x50] sm:$0xff]
    %v2555 = vld [vmem:[%s7 + $0x58] sm:$0xff]
    %v2556 = vld [vmem:[%s7 + $0x60] sm:$0xff]
    %v2557 = vld [vmem:[%s7 + $0x68] sm:$0xff]
    %v2558 = vld [vmem:[%s7 + $0x70] sm:$0xff]
    %v2559 = vld [vmem:[%s7 + $0x78] sm:$0xff]
    %v2560 = vld [vmem:[%s8] sm:$0x1]
    %v2562 = vlaneseq
    %v2563 = vshrl.u32 %v2562, 7
    %v2564 = vsub.s32 0, %v2563
    %v2565 = vrot.slane %v2560, %v2564
    %2567 = vmatprep.subr.mxu0 0.0
    %2568 = vmatpush1.msra.mxu0 %v2544
    %2569 = vmatprep.subr.mxu0 0.0
    %2570 = vmatpush1.msra.mxu0 %v2545
    %2571 = vmatprep.subr.mxu0 0.0
    %2572 = vmatpush1.msra.mxu0 %v2546
    %2573 = vmatprep.subr.mxu0 0.0
    %2574 = vmatpush1.msra.mxu0 %v2547
    %2575 = vmatprep.subr.mxu0 0.0
    %2576 = vmatpush1.msra.mxu0 %v2548
    %2577 = vmatprep.subr.mxu0 0.0
    %2578 = vmatpush1.msra.mxu0 %v2549
    %2579 = vmatprep.subr.mxu0 0.0
    %2580 = vmatpush1.msra.mxu0 %v2550
    %2581 = vmatprep.subr.mxu0 0.0
    %2582 = vmatpush1.msra.mxu0 %v2551
    %2583 = vmatprep.subr.mxu0 0.0
    %2584 = vmatpush1.msra.mxu0 %v2552
    %2585 = vmatprep.subr.mxu0 0.0
    %2586 = vmatpush1.msra.mxu0 %v2553
    %2587 = vmatprep.subr.mxu0 0.0
    %2588 = vmatpush1.msra.mxu0 %v2554
    %2589 = vmatprep.subr.mxu0 0.0
    %2590 = vmatpush1.msra.mxu0 %v2555
    %2591 = vmatprep.subr.mxu0 0.0
    %2592 = vmatpush1.msra.mxu0 %v2556
    %2593 = vmatprep.subr.mxu0 0.0
    %2594 = vmatpush1.msra.mxu0 %v2557
    %2595 = vmatprep.subr.mxu0 0.0
    %2596 = vmatpush1.msra.mxu0 %v2558
    %2597 = vmatprep.subr.mxu0 0.0
    %2598 = vmatpush1.msra.mxu0 %v2559
    %2599 = vmatprep.subr.mxu0 0.0
    %2600 = vmatpush1.msra.mxu0 0.0
    %2601 = vmatprep.subr.mxu0 0.0
    %2602 = vmatpush1.msra.mxu0 0.0
    %2603 = vmatprep.subr.mxu0 0.0
    %2604 = vmatpush1.msra.mxu0 0.0
    %2605 = vmatprep.subr.mxu0 0.0
    %2606 = vmatpush1.msra.mxu0 0.0
    %2607 = vmatprep.subr.mxu0 0.0
    %2608 = vmatpush1.msra.mxu0 0.0
    %2609 = vmatprep.subr.mxu0 0.0
    %2610 = vmatpush1.msra.mxu0 0.0
    %2611 = vmatprep.subr.mxu0 0.0
    %2612 = vmatpush1.msra.mxu0 0.0
    %2613 = vmatprep.subr.mxu0 0.0
    %2614 = vmatpush1.msra.mxu0 0.0
    %2615 = vmatprep.subr.mxu0 0.0
    %2616 = vmatpush1.msra.mxu0 0.0
    %2617 = vmatprep.subr.mxu0 0.0
    %2618 = vmatpush1.msra.mxu0 0.0
    %2619 = vmatprep.subr.mxu0 0.0
    %2620 = vmatpush1.msra.mxu0 0.0
    %2621 = vmatprep.subr.mxu0 0.0
    %2622 = vmatpush1.msra.mxu0 0.0
    %2623 = vmatprep.subr.mxu0 0.0
    %2624 = vmatpush1.msra.mxu0 0.0
    %2625 = vmatprep.subr.mxu0 0.0
    %2626 = vmatpush1.msra.mxu0 0.0
    %2627 = vmatprep.subr.mxu0 0.0
    %2628 = vmatpush1.msra.mxu0 0.0
    %2629 = vmatprep.subr.mxu0 0.0
    %2630 = vmatpush1.msra.mxu0 0.0
    %2631 = vmatprep.mubr.f32.mxu0 0.0
    %2632 = vmatmul.mubr.f32.gmra.mrb[0].mxu0 %v2543
    %v2633 = vpop.f32.mrb[0].mxu0
    %v2634 = vadd.f32 %v2565, %v2633
    %v2635 = vpop.f32.mrb[0].mxu0
    %2636 = vdwg.mxu0
    %vm2637 = vcmask 123904
    %2638 = vst.msk [vmem:[#allocation2] sm:$0x3] %vm2637, %v2634
    // Predicated region
    $region38: #{cnn_forward.3} parent=1 // pred_check
      _
    $region39: #{cnn_forward.3} parent=1 // pred_check_branch
      %2640 = sbr.rel (0) target = $region41
    $region40: #{cnn_forward.3} parent=1 // pred_region
      %s2642 = ssub.s32 32, 32
      %2643 = vsyncadd [#allocation3], %s2642
      %s2645 = sshll.u32 [#allocation2], 4
      %s2646 = int_to_ptr.vmem [resolvable:$true] %s2645
      %2648 = dma.vmem_to_hbm [thread:$0]  %s2646, 32, %s9, [#allocation3]
    $region41: #{cnn_forward.3} parent=1 // pred_fallthru
      _
    // Predicated region
    $region42: #{cnn_forward.3} parent=1 // pred_check
      _
    $region43: #{cnn_forward.3} parent=1 // pred_check_branch
      %2650 = sbr.rel (0) target = $region45
    $region44: #{cnn_forward.3} parent=1 // pred_region
      %2651 = dma.done [#allocation3], 32
    $region45: #{cnn_forward.3} parent=1 // pred_fallthru
      _
    %2652 = vsyncpa [#allocation3], 1

</llo_original>
